<compile_context>
chip_gen: v5e
topology: v5e:2x2
jax: 0.10.0
libtpu: 0.0.40
codegen_flags: <defaults>
</compile_context>

<pallas_src>
import functools

import numpy as np
import jax
import jax.numpy as jnp
from jax import lax
from jax.experimental import pallas as pl
from jax.experimental.pallas import tpu as pltpu

# ---------------- small analogue of the original hyper-params -----------------
# original: embed_dim=512, enc_dim=2048, QKVdim=64, n_heads=8, d_ff=2048,
#           max_len=52, num_pixels=196
B = 2        # batch
LQ = 8       # decoder sequence length (max_len analogue)
LK = 16      # number of encoder pixels (196 analogue)
D = 32       # decoder embed_dim (512 analogue)
DE = 64      # encoder feature dim (2048 analogue)
H = 4        # n_heads (8 analogue)
DK = 8       # QKVdim (64 analogue)
D_FF = 64    # feed-forward dim (2048 analogue)
EPS = 1e-5   # nn.LayerNorm default
NEG_INF = -1000000000.0  # matches masked_fill_(attn_mask, -1e9)


# ------------------------------------------------------------------ helpers ---
def _layer_norm(x):
    """LayerNorm with gamma=1, beta=0 (fresh nn.LayerNorm each call in the reference)."""
    mu = jnp.mean(x, axis=-1, keepdims=True)
    var = jnp.mean((x - mu) ** 2, axis=-1, keepdims=True)
    return (x - mu) * lax.rsqrt(var + EPS)


def _attention(q, k, v, bias, lq, lk, n_heads, dk):
    """Head-major scaled-dot-product attention for one batch item.

    q: [lq, H*dk] bf16 (scale already folded into the Q projection)
    k, v: [lk, H*dk] bf16
    bias: [lq, lk] f32 additive mask bias (0 or -1e9)
    Returns (attn [H, lq, lk] f32, ctx [lq, H*dk] bf16).
    """
    bf16 = jnp.bfloat16
    f32 = jnp.float32
    # One reshape+transpose per tensor (no per-head lane slices).
    qh = jnp.transpose(q.reshape(lq, n_heads, dk), (1, 0, 2))   # [H, lq, dk]
    kh = jnp.transpose(k.reshape(lk, n_heads, dk), (1, 0, 2))   # [H, lk, dk]
    vh = jnp.transpose(v.reshape(lk, n_heads, dk), (1, 0, 2))   # [H, lk, dk]

    scores = jnp.einsum('hqd,hkd->hqk', qh, kh, preferred_element_type=f32)
    scores = scores + bias[None, :, :]                          # additive mask

    m = jnp.max(scores, axis=-1, keepdims=True)
    e = jnp.exp(scores - m)
    attn = e * pl.reciprocal(jnp.sum(e, axis=-1, keepdims=True), approx=False)

    ctx = jnp.einsum('hqk,hkd->hqd', attn.astype(bf16), vh,
                     preferred_element_type=f32)                # [H, lq, dk]
    ctx = jnp.transpose(ctx, (1, 0, 2)).reshape(lq, n_heads * dk).astype(bf16)
    return attn, ctx


# ------------------------------------------------------------------- kernel ---
def decoder_layer_kernel(dec_ref, enc_ref, sbias_ref, ebias_ref,
                         wqkv1, bqkv1, wo1, bo1,
                         wq2, bq2, wkv2, bkv2, wo2, bo2,
                         w1, b1, w2, b2,
                         y_ref, sattn_ref, eattn_ref, *, n_heads, qkv_dim):
    _, lq, d = dec_ref.shape
    _, lk, de = enc_ref.shape
    hd = n_heads * qkv_dim
    bf16 = jnp.bfloat16
    f32 = jnp.float32

    x = dec_ref[0]          # [LQ, D]  f32
    enc = enc_ref[0]        # [LK, DE] f32
    sbias = sbias_ref[0]    # [LQ, LQ] f32 additive mask bias
    ebias = ebias_ref[0]    # [LQ, LK] f32 additive mask bias

    # ---- 1) masked multi-head self attention + add & LayerNorm ----------------
    x_bf = x.astype(bf16)
    qkv = (jnp.dot(x_bf, wqkv1[...], preferred_element_type=f32)
           + bqkv1[...]).astype(bf16)                      # [LQ, 3*HD], one fused matmul
    q1 = qkv[:, 0:hd]
    k1 = qkv[:, hd:2 * hd]
    v1 = qkv[:, 2 * hd:3 * hd]
    attn1, ctx1 = _attention(q1, k1, v1, sbias, lq, lq, n_heads, qkv_dim)
    sattn_ref[0] = attn1.reshape(n_heads * lq, lq)          # single lane-dense-ish store
    out1 = jnp.dot(ctx1, wo1[...], preferred_element_type=f32) + bo1[...]
    x1 = _layer_norm(out1 + x)                               # residual = Q input

    # ---- 2) encoder-decoder cross attention + add & LayerNorm -----------------
    x1_bf = x1.astype(bf16)
    enc_bf = enc.astype(bf16)
    q2 = (jnp.dot(x1_bf, wq2[...], preferred_element_type=f32) + bq2[...]).astype(bf16)
    kv2 = (jnp.dot(enc_bf, wkv2[...], preferred_element_type=f32)
           + bkv2[...]).astype(bf16)                        # [LK, 2*HD], fused K|V matmul
    k2 = kv2[:, 0:hd]
    v2 = kv2[:, hd:2 * hd]
    attn2, ctx2 = _attention(q2, k2, v2, ebias, lq, lk, n_heads, qkv_dim)
    eattn_ref[0] = attn2.reshape(n_heads * lq, lk)
    out2 = jnp.dot(ctx2, wo2[...], preferred_element_type=f32) + bo2[...]
    x2 = _layer_norm(out2 + x1)

    # ---- 3) position-wise FFN (Conv1d k=1 == Linear) + add & LayerNorm --------
    x2_bf = x2.astype(bf16)
    h1 = jnp.maximum(
        jnp.dot(x2_bf, w1[...], preferred_element_type=f32) + b1[...], 0.0)
    out3 = jnp.dot(h1.astype(bf16), w2[...], preferred_element_type=f32) + b2[...]
    y_ref[0] = _layer_norm(out3 + x2)


# ------------------------------------------------------------------ wrapper ---
def decoder_layer_call(dec_inputs, enc_outputs, self_mask, enc_mask, p):
    """dec_inputs: [B, LQ, D] f32; enc_outputs: [B, LK, DE] f32;
       masks are 0/1 float32 (1.0 == masked).
       Returns (dec_out [B,LQ,D], self_attn [B,H,LQ,LQ], enc_attn [B,H,LQ,LK])."""
    b, lq, d = dec_inputs.shape
    _, lk, de = enc_outputs.shape

    # Pre-bake additive mask biases in the wrapper (removes compare+select in-kernel).
    sbias = self_mask * jnp.float32(NEG_INF)     # [B, LQ, LQ]
    ebias = enc_mask * jnp.float32(NEG_INF)      # [B, LQ, LK]

    kernel = functools.partial(decoder_layer_kernel, n_heads=H, qkv_dim=DK)

    def batch_spec(shape):
        nd = len(shape)
        return pl.BlockSpec((1,) + tuple(shape[1:]),
                            lambda i, _nd=nd: (i,) + (0,) * (_nd - 1))

    def full_spec(shape):
        nd = len(shape)
        return pl.BlockSpec(tuple(shape), lambda i, _nd=nd: (0,) * _nd)

    weights = [p["wqkv1"], p["bqkv1"], p["wo1"], p["bo1"],
               p["wq2"], p["bq2"], p["wkv2"], p["bkv2"], p["wo2"], p["bo2"],
               p["w1"], p["b1"], p["w2"], p["b2"]]

    in_specs = ([batch_spec(dec_inputs.shape), batch_spec(enc_outputs.shape),
                 batch_spec(sbias.shape), batch_spec(ebias.shape)]
                + [full_spec(w.shape) for w in weights])     # weights stay resident

    out_shape = [
        jax.ShapeDtypeStruct((b, lq, d), jnp.float32),       # dec_outputs
        jax.ShapeDtypeStruct((b, H * lq, lq), jnp.float32),  # dec_self_attn slab
        jax.ShapeDtypeStruct((b, H * lq, lk), jnp.float32),  # dec_enc_attn slab
    ]
    out_specs = [batch_spec((b, lq, d)),
                 batch_spec((b, H * lq, lq)),
                 batch_spec((b, H * lq, lk))]

    # Batch grid axis: on v7x the two TensorCores each take half the batch; on
    # v5e/v6e this is a cheap serial loop (weights are not re-DMA'd: constant blocks).
    y, sattn, eattn = pl.pallas_call(
        kernel,
        out_shape=out_shape,
        grid=(b,),
        in_specs=in_specs,
        out_specs=out_specs,
        compiler_params=pltpu.CompilerParams(
            dimension_semantics=("parallel",),
            vmem_limit_bytes=32 * 1024 * 1024),
    )(dec_inputs, enc_outputs, sbias, ebias, *weights)

    return (y,
            sattn.reshape(b, H, lq, lq),
            eattn.reshape(b, H, lq, lk))


# ------------------------------------------------------------ param helpers ---
def init_params(key):
    """Mirror PyTorch default inits (U(-1/sqrt(fan_in), 1/sqrt(fan_in))).
    Weights pre-transposed for x @ W, fused (QKV / KV concatenated), with 1/sqrt(dk)
    folded into the Q projection; weights cast to bf16 (f32 accumulation in-kernel),
    biases kept in f32."""
    ks = jax.random.split(key, 20)
    hd = H * DK
    scale = 1.0 / np.sqrt(DK)
    b_self = 1.0 / np.sqrt(D)    # Linear(D, hd)
    b_o = 1.0 / np.sqrt(hd)      # Linear(hd, D)
    b_kv2 = 1.0 / np.sqrt(DE)    # Linear(DE, hd)
    b_c1 = 1.0 / np.sqrt(D)      # Conv1d(D, D_FF, 1)
    b_c2 = 1.0 / np.sqrt(D_FF)   # Conv1d(D_FF, D, 1)

    def u(k, shape, bound):
        return jax.random.uniform(k, shape, jnp.float32, -bound, bound)

    wq1 = u(ks[0], (D, hd), b_self);  bq1 = u(ks[1], (1, hd), b_self)
    wk1 = u(ks[2], (D, hd), b_self);  bk1 = u(ks[3], (1, hd), b_self)
    wv1 = u(ks[4], (D, hd), b_self);  bv1 = u(ks[5], (1, hd), b_self)
    wo1 = u(ks[6], (hd, D), b_o);     bo1 = u(ks[7], (1, D), b_o)
    wq2 = u(ks[8], (D, hd), b_self);  bq2 = u(ks[9], (1, hd), b_self)
    wk2 = u(ks[10], (DE, hd), b_kv2); bk2 = u(ks[11], (1, hd), b_kv2)
    wv2 = u(ks[12], (DE, hd), b_kv2); bv2 = u(ks[13], (1, hd), b_kv2)
    wo2 = u(ks[14], (hd, D), b_o);    bo2 = u(ks[15], (1, D), b_o)
    w1 = u(ks[16], (D, D_FF), b_c1);  b1 = u(ks[17], (1, D_FF), b_c1)
    w2 = u(ks[18], (D_FF, D), b_c2);  b2 = u(ks[19], (1, D), b_c2)

    bf = jnp.bfloat16
    return {
        # self-attention: fused Q|K|V, 1/sqrt(dk) folded into the Q slice
        "wqkv1": jnp.concatenate([wq1 * scale, wk1, wv1], axis=1).astype(bf),
        "bqkv1": jnp.concatenate([bq1 * scale, bk1, bv1], axis=1),
        "wo1": wo1.astype(bf), "bo1": bo1,
        # cross-attention: Q from decoder stream (scaled), fused K|V from encoder feats
        "wq2": (wq2 * scale).astype(bf), "bq2": bq2 * scale,
        "wkv2": jnp.concatenate([wk2, wv2], axis=1).astype(bf),
        "bkv2": jnp.concatenate([bk2, bv2], axis=1),
        "wo2": wo2.astype(bf), "bo2": bo2,
        # FFN (Conv1d k=1 as linear)
        "w1": w1.astype(bf), "b1": b1,
        "w2": w2.astype(bf), "b2": b2,
    }


# --------------------------------------------------------------------- main ---
if __name__ == "__main__":
    root = jax.random.PRNGKey(0)
    k_dec, k_enc, k_p = jax.random.split(root, 3)

    dec_inputs = jax.random.normal(k_dec, (B, LQ, D), dtype=jnp.float32)
    enc_outputs = jax.random.normal(k_enc, (B, LK, DE), dtype=jnp.float32)

    # dec_self_attn_mask: causal (subsequent positions masked), 1.0 == masked.
    causal = jnp.triu(jnp.ones((LQ, LQ), jnp.float32), k=1)
    self_mask = jnp.broadcast_to(causal, (B, LQ, LQ))
    # dec_enc_attn_mask: no padded pixels -> all unmasked.
    enc_mask = jnp.zeros((B, LQ, LK), jnp.float32)

    params = init_params(k_p)

    fwd = jax.jit(lambda di, eo, sm, em: decoder_layer_call(di, eo, sm, em, params))
    dec_out, self_attn, enc_attn = fwd(dec_inputs, enc_outputs, self_mask, enc_mask)
    jax.block_until_ready(dec_out)
    jax.block_until_ready(self_attn)
    jax.block_until_ready(enc_attn)

    assert dec_out.shape == (B, LQ, D)
    assert self_attn.shape == (B, H, LQ, LQ)
    assert enc_attn.shape == (B, H, LQ, LK)
    assert bool(jnp.all(jnp.isfinite(dec_out)))
    # causal masking sanity: attention to future positions must be ~0
    assert float(jnp.max(self_attn[:, :, 0, 1:])) < 1e-6
    # softmax rows sum to ~1 (exact reciprocal in the kernel)
    assert float(jnp.max(jnp.abs(jnp.sum(enc_attn, axis=-1) - 1.0))) < 1e-3
    print("KERNEL_OK")
</pallas_src>

<mosaic_0001>
module attributes {stable_mosaic.version = 11 : i64} {
  func.func @decoder_layer_kernel(%arg0: i32, %arg1: memref<1x8x32xf32, #tpu.memory_space<vmem>>, %arg2: memref<1x16x64xf32, #tpu.memory_space<vmem>>, %arg3: memref<1x8x8xf32, #tpu.memory_space<vmem>>, %arg4: memref<1x8x16xf32, #tpu.memory_space<vmem>>, %arg5: memref<32x96xbf16, #tpu.memory_space<vmem>>, %arg6: memref<1x96xf32, #tpu.memory_space<vmem>>, %arg7: memref<32x32xbf16, #tpu.memory_space<vmem>>, %arg8: memref<1x32xf32, #tpu.memory_space<vmem>>, %arg9: memref<32x32xbf16, #tpu.memory_space<vmem>>, %arg10: memref<1x32xf32, #tpu.memory_space<vmem>>, %arg11: memref<64x64xbf16, #tpu.memory_space<vmem>>, %arg12: memref<1x64xf32, #tpu.memory_space<vmem>>, %arg13: memref<32x32xbf16, #tpu.memory_space<vmem>>, %arg14: memref<1x32xf32, #tpu.memory_space<vmem>>, %arg15: memref<32x64xbf16, #tpu.memory_space<vmem>>, %arg16: memref<1x64xf32, #tpu.memory_space<vmem>>, %arg17: memref<64x32xbf16, #tpu.memory_space<vmem>>, %arg18: memref<1x32xf32, #tpu.memory_space<vmem>>, %arg19: memref<1x8x32xf32, #tpu.memory_space<vmem>>, %arg20: memref<1x32x8xf32, #tpu.memory_space<vmem>>, %arg21: memref<1x32x16xf32, #tpu.memory_space<vmem>>) attributes {dimension_semantics = [#tpu.dimension_semantics<parallel>], iteration_bounds = array<i64: 2>, scalar_prefetch = 0 : i64, scratch_operands = 0 : i64, tpu.core_type = #tpu.core_type<tc>, window_params = [{transform_indices = @transform_0, window_bounds = array<i64: 1, 8, 32>}, {transform_indices = @transform_1, window_bounds = array<i64: 1, 16, 64>}, {transform_indices = @transform_2, window_bounds = array<i64: 1, 8, 8>}, {transform_indices = @transform_3, window_bounds = array<i64: 1, 8, 16>}, {pipeline_mode = #tpu.pipeline_mode<synchronous>, transform_indices = @transform_4, window_bounds = array<i64: 32, 96>}, {pipeline_mode = #tpu.pipeline_mode<synchronous>, transform_indices = @transform_5, window_bounds = array<i64: 1, 96>}, {pipeline_mode = #tpu.pipeline_mode<synchronous>, transform_indices = @transform_6, window_bounds = array<i64: 32, 32>}, {pipeline_mode = #tpu.pipeline_mode<synchronous>, transform_indices = @transform_7, window_bounds = array<i64: 1, 32>}, {pipeline_mode = #tpu.pipeline_mode<synchronous>, transform_indices = @transform_8, window_bounds = array<i64: 32, 32>}, {pipeline_mode = #tpu.pipeline_mode<synchronous>, transform_indices = @transform_9, window_bounds = array<i64: 1, 32>}, {pipeline_mode = #tpu.pipeline_mode<synchronous>, transform_indices = @transform_10, window_bounds = array<i64: 64, 64>}, {pipeline_mode = #tpu.pipeline_mode<synchronous>, transform_indices = @transform_11, window_bounds = array<i64: 1, 64>}, {pipeline_mode = #tpu.pipeline_mode<synchronous>, transform_indices = @transform_12, window_bounds = array<i64: 32, 32>}, {pipeline_mode = #tpu.pipeline_mode<synchronous>, transform_indices = @transform_13, window_bounds = array<i64: 1, 32>}, {pipeline_mode = #tpu.pipeline_mode<synchronous>, transform_indices = @transform_14, window_bounds = array<i64: 32, 64>}, {pipeline_mode = #tpu.pipeline_mode<synchronous>, transform_indices = @transform_15, window_bounds = array<i64: 1, 64>}, {pipeline_mode = #tpu.pipeline_mode<synchronous>, transform_indices = @transform_16, window_bounds = array<i64: 64, 32>}, {pipeline_mode = #tpu.pipeline_mode<synchronous>, transform_indices = @transform_17, window_bounds = array<i64: 1, 32>}, {transform_indices = @transform_18, window_bounds = array<i64: 1, 8, 32>}, {transform_indices = @transform_19, window_bounds = array<i64: 1, 32, 8>}, {transform_indices = @transform_20, window_bounds = array<i64: 1, 32, 16>}]} {
    %c0 = arith.constant 0 : index
    %c0_0 = arith.constant 0 : index
    %c0_1 = arith.constant 0 : index
    %0 = vector.load %arg1[%c0, %c0_0, %c0_1] : memref<1x8x32xf32, #tpu.memory_space<vmem>>, vector<1x8x32xf32>
    %1 = vector.shape_cast %0 : vector<1x8x32xf32> to vector<8x32xf32>
    %c0_2 = arith.constant 0 : index
    %c0_3 = arith.constant 0 : index
    %c0_4 = arith.constant 0 : index
    %2 = vector.load %arg2[%c0_2, %c0_3, %c0_4] : memref<1x16x64xf32, #tpu.memory_space<vmem>>, vector<1x16x64xf32>
    %3 = vector.shape_cast %2 : vector<1x16x64xf32> to vector<16x64xf32>
    %c0_5 = arith.constant 0 : index
    %c0_6 = arith.constant 0 : index
    %c0_7 = arith.constant 0 : index
    %4 = vector.load %arg3[%c0_5, %c0_6, %c0_7] : memref<1x8x8xf32, #tpu.memory_space<vmem>>, vector<1x8x8xf32>
    %5 = vector.shape_cast %4 : vector<1x8x8xf32> to vector<8x8xf32>
    %c0_8 = arith.constant 0 : index
    %c0_9 = arith.constant 0 : index
    %c0_10 = arith.constant 0 : index
    %6 = vector.load %arg4[%c0_8, %c0_9, %c0_10] : memref<1x8x16xf32, #tpu.memory_space<vmem>>, vector<1x8x16xf32>
    %7 = vector.shape_cast %6 : vector<1x8x16xf32> to vector<8x16xf32>
    %8 = arith.truncf %1 : vector<8x32xf32> to vector<8x32xbf16>
    %c0_11 = arith.constant 0 : index
    %c0_12 = arith.constant 0 : index
    %9 = vector.load %arg5[%c0_11, %c0_12] : memref<32x96xbf16, #tpu.memory_space<vmem>>, vector<32x96xbf16>
    %cst = arith.constant dense<0.000000e+00> : vector<8x96xf32>
    %10 = tpu.matmul %8, %9, %cst {dimension_numbers = #tpu.dot_dimension_numbers<[1], [0], [0], [1], [0, 0, 1, 1], [], []>} : vector<8x32xbf16>, vector<32x96xbf16>, vector<8x96xf32> -> vector<8x96xf32>
    %c0_13 = arith.constant 0 : index
    %c0_14 = arith.constant 0 : index
    %11 = vector.load %arg6[%c0_13, %c0_14] : memref<1x96xf32, #tpu.memory_space<vmem>>, vector<1x96xf32>
    %12 = vector.broadcast %11 : vector<1x96xf32> to vector<8x96xf32>
    %13 = arith.addf %10, %12 : vector<8x96xf32>
    %14 = arith.truncf %13 : vector<8x96xf32> to vector<8x96xbf16>
    %15 = vector.extract_strided_slice %14 {offsets = [0, 0], sizes = [8, 32], strides = [1, 1]} : vector<8x96xbf16> to vector<8x32xbf16>
    %16 = vector.extract_strided_slice %14 {offsets = [0, 32], sizes = [8, 32], strides = [1, 1]} : vector<8x96xbf16> to vector<8x32xbf16>
    %17 = vector.extract_strided_slice %14 {offsets = [0, 64], sizes = [8, 32], strides = [1, 1]} : vector<8x96xbf16> to vector<8x32xbf16>
    %18 = vector.shape_cast %15 : vector<8x32xbf16> to vector<8x4x8xbf16>
    %19 = tpu.transpose %18, [1, 0, 2] : vector<8x4x8xbf16> -> vector<4x8x8xbf16>
    %20 = vector.shape_cast %16 : vector<8x32xbf16> to vector<8x4x8xbf16>
    %21 = tpu.transpose %20, [1, 0, 2] : vector<8x4x8xbf16> -> vector<4x8x8xbf16>
    %22 = vector.shape_cast %17 : vector<8x32xbf16> to vector<8x4x8xbf16>
    %23 = tpu.transpose %22, [1, 0, 2] : vector<8x4x8xbf16> -> vector<4x8x8xbf16>
    "tpu.trace_start"() <{level = 10 : i32, message = "hqd,hkd->hqk"}> : () -> ()
    %cst_15 = arith.constant dense<0.000000e+00> : vector<4x8x8xf32>
    %24 = tpu.matmul %19, %21, %cst_15 {dimension_numbers = #tpu.dot_dimension_numbers<[2], [2], [1], [1], [0, 0, 0, 1, 1, 1], [0], [0]>} : vector<4x8x8xbf16>, vector<4x8x8xbf16>, vector<4x8x8xf32> -> vector<4x8x8xf32>
    "tpu.trace_stop"() : () -> ()
    %25 = vector.shape_cast %5 : vector<8x8xf32> to vector<1x8x8xf32>
    %26 = vector.broadcast %25 : vector<1x8x8xf32> to vector<4x8x8xf32>
    %27 = arith.addf %24, %26 : vector<4x8x8xf32>
    %cst_16 = arith.constant dense<0xFF800000> : vector<4x8xf32>
    %28 = vector.multi_reduction <maximumf>, %27, %cst_16 [2] : vector<4x8x8xf32> to vector<4x8xf32>
    %29 = vector.shape_cast %28 : vector<4x8xf32> to vector<4x8x1xf32>
    %30 = vector.broadcast %29 : vector<4x8x1xf32> to vector<4x8x8xf32>
    %31 = arith.subf %27, %30 : vector<4x8x8xf32>
    %32 = math.exp %31 : vector<4x8x8xf32>
    %cst_17 = arith.constant dense<0.000000e+00> : vector<4x8xf32>
    %33 = vector.multi_reduction <add>, %32, %cst_17 [2] : vector<4x8x8xf32> to vector<4x8xf32>
    %34 = vector.shape_cast %33 : vector<4x8xf32> to vector<4x8x1xf32>
    %35 = tpu.reciprocal %34 : vector<4x8x1xf32> -> vector<4x8x1xf32>
    %36 = vector.broadcast %35 : vector<4x8x1xf32> to vector<4x8x8xf32>
    %37 = arith.mulf %32, %36 : vector<4x8x8xf32>
    %38 = arith.truncf %37 : vector<4x8x8xf32> to vector<4x8x8xbf16>
    "tpu.trace_start"() <{level = 10 : i32, message = "hqk,hkd->hqd"}> : () -> ()
    %cst_18 = arith.constant dense<0.000000e+00> : vector<4x8x8xf32>
    %39 = tpu.matmul %38, %23, %cst_18 {dimension_numbers = #tpu.dot_dimension_numbers<[2], [1], [1], [2], [0, 0, 0, 1, 1, 2], [0], [0]>} : vector<4x8x8xbf16>, vector<4x8x8xbf16>, vector<4x8x8xf32> -> vector<4x8x8xf32>
    "tpu.trace_stop"() : () -> ()
    %40 = tpu.transpose %39, [1, 0, 2] : vector<4x8x8xf32> -> vector<8x4x8xf32>
    %41 = vector.shape_cast %40 : vector<8x4x8xf32> to vector<8x32xf32>
    %42 = arith.truncf %41 : vector<8x32xf32> to vector<8x32xbf16>
    %43 = vector.shape_cast %37 : vector<4x8x8xf32> to vector<32x8xf32>
    %c0_19 = arith.constant 0 : index
    %c0_20 = arith.constant 0 : index
    %c0_21 = arith.constant 0 : index
    %44 = vector.load %arg20[%c0_19, %c0_20, %c0_21] : memref<1x32x8xf32, #tpu.memory_space<vmem>>, vector<1x32x8xf32>
    %45 = vector.shape_cast %44 : vector<1x32x8xf32> to vector<32x8xf32>
    %46 = vector.shape_cast %43 : vector<32x8xf32> to vector<1x32x8xf32>
    tpu.vector_store %arg20[%c0_19, %c0_20, %c0_21], %46 {strides = array<i32>} : memref<1x32x8xf32, #tpu.memory_space<vmem>>, vector<1x32x8xf32>,
    %c0_22 = arith.constant 0 : index
    %c0_23 = arith.constant 0 : index
    %47 = vector.load %arg7[%c0_22, %c0_23] : memref<32x32xbf16, #tpu.memory_space<vmem>>, vector<32x32xbf16>
    %cst_24 = arith.constant dense<0.000000e+00> : vector<8x32xf32>
    %48 = tpu.matmul %42, %47, %cst_24 {dimension_numbers = #tpu.dot_dimension_numbers<[1], [0], [0], [1], [0, 0, 1, 1], [], []>} : vector<8x32xbf16>, vector<32x32xbf16>, vector<8x32xf32> -> vector<8x32xf32>
    %c0_25 = arith.constant 0 : index
    %c0_26 = arith.constant 0 : index
    %49 = vector.load %arg8[%c0_25, %c0_26] : memref<1x32xf32, #tpu.memory_space<vmem>>, vector<1x32xf32>
    %50 = vector.broadcast %49 : vector<1x32xf32> to vector<8x32xf32>
    %51 = arith.addf %48, %50 : vector<8x32xf32>
    %52 = arith.addf %51, %1 : vector<8x32xf32>
    %cst_27 = arith.constant dense<0.000000e+00> : vector<8xf32>
    %53 = vector.multi_reduction <add>, %52, %cst_27 [1] : vector<8x32xf32> to vector<8xf32>
    %54 = vector.shape_cast %53 : vector<8xf32> to vector<8x1xf32>
    %cst_28 = arith.constant 3.200000e+01 : f32
    %55 = vector.broadcast %cst_28 : f32 to vector<8x1xf32>
    %56 = arith.divf %54, %55 : vector<8x1xf32>
    %57 = vector.broadcast %56 : vector<8x1xf32> to vector<8x32xf32>
    %58 = arith.subf %52, %57 : vector<8x32xf32>
    %59 = arith.mulf %58, %58 : vector<8x32xf32>
    %cst_29 = arith.constant dense<0.000000e+00> : vector<8xf32>
    %60 = vector.multi_reduction <add>, %59, %cst_29 [1] : vector<8x32xf32> to vector<8xf32>
    %61 = vector.shape_cast %60 : vector<8xf32> to vector<8x1xf32>
    %cst_30 = arith.constant 3.200000e+01 : f32
    %62 = vector.broadcast %cst_30 : f32 to vector<8x1xf32>
    %63 = arith.divf %61, %62 : vector<8x1xf32>
    %64 = vector.broadcast %56 : vector<8x1xf32> to vector<8x32xf32>
    %65 = arith.subf %52, %64 : vector<8x32xf32>
    %cst_31 = arith.constant 9.99999974E-6 : f32
    %66 = vector.broadcast %cst_31 : f32 to vector<8x1xf32>
    %67 = arith.addf %63, %66 : vector<8x1xf32>
    %68 = math.rsqrt %67 : vector<8x1xf32>
    %69 = vector.broadcast %68 : vector<8x1xf32> to vector<8x32xf32>
    %70 = arith.mulf %65, %69 : vector<8x32xf32>
    %71 = arith.truncf %70 : vector<8x32xf32> to vector<8x32xbf16>
    %72 = arith.truncf %3 : vector<16x64xf32> to vector<16x64xbf16>
    %c0_32 = arith.constant 0 : index
    %c0_33 = arith.constant 0 : index
    %73 = vector.load %arg9[%c0_32, %c0_33] : memref<32x32xbf16, #tpu.memory_space<vmem>>, vector<32x32xbf16>
    %cst_34 = arith.constant dense<0.000000e+00> : vector<8x32xf32>
    %74 = tpu.matmul %71, %73, %cst_34 {dimension_numbers = #tpu.dot_dimension_numbers<[1], [0], [0], [1], [0, 0, 1, 1], [], []>} : vector<8x32xbf16>, vector<32x32xbf16>, vector<8x32xf32> -> vector<8x32xf32>
    %c0_35 = arith.constant 0 : index
    %c0_36 = arith.constant 0 : index
    %75 = vector.load %arg10[%c0_35, %c0_36] : memref<1x32xf32, #tpu.memory_space<vmem>>, vector<1x32xf32>
    %76 = vector.broadcast %75 : vector<1x32xf32> to vector<8x32xf32>
    %77 = arith.addf %74, %76 : vector<8x32xf32>
    %78 = arith.truncf %77 : vector<8x32xf32> to vector<8x32xbf16>
    %c0_37 = arith.constant 0 : index
    %c0_38 = arith.constant 0 : index
    %79 = vector.load %arg11[%c0_37, %c0_38] : memref<64x64xbf16, #tpu.memory_space<vmem>>, vector<64x64xbf16>
    %cst_39 = arith.constant dense<0.000000e+00> : vector<16x64xf32>
    %80 = tpu.matmul %72, %79, %cst_39 {dimension_numbers = #tpu.dot_dimension_numbers<[1], [0], [0], [1], [0, 0, 1, 1], [], []>} : vector<16x64xbf16>, vector<64x64xbf16>, vector<16x64xf32> -> vector<16x64xf32>
    %c0_40 = arith.constant 0 : index
    %c0_41 = arith.constant 0 : index
    %81 = vector.load %arg12[%c0_40, %c0_41] : memref<1x64xf32, #tpu.memory_space<vmem>>, vector<1x64xf32>
    %82 = vector.broadcast %81 : vector<1x64xf32> to vector<16x64xf32>
    %83 = arith.addf %80, %82 : vector<16x64xf32>
    %84 = arith.truncf %83 : vector<16x64xf32> to vector<16x64xbf16>
    %85 = vector.extract_strided_slice %84 {offsets = [0, 0], sizes = [16, 32], strides = [1, 1]} : vector<16x64xbf16> to vector<16x32xbf16>
    %86 = vector.extract_strided_slice %84 {offsets = [0, 32], sizes = [16, 32], strides = [1, 1]} : vector<16x64xbf16> to vector<16x32xbf16>
    %87 = vector.shape_cast %78 : vector<8x32xbf16> to vector<8x4x8xbf16>
    %88 = tpu.transpose %87, [1, 0, 2] : vector<8x4x8xbf16> -> vector<4x8x8xbf16>
    %89 = vector.shape_cast %85 : vector<16x32xbf16> to vector<16x4x8xbf16>
    %90 = tpu.transpose %89, [1, 0, 2] : vector<16x4x8xbf16> -> vector<4x16x8xbf16>
    %91 = vector.shape_cast %86 : vector<16x32xbf16> to vector<16x4x8xbf16>
    %92 = tpu.transpose %91, [1, 0, 2] : vector<16x4x8xbf16> -> vector<4x16x8xbf16>
    "tpu.trace_start"() <{level = 10 : i32, message = "hqd,hkd->hqk"}> : () -> ()
    %cst_42 = arith.constant dense<0.000000e+00> : vector<4x8x16xf32>
    %93 = tpu.matmul %88, %90, %cst_42 {dimension_numbers = #tpu.dot_dimension_numbers<[2], [2], [1], [1], [0, 0, 0, 1, 1, 1], [0], [0]>} : vector<4x8x8xbf16>, vector<4x16x8xbf16>, vector<4x8x16xf32> -> vector<4x8x16xf32>
    "tpu.trace_stop"() : () -> ()
    %94 = vector.shape_cast %7 : vector<8x16xf32> to vector<1x8x16xf32>
    %95 = vector.broadcast %94 : vector<1x8x16xf32> to vector<4x8x16xf32>
    %96 = arith.addf %93, %95 : vector<4x8x16xf32>
    %cst_43 = arith.constant dense<0xFF800000> : vector<4x8xf32>
    %97 = vector.multi_reduction <maximumf>, %96, %cst_43 [2] : vector<4x8x16xf32> to vector<4x8xf32>
    %98 = vector.shape_cast %97 : vector<4x8xf32> to vector<4x8x1xf32>
    %99 = vector.broadcast %98 : vector<4x8x1xf32> to vector<4x8x16xf32>
    %100 = arith.subf %96, %99 : vector<4x8x16xf32>
    %101 = math.exp %100 : vector<4x8x16xf32>
    %cst_44 = arith.constant dense<0.000000e+00> : vector<4x8xf32>
    %102 = vector.multi_reduction <add>, %101, %cst_44 [2] : vector<4x8x16xf32> to vector<4x8xf32>
    %103 = vector.shape_cast %102 : vector<4x8xf32> to vector<4x8x1xf32>
    %104 = tpu.reciprocal %103 : vector<4x8x1xf32> -> vector<4x8x1xf32>
    %105 = vector.broadcast %104 : vector<4x8x1xf32> to vector<4x8x16xf32>
    %106 = arith.mulf %101, %105 : vector<4x8x16xf32>
    %107 = arith.truncf %106 : vector<4x8x16xf32> to vector<4x8x16xbf16>
    "tpu.trace_start"() <{level = 10 : i32, message = "hqk,hkd->hqd"}> : () -> ()
    %cst_45 = arith.constant dense<0.000000e+00> : vector<4x8x8xf32>
    %108 = tpu.matmul %107, %92, %cst_45 {dimension_numbers = #tpu.dot_dimension_numbers<[2], [1], [1], [2], [0, 0, 0, 1, 1, 2], [0], [0]>} : vector<4x8x16xbf16>, vector<4x16x8xbf16>, vector<4x8x8xf32> -> vector<4x8x8xf32>
    "tpu.trace_stop"() : () -> ()
    %109 = tpu.transpose %108, [1, 0, 2] : vector<4x8x8xf32> -> vector<8x4x8xf32>
    %110 = vector.shape_cast %109 : vector<8x4x8xf32> to vector<8x32xf32>
    %111 = arith.truncf %110 : vector<8x32xf32> to vector<8x32xbf16>
    %112 = vector.shape_cast %106 : vector<4x8x16xf32> to vector<32x16xf32>
    %c0_46 = arith.constant 0 : index
    %c0_47 = arith.constant 0 : index
    %c0_48 = arith.constant 0 : index
    %113 = vector.load %arg21[%c0_46, %c0_47, %c0_48] : memref<1x32x16xf32, #tpu.memory_space<vmem>>, vector<1x32x16xf32>
    %114 = vector.shape_cast %113 : vector<1x32x16xf32> to vector<32x16xf32>
    %115 = vector.shape_cast %112 : vector<32x16xf32> to vector<1x32x16xf32>
    tpu.vector_store %arg21[%c0_46, %c0_47, %c0_48], %115 {strides = array<i32>} : memref<1x32x16xf32, #tpu.memory_space<vmem>>, vector<1x32x16xf32>,
    %c0_49 = arith.constant 0 : index
    %c0_50 = arith.constant 0 : index
    %116 = vector.load %arg13[%c0_49, %c0_50] : memref<32x32xbf16, #tpu.memory_space<vmem>>, vector<32x32xbf16>
    %cst_51 = arith.constant dense<0.000000e+00> : vector<8x32xf32>
    %117 = tpu.matmul %111, %116, %cst_51 {dimension_numbers = #tpu.dot_dimension_numbers<[1], [0], [0], [1], [0, 0, 1, 1], [], []>} : vector<8x32xbf16>, vector<32x32xbf16>, vector<8x32xf32> -> vector<8x32xf32>
    %c0_52 = arith.constant 0 : index
    %c0_53 = arith.constant 0 : index
    %118 = vector.load %arg14[%c0_52, %c0_53] : memref<1x32xf32, #tpu.memory_space<vmem>>, vector<1x32xf32>
    %119 = vector.broadcast %118 : vector<1x32xf32> to vector<8x32xf32>
    %120 = arith.addf %117, %119 : vector<8x32xf32>
    %121 = arith.addf %120, %70 : vector<8x32xf32>
    %cst_54 = arith.constant dense<0.000000e+00> : vector<8xf32>
    %122 = vector.multi_reduction <add>, %121, %cst_54 [1] : vector<8x32xf32> to vector<8xf32>
    %123 = vector.shape_cast %122 : vector<8xf32> to vector<8x1xf32>
    %cst_55 = arith.constant 3.200000e+01 : f32
    %124 = vector.broadcast %cst_55 : f32 to vector<8x1xf32>
    %125 = arith.divf %123, %124 : vector<8x1xf32>
    %126 = vector.broadcast %125 : vector<8x1xf32> to vector<8x32xf32>
    %127 = arith.subf %121, %126 : vector<8x32xf32>
    %128 = arith.mulf %127, %127 : vector<8x32xf32>
    %cst_56 = arith.constant dense<0.000000e+00> : vector<8xf32>
    %129 = vector.multi_reduction <add>, %128, %cst_56 [1] : vector<8x32xf32> to vector<8xf32>
    %130 = vector.shape_cast %129 : vector<8xf32> to vector<8x1xf32>
    %cst_57 = arith.constant 3.200000e+01 : f32
    %131 = vector.broadcast %cst_57 : f32 to vector<8x1xf32>
    %132 = arith.divf %130, %131 : vector<8x1xf32>
    %133 = vector.broadcast %125 : vector<8x1xf32> to vector<8x32xf32>
    %134 = arith.subf %121, %133 : vector<8x32xf32>
    %cst_58 = arith.constant 9.99999974E-6 : f32
    %135 = vector.broadcast %cst_58 : f32 to vector<8x1xf32>
    %136 = arith.addf %132, %135 : vector<8x1xf32>
    %137 = math.rsqrt %136 : vector<8x1xf32>
    %138 = vector.broadcast %137 : vector<8x1xf32> to vector<8x32xf32>
    %139 = arith.mulf %134, %138 : vector<8x32xf32>
    %140 = arith.truncf %139 : vector<8x32xf32> to vector<8x32xbf16>
    %c0_59 = arith.constant 0 : index
    %c0_60 = arith.constant 0 : index
    %141 = vector.load %arg15[%c0_59, %c0_60] : memref<32x64xbf16, #tpu.memory_space<vmem>>, vector<32x64xbf16>
    %cst_61 = arith.constant dense<0.000000e+00> : vector<8x64xf32>
    %142 = tpu.matmul %140, %141, %cst_61 {dimension_numbers = #tpu.dot_dimension_numbers<[1], [0], [0], [1], [0, 0, 1, 1], [], []>} : vector<8x32xbf16>, vector<32x64xbf16>, vector<8x64xf32> -> vector<8x64xf32>
    %c0_62 = arith.constant 0 : index
    %c0_63 = arith.constant 0 : index
    %143 = vector.load %arg16[%c0_62, %c0_63] : memref<1x64xf32, #tpu.memory_space<vmem>>, vector<1x64xf32>
    %144 = vector.broadcast %143 : vector<1x64xf32> to vector<8x64xf32>
    %145 = arith.addf %142, %144 : vector<8x64xf32>
    %cst_64 = arith.constant 0.000000e+00 : f32
    %146 = vector.broadcast %cst_64 : f32 to vector<8x64xf32>
    %147 = arith.maximumf %145, %146 : vector<8x64xf32>
    %148 = arith.truncf %147 : vector<8x64xf32> to vector<8x64xbf16>
    %c0_65 = arith.constant 0 : index
    %c0_66 = arith.constant 0 : index
    %149 = vector.load %arg17[%c0_65, %c0_66] : memref<64x32xbf16, #tpu.memory_space<vmem>>, vector<64x32xbf16>
    %cst_67 = arith.constant dense<0.000000e+00> : vector<8x32xf32>
    %150 = tpu.matmul %148, %149, %cst_67 {dimension_numbers = #tpu.dot_dimension_numbers<[1], [0], [0], [1], [0, 0, 1, 1], [], []>} : vector<8x64xbf16>, vector<64x32xbf16>, vector<8x32xf32> -> vector<8x32xf32>
    %c0_68 = arith.constant 0 : index
    %c0_69 = arith.constant 0 : index
    %151 = vector.load %arg18[%c0_68, %c0_69] : memref<1x32xf32, #tpu.memory_space<vmem>>, vector<1x32xf32>
    %152 = vector.broadcast %151 : vector<1x32xf32> to vector<8x32xf32>
    %153 = arith.addf %150, %152 : vector<8x32xf32>
    %154 = arith.addf %153, %139 : vector<8x32xf32>
    %cst_70 = arith.constant dense<0.000000e+00> : vector<8xf32>
    %155 = vector.multi_reduction <add>, %154, %cst_70 [1] : vector<8x32xf32> to vector<8xf32>
    %156 = vector.shape_cast %155 : vector<8xf32> to vector<8x1xf32>
    %cst_71 = arith.constant 3.200000e+01 : f32
    %157 = vector.broadcast %cst_71 : f32 to vector<8x1xf32>
    %158 = arith.divf %156, %157 : vector<8x1xf32>
    %159 = vector.broadcast %158 : vector<8x1xf32> to vector<8x32xf32>
    %160 = arith.subf %154, %159 : vector<8x32xf32>
    %161 = arith.mulf %160, %160 : vector<8x32xf32>
    %cst_72 = arith.constant dense<0.000000e+00> : vector<8xf32>
    %162 = vector.multi_reduction <add>, %161, %cst_72 [1] : vector<8x32xf32> to vector<8xf32>
    %163 = vector.shape_cast %162 : vector<8xf32> to vector<8x1xf32>
    %cst_73 = arith.constant 3.200000e+01 : f32
    %164 = vector.broadcast %cst_73 : f32 to vector<8x1xf32>
    %165 = arith.divf %163, %164 : vector<8x1xf32>
    %166 = vector.broadcast %158 : vector<8x1xf32> to vector<8x32xf32>
    %167 = arith.subf %154, %166 : vector<8x32xf32>
    %cst_74 = arith.constant 9.99999974E-6 : f32
    %168 = vector.broadcast %cst_74 : f32 to vector<8x1xf32>
    %169 = arith.addf %165, %168 : vector<8x1xf32>
    %170 = math.rsqrt %169 : vector<8x1xf32>
    %171 = vector.broadcast %170 : vector<8x1xf32> to vector<8x32xf32>
    %172 = arith.mulf %167, %171 : vector<8x32xf32>
    %c0_75 = arith.constant 0 : index
    %c0_76 = arith.constant 0 : index
    %c0_77 = arith.constant 0 : index
    %173 = vector.load %arg19[%c0_75, %c0_76, %c0_77] : memref<1x8x32xf32, #tpu.memory_space<vmem>>, vector<1x8x32xf32>
    %174 = vector.shape_cast %173 : vector<1x8x32xf32> to vector<8x32xf32>
    %175 = vector.shape_cast %172 : vector<8x32xf32> to vector<1x8x32xf32>
    tpu.vector_store %arg19[%c0_75, %c0_76, %c0_77], %175 {strides = array<i32>} : memref<1x8x32xf32, #tpu.memory_space<vmem>>, vector<1x8x32xf32>,
    return
  }
  func.func @transform_0(%arg0: i32) -> (i32, i32, i32) {
    %c0_i32 = arith.constant 0 : i32
    %c0_i32_0 = arith.constant 0 : i32
    %c0_i32_1 = arith.constant 0 : i32
    return %arg0, %c0_i32, %c0_i32_0 : i32, i32, i32
  }
  func.func @transform_1(%arg0: i32) -> (i32, i32, i32) {
    %c0_i32 = arith.constant 0 : i32
    %c0_i32_0 = arith.constant 0 : i32
    %c0_i32_1 = arith.constant 0 : i32
    return %arg0, %c0_i32, %c0_i32_0 : i32, i32, i32
  }
  func.func @transform_2(%arg0: i32) -> (i32, i32, i32) {
    %c0_i32 = arith.constant 0 : i32
    %c0_i32_0 = arith.constant 0 : i32
    %c0_i32_1 = arith.constant 0 : i32
    return %arg0, %c0_i32, %c0_i32_0 : i32, i32, i32
  }
  func.func @transform_3(%arg0: i32) -> (i32, i32, i32) {
    %c0_i32 = arith.constant 0 : i32
    %c0_i32_0 = arith.constant 0 : i32
    %c0_i32_1 = arith.constant 0 : i32
    return %arg0, %c0_i32, %c0_i32_0 : i32, i32, i32
  }
  func.func @transform_4(%arg0: i32) -> (i32, i32) {
    %c0_i32 = arith.constant 0 : i32
    %c0_i32_0 = arith.constant 0 : i32
    %c0_i32_1 = arith.constant 0 : i32
    return %c0_i32, %c0_i32_0 : i32, i32
  }
  func.func @transform_5(%arg0: i32) -> (i32, i32) {
    %c0_i32 = arith.constant 0 : i32
    %c0_i32_0 = arith.constant 0 : i32
    %c0_i32_1 = arith.constant 0 : i32
    return %c0_i32, %c0_i32_0 : i32, i32
  }
  func.func @transform_6(%arg0: i32) -> (i32, i32) {
    %c0_i32 = arith.constant 0 : i32
    %c0_i32_0 = arith.constant 0 : i32
    %c0_i32_1 = arith.constant 0 : i32
    return %c0_i32, %c0_i32_0 : i32, i32
  }
  func.func @transform_7(%arg0: i32) -> (i32, i32) {
    %c0_i32 = arith.constant 0 : i32
    %c0_i32_0 = arith.constant 0 : i32
    %c0_i32_1 = arith.constant 0 : i32
    return %c0_i32, %c0_i32_0 : i32, i32
  }
  func.func @transform_8(%arg0: i32) -> (i32, i32) {
    %c0_i32 = arith.constant 0 : i32
    %c0_i32_0 = arith.constant 0 : i32
    %c0_i32_1 = arith.constant 0 : i32
    return %c0_i32, %c0_i32_0 : i32, i32
  }
  func.func @transform_9(%arg0: i32) -> (i32, i32) {
    %c0_i32 = arith.constant 0 : i32
    %c0_i32_0 = arith.constant 0 : i32
    %c0_i32_1 = arith.constant 0 : i32
    return %c0_i32, %c0_i32_0 : i32, i32
  }
  func.func @transform_10(%arg0: i32) -> (i32, i32) {
    %c0_i32 = arith.constant 0 : i32
    %c0_i32_0 = arith.constant 0 : i32
    %c0_i32_1 = arith.constant 0 : i32
    return %c0_i32, %c0_i32_0 : i32, i32
  }
  func.func @transform_11(%arg0: i32) -> (i32, i32) {
    %c0_i32 = arith.constant 0 : i32
    %c0_i32_0 = arith.constant 0 : i32
    %c0_i32_1 = arith.constant 0 : i32
    return %c0_i32, %c0_i32_0 : i32, i32
  }
  func.func @transform_12(%arg0: i32) -> (i32, i32) {
    %c0_i32 = arith.constant 0 : i32
    %c0_i32_0 = arith.constant 0 : i32
    %c0_i32_1 = arith.constant 0 : i32
    return %c0_i32, %c0_i32_0 : i32, i32
  }
  func.func @transform_13(%arg0: i32) -> (i32, i32) {
    %c0_i32 = arith.constant 0 : i32
    %c0_i32_0 = arith.constant 0 : i32
    %c0_i32_1 = arith.constant 0 : i32
    return %c0_i32, %c0_i32_0 : i32, i32
  }
  func.func @transform_14(%arg0: i32) -> (i32, i32) {
    %c0_i32 = arith.constant 0 : i32
    %c0_i32_0 = arith.constant 0 : i32
    %c0_i32_1 = arith.constant 0 : i32
    return %c0_i32, %c0_i32_0 : i32, i32
  }
  func.func @transform_15(%arg0: i32) -> (i32, i32) {
    %c0_i32 = arith.constant 0 : i32
    %c0_i32_0 = arith.constant 0 : i32
    %c0_i32_1 = arith.constant 0 : i32
    return %c0_i32, %c0_i32_0 : i32, i32
  }
  func.func @transform_16(%arg0: i32) -> (i32, i32) {
    %c0_i32 = arith.constant 0 : i32
    %c0_i32_0 = arith.constant 0 : i32
    %c0_i32_1 = arith.constant 0 : i32
    return %c0_i32, %c0_i32_0 : i32, i32
  }
  func.func @transform_17(%arg0: i32) -> (i32, i32) {
    %c0_i32 = arith.constant 0 : i32
    %c0_i32_0 = arith.constant 0 : i32
    %c0_i32_1 = arith.constant 0 : i32
    return %c0_i32, %c0_i32_0 : i32, i32
  }
  func.func @transform_18(%arg0: i32) -> (i32, i32, i32) {
    %c0_i32 = arith.constant 0 : i32
    %c0_i32_0 = arith.constant 0 : i32
    %c0_i32_1 = arith.constant 0 : i32
    return %arg0, %c0_i32, %c0_i32_0 : i32, i32, i32
  }
  func.func @transform_19(%arg0: i32) -> (i32, i32, i32) {
    %c0_i32 = arith.constant 0 : i32
    %c0_i32_0 = arith.constant 0 : i32
    %c0_i32_1 = arith.constant 0 : i32
    return %arg0, %c0_i32, %c0_i32_0 : i32, i32, i32
  }
  func.func @transform_20(%arg0: i32) -> (i32, i32, i32) {
    %c0_i32 = arith.constant 0 : i32
    %c0_i32_0 = arith.constant 0 : i32
    %c0_i32_1 = arith.constant 0 : i32
    return %arg0, %c0_i32, %c0_i32_0 : i32, i32, i32
  }
}

</mosaic_0001>

<llo_original>
// kernel: _lambda_.1
$region0: #{_lambda_.1}
  #allocation0 [shape = 'u32[]', space=smem, size = 0x4, offset = 0x4, fixed_abs, tag = 'smem constant byte address 0x4 - core index']
  #allocation1 [shape = 'u32[72,128]{1,0:T(1,128)}', space=vmem, size = 0x9000, scoped, tag = 'internal scratch']
  %s0 = inlined_call_operand.vmem [shape: f32[2,8,32], index: 0, kind: input, shape index: {}]
  %s1 = inlined_call_operand.vmem [shape: f32[2,16,64], index: 1, kind: input, shape index: {}]
  %s2 = inlined_call_operand.vmem [shape: f32[2,8,8], index: 2, kind: input, shape index: {}]
  %s3 = inlined_call_operand.vmem [shape: f32[2,8,16], index: 3, kind: input, shape index: {}]
  %s4 = inlined_call_operand.hbm [shape: bf16[32,96], index: 4, kind: input, shape index: {}]
  %s5 = inlined_call_operand.hbm [shape: f32[1,96], index: 5, kind: input, shape index: {}]
  %s6 = inlined_call_operand.hbm [shape: bf16[32,32], index: 6, kind: input, shape index: {}]
  %s7 = inlined_call_operand.vmem [shape: f32[1,32], index: 7, kind: input, shape index: {}]
  %s8 = inlined_call_operand.hbm [shape: bf16[32,32], index: 8, kind: input, shape index: {}]
  %s9 = inlined_call_operand.vmem [shape: f32[1,32], index: 9, kind: input, shape index: {}]
  %s10 = inlined_call_operand.hbm [shape: bf16[64,64], index: 10, kind: input, shape index: {}]
  %s11 = inlined_call_operand.vmem [shape: f32[1,64], index: 11, kind: input, shape index: {}]
  %s12 = inlined_call_operand.hbm [shape: bf16[32,32], index: 12, kind: input, shape index: {}]
  %s13 = inlined_call_operand.vmem [shape: f32[1,32], index: 13, kind: input, shape index: {}]
  %s14 = inlined_call_operand.hbm [shape: bf16[32,64], index: 14, kind: input, shape index: {}]
  %s15 = inlined_call_operand.vmem [shape: f32[1,64], index: 15, kind: input, shape index: {}]
  %s16 = inlined_call_operand.hbm [shape: bf16[64,32], index: 16, kind: input, shape index: {}]
  %s17 = inlined_call_operand.vmem [shape: f32[1,32], index: 17, kind: input, shape index: {}]
  %s18 = inlined_call_operand.hbm [shape: f32[2,8,32], index: 18, kind: output, shape index: {0}]
  %s19 = inlined_call_operand.hbm [shape: f32[2,32,8], index: 19, kind: output, shape index: {1}]
  %s20 = inlined_call_operand.hbm [shape: f32[2,32,16], index: 20, kind: output, shape index: {2}]
  %21 = xla_tuple %s18, %s19, %s20
  %s22 = sld [smem:[#allocation0]]
  $region153: #{_lambda_.1} parent=0
    _
  %s24 = ssub.s32 1, %s22
  %s25 = scalar_select 0, %s24, %s22
  $region1: #{_lambda_.1} parent=0
    #allocation2 [shape = 'u8[8192]{0}', space=vmem, size = 0x2000, scoped, tag = 'input window, operand 4, single buffered']
    #allocation3 [shape = 's32[2]{0}', space=sflag, size = 0x8, scoped, tag = 'scoped memory for _lambda_.1']
    #allocation4 [shape = 's32[2]{0}', space=sflag, size = 0x8, scoped, tag = 'scoped memory for _lambda_.1']
    #allocation5 [shape = 'u8[512]{0}', space=vmem, size = 0x400, scoped, tag = 'input window, operand 5, single buffered']
    #allocation6 [shape = 's32[1]{0}', space=sflag, size = 0x4, scoped, tag = 'scoped memory for _lambda_.1']
    #allocation7 [shape = 'u8[8192]{0}', space=vmem, size = 0x2000, scoped, tag = 'input window, operand 6, single buffered']
    #allocation8 [shape = 'u8[8192]{0}', space=vmem, size = 0x2000, scoped, tag = 'input window, operand 8, single buffered']
    #allocation9 [shape = 's32[1]{0}', space=sflag, size = 0x4, scoped, tag = 'scoped memory for _lambda_.1']
    #allocation10 [shape = 'u8[16384]{0}', space=vmem, size = 0x4000, scoped, tag = 'input window, operand 10, single buffered']
    #allocation11 [shape = 'u8[8192]{0}', space=vmem, size = 0x2000, scoped, tag = 'input window, operand 12, single buffered']
    #allocation12 [shape = 's32[1]{0}', space=sflag, size = 0x4, scoped, tag = 'scoped memory for _lambda_.1']
    #allocation13 [shape = 'u8[8192]{0}', space=vmem, size = 0x2000, scoped, tag = 'input window, operand 14, single buffered']
    #allocation14 [shape = 'u8[16384]{0}', space=vmem, size = 0x4000, scoped, tag = 'input window, operand 16, single buffered']
    #allocation15 [shape = 's32[1]{0}', space=sflag, size = 0x4, scoped, tag = 'scoped memory for _lambda_.1']
    #allocation16 [shape = 'u8[8192]{0}', space=vmem, size = 0x2000, scoped, tag = 'output window, operand 0']
    #allocation17 [shape = 'u8[32768]{0}', space=vmem, size = 0x8000, scoped, tag = 'output window, operand 1']
    #allocation18 [shape = 's32[2]{0}', space=sflag, size = 0x8, scoped, tag = 'scoped memory for _lambda_.1']
    #allocation19 [shape = 'u8[32768]{0}', space=vmem, size = 0x8000, scoped, tag = 'output window, operand 2']
    %26 = vsyncpa [#allocation3], 0
    %27 = vsyncpa [#allocation6], 0
    %28 = vsyncpa [#allocation9], 0
    %29 = vsyncpa [#allocation12], 0
    %30 = vsyncpa [#allocation15], 0
    %31 = vsyncpa [#allocation4], 0
    %s32 = scalar_lea.sflag [#allocation4], 1
    %33 = vsyncpa %s32, 0
    %34 = vsyncpa [#allocation18], 0
    %s35 = scalar_lea.sflag [#allocation18], 1
    %36 = vsyncpa %s35, 0
    loop: start=0, step=1, limit=4
    $region2: #{_lambda_.1} parent=1 // loop_pre_header
      _
    $region3: #{_lambda_.1} parent=1 // loop_header
      %s38 = sphi 0, %s42
      %p39 = scmp.ge.s32.totalorder %s38, 4
      %s48 = sphi 0, %s50
      %s51 = sphi 0, %s48
      %s52 = sphi 0, %s51
      %s68 = sphi 0, %s52
      %s74 = sphi 0, %s76
      %s77 = sphi 0, %s74
      %s78 = sphi 0, %s77
      %s94 = sphi 0, %s78
      %s100 = sphi 0, %s102
      %s103 = sphi 0, %s100
      %s104 = sphi 0, %s103
      %s120 = sphi 0, %s104
      %s126 = sphi 0, %s128
      %s129 = sphi 0, %s126
      %s130 = sphi 0, %s129
      %s146 = sphi 0, %s130
      %s150 = sphi 0, %s150
      %s152 = sphi 0, %s150
      %s153 = sphi 0, %s152
      %s167 = sphi 0, %s153
      %s171 = sphi 0, %s171
      %s173 = sphi 0, %s171
      %s174 = sphi 0, %s173
      %s188 = sphi 0, %s174
      %s192 = sphi 0, %s192
      %s194 = sphi 0, %s192
      %s195 = sphi 0, %s194
      %s209 = sphi 0, %s195
      %s213 = sphi 0, %s213
      %s215 = sphi 0, %s213
      %s216 = sphi 0, %s215
      %s230 = sphi 0, %s216
      %s234 = sphi 0, %s234
      %s236 = sphi 0, %s234
      %s237 = sphi 0, %s236
      %s251 = sphi 0, %s237
      %s255 = sphi 0, %s255
      %s257 = sphi 0, %s255
      %s258 = sphi 0, %s257
      %s272 = sphi 0, %s258
      %s276 = sphi 0, %s276
      %s278 = sphi 0, %s276
      %s279 = sphi 0, %s278
      %s293 = sphi 0, %s279
      %s297 = sphi 0, %s297
      %s299 = sphi 0, %s297
      %s300 = sphi 0, %s299
      %s314 = sphi 0, %s300
      %s318 = sphi 0, %s318
      %s320 = sphi 0, %s318
      %s321 = sphi 0, %s320
      %s335 = sphi 0, %s321
      %s339 = sphi 0, %s339
      %s341 = sphi 0, %s339
      %s342 = sphi 0, %s341
      %s356 = sphi 0, %s342
      %s360 = sphi 0, %s360
      %s362 = sphi 0, %s360
      %s363 = sphi 0, %s362
      %s377 = sphi 0, %s363
      %s381 = sphi 0, %s381
      %s383 = sphi 0, %s381
      %s384 = sphi 0, %s383
      %s398 = sphi 0, %s384
      %s402 = sphi 0, %s402
      %s404 = sphi 0, %s402
      %s405 = sphi 0, %s404
      %s419 = sphi 0, %s405
      %s423 = sphi 0, %s423
      %s425 = sphi 0, %s423
      %s426 = sphi 0, %s425
      %s440 = sphi 0, %s426
      %s446 = sphi 0, %s448
      %s449 = sphi 0, %s446
      %s450 = sphi 0, %s449
      %s466 = sphi 0, %s450
      %s472 = sphi 0, %s474
      %s475 = sphi 0, %s472
      %s476 = sphi 0, %s475
      %s492 = sphi 0, %s476
      %s498 = sphi 0, %s500
      %s501 = sphi 0, %s498
      %s502 = sphi 0, %s501
      %s518 = sphi 0, %s502
    $region4: #{_lambda_.1} parent=1 // loop_header_branch
      %41 = sbr.rel (%p39) target = $region8
    $region5: #{_lambda_.1} parent=1 // loop_body
      %s43 = ssub.s32 %s38, 1
      %s44 = ssub.s32 %s38, 2
      %s45 = sadd.s32 %s38, 1
      %s46 = ssub.s32 %s38, %s45
      %p47 = scmp.eq.s32.totalorder %s46, 0
      %s49 = sadd.s32 %s48, 1
      %s50 = scalar_select %p47, %s48, %s49
      %p53 = pneg %p47
      %p54 = scmp.eq.s32.totalorder %s38, 1
      %p55 = por %p53, %p54
      %p56 = scmp.ne.s32.totalorder %s48, %s51
      %p57 = scmp.eq.s32.totalorder %s38, 0
      %p58 = por %p56, %p57
      %p59 = scmp.ne.s32.totalorder %s48, %s51
      %p60 = scmp.eq.s32.totalorder %s43, 1
      %p61 = por %p59, %p60
      %p62 = scmp.ne.s32.totalorder %s51, %s52
      %p63 = scmp.eq.s32.totalorder %s43, 0
      %p64 = por %p62, %p63
      %p65 = scmp.ne.s32.totalorder %s51, %s52
      %p66 = scmp.eq.s32.totalorder %s44, 1
      %p67 = por %p65, %p66
      %p69 = scmp.ne.s32.totalorder %s52, %s68
      %p70 = scmp.eq.s32.totalorder %s44, 0
      %p71 = por %p69, %p70
      %s72 = ssub.s32 %s38, %s45
      %p73 = scmp.eq.s32.totalorder %s72, 0
      %s75 = sadd.s32 %s74, 1
      %s76 = scalar_select %p73, %s74, %s75
      %p79 = pneg %p73
      %p80 = scmp.eq.s32.totalorder %s38, 1
      %p81 = por %p79, %p80
      %p82 = scmp.ne.s32.totalorder %s74, %s77
      %p83 = scmp.eq.s32.totalorder %s38, 0
      %p84 = por %p82, %p83
      %p85 = scmp.ne.s32.totalorder %s74, %s77
      %p86 = scmp.eq.s32.totalorder %s43, 1
      %p87 = por %p85, %p86
      %p88 = scmp.ne.s32.totalorder %s77, %s78
      %p89 = scmp.eq.s32.totalorder %s43, 0
      %p90 = por %p88, %p89
      %p91 = scmp.ne.s32.totalorder %s77, %s78
      %p92 = scmp.eq.s32.totalorder %s44, 1
      %p93 = por %p91, %p92
      %p95 = scmp.ne.s32.totalorder %s78, %s94
      %p96 = scmp.eq.s32.totalorder %s44, 0
      %p97 = por %p95, %p96
      %s98 = ssub.s32 %s38, %s45
      %p99 = scmp.eq.s32.totalorder %s98, 0
      %s101 = sadd.s32 %s100, 1
      %s102 = scalar_select %p99, %s100, %s101
      %p105 = pneg %p99
      %p106 = scmp.eq.s32.totalorder %s38, 1
      %p107 = por %p105, %p106
      %p108 = scmp.ne.s32.totalorder %s100, %s103
      %p109 = scmp.eq.s32.totalorder %s38, 0
      %p110 = por %p108, %p109
      %p111 = scmp.ne.s32.totalorder %s100, %s103
      %p112 = scmp.eq.s32.totalorder %s43, 1
      %p113 = por %p111, %p112
      %p114 = scmp.ne.s32.totalorder %s103, %s104
      %p115 = scmp.eq.s32.totalorder %s43, 0
      %p116 = por %p114, %p115
      %p117 = scmp.ne.s32.totalorder %s103, %s104
      %p118 = scmp.eq.s32.totalorder %s44, 1
      %p119 = por %p117, %p118
      %p121 = scmp.ne.s32.totalorder %s104, %s120
      %p122 = scmp.eq.s32.totalorder %s44, 0
      %p123 = por %p121, %p122
      %s124 = ssub.s32 %s38, %s45
      %p125 = scmp.eq.s32.totalorder %s124, 0
      %s127 = sadd.s32 %s126, 1
      %s128 = scalar_select %p125, %s126, %s127
      %p131 = pneg %p125
      %p132 = scmp.eq.s32.totalorder %s38, 1
      %p133 = por %p131, %p132
      %p134 = scmp.ne.s32.totalorder %s126, %s129
      %p135 = scmp.eq.s32.totalorder %s38, 0
      %p136 = por %p134, %p135
      %p137 = scmp.ne.s32.totalorder %s126, %s129
      %p138 = scmp.eq.s32.totalorder %s43, 1
      %p139 = por %p137, %p138
      %p140 = scmp.ne.s32.totalorder %s129, %s130
      %p141 = scmp.eq.s32.totalorder %s43, 0
      %p142 = por %p140, %p141
      %p143 = scmp.ne.s32.totalorder %s129, %s130
      %p144 = scmp.eq.s32.totalorder %s44, 1
      %p145 = por %p143, %p144
      %p147 = scmp.ne.s32.totalorder %s130, %s146
      %p148 = scmp.eq.s32.totalorder %s44, 0
      %p149 = por %p147, %p148
      %s151 = sadd.s32 %s150, 1
      %p154 = scmp.eq.s32.totalorder %s38, 1
      %p155 = scmp.ne.s32.totalorder %s150, %s152
      %p156 = scmp.eq.s32.totalorder %s38, 0
      %p157 = por %p155, %p156
      %p158 = scmp.ne.s32.totalorder %s150, %s152
      %p159 = scmp.eq.s32.totalorder %s43, 1
      %p160 = por %p158, %p159
      %p161 = scmp.ne.s32.totalorder %s152, %s153
      %p162 = scmp.eq.s32.totalorder %s43, 0
      %p163 = por %p161, %p162
      %p164 = scmp.ne.s32.totalorder %s152, %s153
      %p165 = scmp.eq.s32.totalorder %s44, 1
      %p166 = por %p164, %p165
      %p168 = scmp.ne.s32.totalorder %s153, %s167
      %p169 = scmp.eq.s32.totalorder %s44, 0
      %p170 = por %p168, %p169
      %s172 = sadd.s32 %s171, 1
      %p175 = scmp.eq.s32.totalorder %s38, 1
      %p176 = scmp.ne.s32.totalorder %s171, %s173
      %p177 = scmp.eq.s32.totalorder %s38, 0
      %p178 = por %p176, %p177
      %p179 = scmp.ne.s32.totalorder %s171, %s173
      %p180 = scmp.eq.s32.totalorder %s43, 1
      %p181 = por %p179, %p180
      %p182 = scmp.ne.s32.totalorder %s173, %s174
      %p183 = scmp.eq.s32.totalorder %s43, 0
      %p184 = por %p182, %p183
      %p185 = scmp.ne.s32.totalorder %s173, %s174
      %p186 = scmp.eq.s32.totalorder %s44, 1
      %p187 = por %p185, %p186
      %p189 = scmp.ne.s32.totalorder %s174, %s188
      %p190 = scmp.eq.s32.totalorder %s44, 0
      %p191 = por %p189, %p190
      %s193 = sadd.s32 %s192, 1
      %p196 = scmp.eq.s32.totalorder %s38, 1
      %p197 = scmp.ne.s32.totalorder %s192, %s194
      %p198 = scmp.eq.s32.totalorder %s38, 0
      %p199 = por %p197, %p198
      %p200 = scmp.ne.s32.totalorder %s192, %s194
      %p201 = scmp.eq.s32.totalorder %s43, 1
      %p202 = por %p200, %p201
      %p203 = scmp.ne.s32.totalorder %s194, %s195
      %p204 = scmp.eq.s32.totalorder %s43, 0
      %p205 = por %p203, %p204
      %p206 = scmp.ne.s32.totalorder %s194, %s195
      %p207 = scmp.eq.s32.totalorder %s44, 1
      %p208 = por %p206, %p207
      %p210 = scmp.ne.s32.totalorder %s195, %s209
      %p211 = scmp.eq.s32.totalorder %s44, 0
      %p212 = por %p210, %p211
      %s214 = sadd.s32 %s213, 1
      %p217 = scmp.eq.s32.totalorder %s38, 1
      %p218 = scmp.ne.s32.totalorder %s213, %s215
      %p219 = scmp.eq.s32.totalorder %s38, 0
      %p220 = por %p218, %p219
      %p221 = scmp.ne.s32.totalorder %s213, %s215
      %p222 = scmp.eq.s32.totalorder %s43, 1
      %p223 = por %p221, %p222
      %p224 = scmp.ne.s32.totalorder %s215, %s216
      %p225 = scmp.eq.s32.totalorder %s43, 0
      %p226 = por %p224, %p225
      %p227 = scmp.ne.s32.totalorder %s215, %s216
      %p228 = scmp.eq.s32.totalorder %s44, 1
      %p229 = por %p227, %p228
      %p231 = scmp.ne.s32.totalorder %s216, %s230
      %p232 = scmp.eq.s32.totalorder %s44, 0
      %p233 = por %p231, %p232
      %s235 = sadd.s32 %s234, 1
      %p238 = scmp.eq.s32.totalorder %s38, 1
      %p239 = scmp.ne.s32.totalorder %s234, %s236
      %p240 = scmp.eq.s32.totalorder %s38, 0
      %p241 = por %p239, %p240
      %p242 = scmp.ne.s32.totalorder %s234, %s236
      %p243 = scmp.eq.s32.totalorder %s43, 1
      %p244 = por %p242, %p243
      %p245 = scmp.ne.s32.totalorder %s236, %s237
      %p246 = scmp.eq.s32.totalorder %s43, 0
      %p247 = por %p245, %p246
      %p248 = scmp.ne.s32.totalorder %s236, %s237
      %p249 = scmp.eq.s32.totalorder %s44, 1
      %p250 = por %p248, %p249
      %p252 = scmp.ne.s32.totalorder %s237, %s251
      %p253 = scmp.eq.s32.totalorder %s44, 0
      %p254 = por %p252, %p253
      %s256 = sadd.s32 %s255, 1
      %p259 = scmp.eq.s32.totalorder %s38, 1
      %p260 = scmp.ne.s32.totalorder %s255, %s257
      %p261 = scmp.eq.s32.totalorder %s38, 0
      %p262 = por %p260, %p261
      %p263 = scmp.ne.s32.totalorder %s255, %s257
      %p264 = scmp.eq.s32.totalorder %s43, 1
      %p265 = por %p263, %p264
      %p266 = scmp.ne.s32.totalorder %s257, %s258
      %p267 = scmp.eq.s32.totalorder %s43, 0
      %p268 = por %p266, %p267
      %p269 = scmp.ne.s32.totalorder %s257, %s258
      %p270 = scmp.eq.s32.totalorder %s44, 1
      %p271 = por %p269, %p270
      %p273 = scmp.ne.s32.totalorder %s258, %s272
      %p274 = scmp.eq.s32.totalorder %s44, 0
      %p275 = por %p273, %p274
      %s277 = sadd.s32 %s276, 1
      %p280 = scmp.eq.s32.totalorder %s38, 1
      %p281 = scmp.ne.s32.totalorder %s276, %s278
      %p282 = scmp.eq.s32.totalorder %s38, 0
      %p283 = por %p281, %p282
      %p284 = scmp.ne.s32.totalorder %s276, %s278
      %p285 = scmp.eq.s32.totalorder %s43, 1
      %p286 = por %p284, %p285
      %p287 = scmp.ne.s32.totalorder %s278, %s279
      %p288 = scmp.eq.s32.totalorder %s43, 0
      %p289 = por %p287, %p288
      %p290 = scmp.ne.s32.totalorder %s278, %s279
      %p291 = scmp.eq.s32.totalorder %s44, 1
      %p292 = por %p290, %p291
      %p294 = scmp.ne.s32.totalorder %s279, %s293
      %p295 = scmp.eq.s32.totalorder %s44, 0
      %p296 = por %p294, %p295
      %s298 = sadd.s32 %s297, 1
      %p301 = scmp.eq.s32.totalorder %s38, 1
      %p302 = scmp.ne.s32.totalorder %s297, %s299
      %p303 = scmp.eq.s32.totalorder %s38, 0
      %p304 = por %p302, %p303
      %p305 = scmp.ne.s32.totalorder %s297, %s299
      %p306 = scmp.eq.s32.totalorder %s43, 1
      %p307 = por %p305, %p306
      %p308 = scmp.ne.s32.totalorder %s299, %s300
      %p309 = scmp.eq.s32.totalorder %s43, 0
      %p310 = por %p308, %p309
      %p311 = scmp.ne.s32.totalorder %s299, %s300
      %p312 = scmp.eq.s32.totalorder %s44, 1
      %p313 = por %p311, %p312
      %p315 = scmp.ne.s32.totalorder %s300, %s314
      %p316 = scmp.eq.s32.totalorder %s44, 0
      %p317 = por %p315, %p316
      %s319 = sadd.s32 %s318, 1
      %p322 = scmp.eq.s32.totalorder %s38, 1
      %p323 = scmp.ne.s32.totalorder %s318, %s320
      %p324 = scmp.eq.s32.totalorder %s38, 0
      %p325 = por %p323, %p324
      %p326 = scmp.ne.s32.totalorder %s318, %s320
      %p327 = scmp.eq.s32.totalorder %s43, 1
      %p328 = por %p326, %p327
      %p329 = scmp.ne.s32.totalorder %s320, %s321
      %p330 = scmp.eq.s32.totalorder %s43, 0
      %p331 = por %p329, %p330
      %p332 = scmp.ne.s32.totalorder %s320, %s321
      %p333 = scmp.eq.s32.totalorder %s44, 1
      %p334 = por %p332, %p333
      %p336 = scmp.ne.s32.totalorder %s321, %s335
      %p337 = scmp.eq.s32.totalorder %s44, 0
      %p338 = por %p336, %p337
      %s340 = sadd.s32 %s339, 1
      %p343 = scmp.eq.s32.totalorder %s38, 1
      %p344 = scmp.ne.s32.totalorder %s339, %s341
      %p345 = scmp.eq.s32.totalorder %s38, 0
      %p346 = por %p344, %p345
      %p347 = scmp.ne.s32.totalorder %s339, %s341
      %p348 = scmp.eq.s32.totalorder %s43, 1
      %p349 = por %p347, %p348
      %p350 = scmp.ne.s32.totalorder %s341, %s342
      %p351 = scmp.eq.s32.totalorder %s43, 0
      %p352 = por %p350, %p351
      %p353 = scmp.ne.s32.totalorder %s341, %s342
      %p354 = scmp.eq.s32.totalorder %s44, 1
      %p355 = por %p353, %p354
      %p357 = scmp.ne.s32.totalorder %s342, %s356
      %p358 = scmp.eq.s32.totalorder %s44, 0
      %p359 = por %p357, %p358
      %s361 = sadd.s32 %s360, 1
      %p364 = scmp.eq.s32.totalorder %s38, 1
      %p365 = scmp.ne.s32.totalorder %s360, %s362
      %p366 = scmp.eq.s32.totalorder %s38, 0
      %p367 = por %p365, %p366
      %p368 = scmp.ne.s32.totalorder %s360, %s362
      %p369 = scmp.eq.s32.totalorder %s43, 1
      %p370 = por %p368, %p369
      %p371 = scmp.ne.s32.totalorder %s362, %s363
      %p372 = scmp.eq.s32.totalorder %s43, 0
      %p373 = por %p371, %p372
      %p374 = scmp.ne.s32.totalorder %s362, %s363
      %p375 = scmp.eq.s32.totalorder %s44, 1
      %p376 = por %p374, %p375
      %p378 = scmp.ne.s32.totalorder %s363, %s377
      %p379 = scmp.eq.s32.totalorder %s44, 0
      %p380 = por %p378, %p379
      %s382 = sadd.s32 %s381, 1
      %p385 = scmp.eq.s32.totalorder %s38, 1
      %p386 = scmp.ne.s32.totalorder %s381, %s383
      %p387 = scmp.eq.s32.totalorder %s38, 0
      %p388 = por %p386, %p387
      %p389 = scmp.ne.s32.totalorder %s381, %s383
      %p390 = scmp.eq.s32.totalorder %s43, 1
      %p391 = por %p389, %p390
      %p392 = scmp.ne.s32.totalorder %s383, %s384
      %p393 = scmp.eq.s32.totalorder %s43, 0
      %p394 = por %p392, %p393
      %p395 = scmp.ne.s32.totalorder %s383, %s384
      %p396 = scmp.eq.s32.totalorder %s44, 1
      %p397 = por %p395, %p396
      %p399 = scmp.ne.s32.totalorder %s384, %s398
      %p400 = scmp.eq.s32.totalorder %s44, 0
      %p401 = por %p399, %p400
      %s403 = sadd.s32 %s402, 1
      %p406 = scmp.eq.s32.totalorder %s38, 1
      %p407 = scmp.ne.s32.totalorder %s402, %s404
      %p408 = scmp.eq.s32.totalorder %s38, 0
      %p409 = por %p407, %p408
      %p410 = scmp.ne.s32.totalorder %s402, %s404
      %p411 = scmp.eq.s32.totalorder %s43, 1
      %p412 = por %p410, %p411
      %p413 = scmp.ne.s32.totalorder %s404, %s405
      %p414 = scmp.eq.s32.totalorder %s43, 0
      %p415 = por %p413, %p414
      %p416 = scmp.ne.s32.totalorder %s404, %s405
      %p417 = scmp.eq.s32.totalorder %s44, 1
      %p418 = por %p416, %p417
      %p420 = scmp.ne.s32.totalorder %s405, %s419
      %p421 = scmp.eq.s32.totalorder %s44, 0
      %p422 = por %p420, %p421
      %s424 = sadd.s32 %s423, 1
      %p427 = scmp.eq.s32.totalorder %s38, 1
      %p428 = scmp.ne.s32.totalorder %s423, %s425
      %p429 = scmp.eq.s32.totalorder %s38, 0
      %p430 = por %p428, %p429
      %p431 = scmp.ne.s32.totalorder %s423, %s425
      %p432 = scmp.eq.s32.totalorder %s43, 1
      %p433 = por %p431, %p432
      %p434 = scmp.ne.s32.totalorder %s425, %s426
      %p435 = scmp.eq.s32.totalorder %s43, 0
      %p436 = por %p434, %p435
      %p437 = scmp.ne.s32.totalorder %s425, %s426
      %p438 = scmp.eq.s32.totalorder %s44, 1
      %p439 = por %p437, %p438
      %p441 = scmp.ne.s32.totalorder %s426, %s440
      %p442 = scmp.eq.s32.totalorder %s44, 0
      %p443 = por %p441, %p442
      %s444 = ssub.s32 %s38, %s45
      %p445 = scmp.eq.s32.totalorder %s444, 0
      %s447 = sadd.s32 %s446, 1
      %s448 = scalar_select %p445, %s446, %s447
      %p451 = pneg %p445
      %p452 = scmp.eq.s32.totalorder %s38, 1
      %p453 = por %p451, %p452
      %p454 = scmp.ne.s32.totalorder %s446, %s449
      %p455 = scmp.eq.s32.totalorder %s38, 0
      %p456 = por %p454, %p455
      %p457 = scmp.ne.s32.totalorder %s446, %s449
      %p458 = scmp.eq.s32.totalorder %s43, 1
      %p459 = por %p457, %p458
      %p460 = scmp.ne.s32.totalorder %s449, %s450
      %p461 = scmp.eq.s32.totalorder %s43, 0
      %p462 = por %p460, %p461
      %p463 = scmp.ne.s32.totalorder %s449, %s450
      %p464 = scmp.eq.s32.totalorder %s44, 1
      %p465 = por %p463, %p464
      %p467 = scmp.ne.s32.totalorder %s450, %s466
      %p468 = scmp.eq.s32.totalorder %s44, 0
      %p469 = por %p467, %p468
      %s470 = ssub.s32 %s38, %s45
      %p471 = scmp.eq.s32.totalorder %s470, 0
      %s473 = sadd.s32 %s472, 1
      %s474 = scalar_select %p471, %s472, %s473
      %p477 = pneg %p471
      %p478 = scmp.eq.s32.totalorder %s38, 1
      %p479 = por %p477, %p478
      %p480 = scmp.ne.s32.totalorder %s472, %s475
      %p481 = scmp.eq.s32.totalorder %s38, 0
      %p482 = por %p480, %p481
      %p483 = scmp.ne.s32.totalorder %s472, %s475
      %p484 = scmp.eq.s32.totalorder %s43, 1
      %p485 = por %p483, %p484
      %p486 = scmp.ne.s32.totalorder %s475, %s476
      %p487 = scmp.eq.s32.totalorder %s43, 0
      %p488 = por %p486, %p487
      %p489 = scmp.ne.s32.totalorder %s475, %s476
      %p490 = scmp.eq.s32.totalorder %s44, 1
      %p491 = por %p489, %p490
      %p493 = scmp.ne.s32.totalorder %s476, %s492
      %p494 = scmp.eq.s32.totalorder %s44, 0
      %p495 = por %p493, %p494
      %s496 = ssub.s32 %s38, %s45
      %p497 = scmp.eq.s32.totalorder %s496, 0
      %s499 = sadd.s32 %s498, 1
      %s500 = scalar_select %p497, %s498, %s499
      %p503 = pneg %p497
      %p504 = scmp.eq.s32.totalorder %s38, 1
      %p505 = por %p503, %p504
      %p506 = scmp.ne.s32.totalorder %s498, %s501
      %p507 = scmp.eq.s32.totalorder %s38, 0
      %p508 = por %p506, %p507
      %p509 = scmp.ne.s32.totalorder %s498, %s501
      %p510 = scmp.eq.s32.totalorder %s43, 1
      %p511 = por %p509, %p510
      %p512 = scmp.ne.s32.totalorder %s501, %s502
      %p513 = scmp.eq.s32.totalorder %s43, 0
      %p514 = por %p512, %p513
      %p515 = scmp.ne.s32.totalorder %s501, %s502
      %p516 = scmp.eq.s32.totalorder %s44, 1
      %p517 = por %p515, %p516
      %p519 = scmp.ne.s32.totalorder %s502, %s518
      %p520 = scmp.eq.s32.totalorder %s44, 0
      %p521 = por %p519, %p520
      %p522 = scmp.le.s32.totalorder 1, %s38
      %p523 = scmp.lt.s32.totalorder %s38, 3
      %p524 = pnand %p522, %p523
      %p525 = pneg %p524
      // Predicated region
      $region9: #{_lambda_.1} parent=5 // pred_check
        _
      $region10: #{_lambda_.1} parent=5 // pred_check_branch
        %527 = sbr.rel (%p524) target = $region12
      $region11: #{_lambda_.1} parent=5 // pred_region
        %s528 = ssub.s32 %s38, 1
        // Predicated region
        $region13: #{_lambda_.1} parent=11 // pred_check
          %p529 = pneg %p163
        $region14: #{_lambda_.1} parent=11 // pred_check_branch
          %531 = sbr.rel (%p529) target = $region16
        $region15: #{_lambda_.1} parent=11 // pred_region
          %533 = vsyncadd [#allocation3], 0
          %s534 = sshll.u32 %s4, 4
          %s535 = int_to_ptr.hbm [resolvable:$true] %s534
          %s536 = sshll.u32 [#allocation2], 4
          %s537 = int_to_ptr.vmem [resolvable:$true] %s536
          %542 = dma.hbm_to_vmem [thread:$0]  %s535, 256, %s537, [#allocation3], 64, 64, 4
        $region16: #{_lambda_.1} parent=11 // pred_fallthru
          _
        // Predicated region
        $region17: #{_lambda_.1} parent=11 // pred_check
          %p543 = pneg %p184
        $region18: #{_lambda_.1} parent=11 // pred_check_branch
          %545 = sbr.rel (%p543) target = $region20
        $region19: #{_lambda_.1} parent=11 // pred_region
          %547 = vsyncadd [#allocation6], 0
          %s549 = sshll.u32 %s5, 4
          %s550 = int_to_ptr.hbm [resolvable:$true] %s549
          %s551 = sshll.u32 [#allocation5], 4
          %s552 = int_to_ptr.vmem [resolvable:$true] %s551
          %554 = dma.hbm_to_vmem [thread:$0]  %s550, 16, %s552, [#allocation6]
        $region20: #{_lambda_.1} parent=11 // pred_fallthru
          _
        // Predicated region
        $region21: #{_lambda_.1} parent=11 // pred_check
          %p555 = pneg %p205
        $region22: #{_lambda_.1} parent=11 // pred_check_branch
          %557 = sbr.rel (%p555) target = $region24
        $region23: #{_lambda_.1} parent=11 // pred_region
          %559 = vsyncadd [#allocation6], 0
          %s560 = sshll.u32 %s6, 4
          %s561 = int_to_ptr.hbm [resolvable:$true] %s560
          %s562 = sshll.u32 [#allocation7], 4
          %s563 = int_to_ptr.vmem [resolvable:$true] %s562
          %568 = dma.hbm_to_vmem [thread:$0]  %s561, 256, %s563, [#allocation6], 64, 64, 4
        $region24: #{_lambda_.1} parent=11 // pred_fallthru
          _
        // Predicated region
        $region25: #{_lambda_.1} parent=11 // pred_check
          %p569 = pneg %p226
        $region26: #{_lambda_.1} parent=11 // pred_check_branch
          %571 = sbr.rel (%p569) target = $region28
        $region27: #{_lambda_.1} parent=11 // pred_region
          _
        $region28: #{_lambda_.1} parent=11 // pred_fallthru
          _
        // Predicated region
        $region29: #{_lambda_.1} parent=11 // pred_check
          %p572 = pneg %p247
        $region30: #{_lambda_.1} parent=11 // pred_check_branch
          %574 = sbr.rel (%p572) target = $region32
        $region31: #{_lambda_.1} parent=11 // pred_region
          %576 = vsyncadd [#allocation9], 0
          %s577 = sshll.u32 %s8, 4
          %s578 = int_to_ptr.hbm [resolvable:$true] %s577
          %s579 = sshll.u32 [#allocation8], 4
          %s580 = int_to_ptr.vmem [resolvable:$true] %s579
          %585 = dma.hbm_to_vmem [thread:$0]  %s578, 256, %s580, [#allocation9], 64, 64, 4
        $region32: #{_lambda_.1} parent=11 // pred_fallthru
          _
        // Predicated region
        $region33: #{_lambda_.1} parent=11 // pred_check
          %p586 = pneg %p268
        $region34: #{_lambda_.1} parent=11 // pred_check_branch
          %588 = sbr.rel (%p586) target = $region36
        $region35: #{_lambda_.1} parent=11 // pred_region
          _
        $region36: #{_lambda_.1} parent=11 // pred_fallthru
          _
        // Predicated region
        $region37: #{_lambda_.1} parent=11 // pred_check
          %p589 = pneg %p289
        $region38: #{_lambda_.1} parent=11 // pred_check_branch
          %591 = sbr.rel (%p589) target = $region40
        $region39: #{_lambda_.1} parent=11 // pred_region
          %593 = vsyncadd [#allocation9], 0
          %s594 = sshll.u32 %s10, 4
          %s595 = int_to_ptr.hbm [resolvable:$true] %s594
          %s596 = sshll.u32 [#allocation10], 4
          %s597 = int_to_ptr.vmem [resolvable:$true] %s596
          %602 = dma.hbm_to_vmem [thread:$0]  %s595, 512, %s597, [#allocation9], 64, 64, 4
        $region40: #{_lambda_.1} parent=11 // pred_fallthru
          _
        // Predicated region
        $region41: #{_lambda_.1} parent=11 // pred_check
          %p603 = pneg %p310
        $region42: #{_lambda_.1} parent=11 // pred_check_branch
          %605 = sbr.rel (%p603) target = $region44
        $region43: #{_lambda_.1} parent=11 // pred_region
          _
        $region44: #{_lambda_.1} parent=11 // pred_fallthru
          _
        // Predicated region
        $region45: #{_lambda_.1} parent=11 // pred_check
          %p606 = pneg %p331
        $region46: #{_lambda_.1} parent=11 // pred_check_branch
          %608 = sbr.rel (%p606) target = $region48
        $region47: #{_lambda_.1} parent=11 // pred_region
          %610 = vsyncadd [#allocation12], 0
          %s611 = sshll.u32 %s12, 4
          %s612 = int_to_ptr.hbm [resolvable:$true] %s611
          %s613 = sshll.u32 [#allocation11], 4
          %s614 = int_to_ptr.vmem [resolvable:$true] %s613
          %619 = dma.hbm_to_vmem [thread:$0]  %s612, 256, %s614, [#allocation12], 64, 64, 4
        $region48: #{_lambda_.1} parent=11 // pred_fallthru
          _
        // Predicated region
        $region49: #{_lambda_.1} parent=11 // pred_check
          %p620 = pneg %p352
        $region50: #{_lambda_.1} parent=11 // pred_check_branch
          %622 = sbr.rel (%p620) target = $region52
        $region51: #{_lambda_.1} parent=11 // pred_region
          _
        $region52: #{_lambda_.1} parent=11 // pred_fallthru
          _
        // Predicated region
        $region53: #{_lambda_.1} parent=11 // pred_check
          %p623 = pneg %p373
        $region54: #{_lambda_.1} parent=11 // pred_check_branch
          %625 = sbr.rel (%p623) target = $region56
        $region55: #{_lambda_.1} parent=11 // pred_region
          %627 = vsyncadd [#allocation12], 0
          %s628 = sshll.u32 %s14, 4
          %s629 = int_to_ptr.hbm [resolvable:$true] %s628
          %s630 = sshll.u32 [#allocation13], 4
          %s631 = int_to_ptr.vmem [resolvable:$true] %s630
          %636 = dma.hbm_to_vmem [thread:$0]  %s629, 256, %s631, [#allocation12], 64, 64, 4
        $region56: #{_lambda_.1} parent=11 // pred_fallthru
          _
        // Predicated region
        $region57: #{_lambda_.1} parent=11 // pred_check
          %p637 = pneg %p394
        $region58: #{_lambda_.1} parent=11 // pred_check_branch
          %639 = sbr.rel (%p637) target = $region60
        $region59: #{_lambda_.1} parent=11 // pred_region
          _
        $region60: #{_lambda_.1} parent=11 // pred_fallthru
          _
        // Predicated region
        $region61: #{_lambda_.1} parent=11 // pred_check
          %p640 = pneg %p415
        $region62: #{_lambda_.1} parent=11 // pred_check_branch
          %642 = sbr.rel (%p640) target = $region64
        $region63: #{_lambda_.1} parent=11 // pred_region
          %644 = vsyncadd [#allocation15], 0
          %s645 = sshll.u32 %s16, 4
          %s646 = int_to_ptr.hbm [resolvable:$true] %s645
          %s647 = sshll.u32 [#allocation14], 4
          %s648 = int_to_ptr.vmem [resolvable:$true] %s647
          %653 = dma.hbm_to_vmem [thread:$0]  %s646, 512, %s648, [#allocation15], 64, 64, 4
        $region64: #{_lambda_.1} parent=11 // pred_fallthru
          _
        // Predicated region
        $region65: #{_lambda_.1} parent=11 // pred_check
          %p654 = pneg %p436
        $region66: #{_lambda_.1} parent=11 // pred_check_branch
          %656 = sbr.rel (%p654) target = $region68
        $region67: #{_lambda_.1} parent=11 // pred_region
          _
        $region68: #{_lambda_.1} parent=11 // pred_fallthru
          _
      $region12: #{_lambda_.1} parent=5 // pred_fallthru
        _
      %p657 = scmp.lt.s32.totalorder %s38, 2
      // Predicated region
      $region69: #{_lambda_.1} parent=5 // pred_check
        %p658 = pneg %p657
      $region70: #{_lambda_.1} parent=5 // pred_check_branch
        %660 = sbr.rel (%p658) target = $region72
      $region71: #{_lambda_.1} parent=5 // pred_region
        // Predicated region
        $region73: #{_lambda_.1} parent=71 // pred_check
          %p661 = pneg %p58
        $region74: #{_lambda_.1} parent=71 // pred_check_branch
          %663 = sbr.rel (%p661) target = $region76
        $region75: #{_lambda_.1} parent=71 // pred_region
          %p664 = scmp.lt.s32.totalorder %s38, 1
          %s665 = scalar_select %p664, %s38, 1
          %s666 = smul.addr %s665, 8
          %s667 = scalar_lea.vmem %s0, %s666
        $region76: #{_lambda_.1} parent=71 // pred_fallthru
          _
        // Predicated region
        $region77: #{_lambda_.1} parent=71 // pred_check
          %p668 = pneg %p84
        $region78: #{_lambda_.1} parent=71 // pred_check_branch
          %670 = sbr.rel (%p668) target = $region80
        $region79: #{_lambda_.1} parent=71 // pred_region
          %p671 = scmp.lt.s32.totalorder %s38, 1
          %s672 = scalar_select %p671, %s38, 1
          %s673 = smul.addr %s672, 2
          %s674 = smul.addr %s673, 8
          %s675 = scalar_lea.vmem %s1, %s674
        $region80: #{_lambda_.1} parent=71 // pred_fallthru
          _
        // Predicated region
        $region81: #{_lambda_.1} parent=71 // pred_check
          %p676 = pneg %p110
        $region82: #{_lambda_.1} parent=71 // pred_check_branch
          %678 = sbr.rel (%p676) target = $region84
        $region83: #{_lambda_.1} parent=71 // pred_region
          %p679 = scmp.lt.s32.totalorder %s38, 1
          %s680 = scalar_select %p679, %s38, 1
          %s681 = smul.addr %s680, 8
          %s682 = scalar_lea.vmem %s2, %s681
        $region84: #{_lambda_.1} parent=71 // pred_fallthru
          _
        // Predicated region
        $region85: #{_lambda_.1} parent=71 // pred_check
          %p683 = pneg %p136
        $region86: #{_lambda_.1} parent=71 // pred_check_branch
          %685 = sbr.rel (%p683) target = $region88
        $region87: #{_lambda_.1} parent=71 // pred_region
          %p686 = scmp.lt.s32.totalorder %s38, 1
          %s687 = scalar_select %p686, %s38, 1
          %s688 = smul.addr %s687, 8
          %s689 = scalar_lea.vmem %s3, %s688
        $region88: #{_lambda_.1} parent=71 // pred_fallthru
          _
      $region72: #{_lambda_.1} parent=5 // pred_fallthru
        _
      %p690 = scmp.le.s32.totalorder 1, %s38
      %p691 = scmp.lt.s32.totalorder %s38, 3
      %p692 = pnand %p690, %p691
      %p693 = pneg %p692
      // Predicated region
      $region89: #{_lambda_.1} parent=5 // pred_check
        _
      $region90: #{_lambda_.1} parent=5 // pred_check_branch
        %695 = sbr.rel (%p692) target = $region92
      $region91: #{_lambda_.1} parent=5 // pred_region
        %s696 = ssub.s32 %s38, 1
        // Predicated region
        $region93: #{_lambda_.1} parent=91 // pred_check
          %p697 = pneg %p163
        $region94: #{_lambda_.1} parent=91 // pred_check_branch
          %699 = sbr.rel (%p697) target = $region96
        $region95: #{_lambda_.1} parent=91 // pred_region
          %701 = dma.done [#allocation3], 256
        $region96: #{_lambda_.1} parent=91 // pred_fallthru
          _
        // Predicated region
        $region97: #{_lambda_.1} parent=91 // pred_check
          %p702 = pneg %p184
        $region98: #{_lambda_.1} parent=91 // pred_check_branch
          %704 = sbr.rel (%p702) target = $region100
        $region99: #{_lambda_.1} parent=91 // pred_region
          %706 = dma.done [#allocation6], 16
        $region100: #{_lambda_.1} parent=91 // pred_fallthru
          _
        // Predicated region
        $region101: #{_lambda_.1} parent=91 // pred_check
          %p707 = pneg %p205
        $region102: #{_lambda_.1} parent=91 // pred_check_branch
          %709 = sbr.rel (%p707) target = $region104
        $region103: #{_lambda_.1} parent=91 // pred_region
          %711 = dma.done [#allocation6], 256
        $region104: #{_lambda_.1} parent=91 // pred_fallthru
          _
        // Predicated region
        $region105: #{_lambda_.1} parent=91 // pred_check
          %p712 = pneg %p247
        $region106: #{_lambda_.1} parent=91 // pred_check_branch
          %714 = sbr.rel (%p712) target = $region108
        $region107: #{_lambda_.1} parent=91 // pred_region
          %716 = dma.done [#allocation9], 256
        $region108: #{_lambda_.1} parent=91 // pred_fallthru
          _
        // Predicated region
        $region109: #{_lambda_.1} parent=91 // pred_check
          %p717 = pneg %p289
        $region110: #{_lambda_.1} parent=91 // pred_check_branch
          %719 = sbr.rel (%p717) target = $region112
        $region111: #{_lambda_.1} parent=91 // pred_region
          %721 = dma.done [#allocation9], 512
        $region112: #{_lambda_.1} parent=91 // pred_fallthru
          _
        // Predicated region
        $region113: #{_lambda_.1} parent=91 // pred_check
          %p722 = pneg %p331
        $region114: #{_lambda_.1} parent=91 // pred_check_branch
          %724 = sbr.rel (%p722) target = $region116
        $region115: #{_lambda_.1} parent=91 // pred_region
          %726 = dma.done [#allocation12], 256
        $region116: #{_lambda_.1} parent=91 // pred_fallthru
          _
        // Predicated region
        $region117: #{_lambda_.1} parent=91 // pred_check
          %p727 = pneg %p373
        $region118: #{_lambda_.1} parent=91 // pred_check_branch
          %729 = sbr.rel (%p727) target = $region120
        $region119: #{_lambda_.1} parent=91 // pred_region
          %731 = dma.done [#allocation12], 256
        $region120: #{_lambda_.1} parent=91 // pred_fallthru
          _
        // Predicated region
        $region121: #{_lambda_.1} parent=91 // pred_check
          %p732 = pneg %p415
        $region122: #{_lambda_.1} parent=91 // pred_check_branch
          %734 = sbr.rel (%p732) target = $region124
        $region123: #{_lambda_.1} parent=91 // pred_region
          %736 = dma.done [#allocation15], 512
        $region124: #{_lambda_.1} parent=91 // pred_fallthru
          _
        %p737 = scmp.lt.s32.totalorder %s43, 1
        %s738 = scalar_select %p737, %s43, 1
        %s739 = smul.addr %s738, 8
        %s740 = scalar_lea.vmem %s0, %s739
        %p741 = pneg %p64
        %p742 = pneg %p61
        %p743 = scmp.lt.s32.totalorder %s43, 1
        %s744 = scalar_select %p743, %s43, 1
        %s745 = smul.addr %s744, 2
        %s746 = smul.addr %s745, 8
        %s747 = scalar_lea.vmem %s1, %s746
        %p748 = pneg %p90
        %p749 = pneg %p87
        %p750 = scmp.lt.s32.totalorder %s43, 1
        %s751 = scalar_select %p750, %s43, 1
        %s752 = smul.addr %s751, 8
        %s753 = scalar_lea.vmem %s2, %s752
        %p754 = pneg %p116
        %p755 = pneg %p113
        %p756 = scmp.lt.s32.totalorder %s43, 1
        %s757 = scalar_select %p756, %s43, 1
        %s758 = smul.addr %s757, 8
        %s759 = scalar_lea.vmem %s3, %s758
        %p760 = pneg %p142
        %p761 = pneg %p139
        %p762 = pneg %p163
        %p763 = pneg %p160
        %p764 = pneg %p184
        %p765 = pneg %p181
        %p766 = pneg %p205
        %p767 = pneg %p202
        %p768 = pneg %p226
        %p769 = pneg %p223
        %p770 = pneg %p247
        %p771 = pneg %p244
        %p772 = pneg %p268
        %p773 = pneg %p265
        %p774 = pneg %p289
        %p775 = pneg %p286
        %p776 = pneg %p310
        %p777 = pneg %p307
        %p778 = pneg %p331
        %p779 = pneg %p328
        %p780 = pneg %p352
        %p781 = pneg %p349
        %p782 = pneg %p373
        %p783 = pneg %p370
        %p784 = pneg %p394
        %p785 = pneg %p391
        %p786 = pneg %p415
        %p787 = pneg %p412
        %p788 = pneg %p436
        %p789 = pneg %p433
        %p790 = pneg %p462
        %p791 = pneg %p459
        %s792 = sand.u32 %s449, 1
        %s793 = scalar_lea.sflag [#allocation4], %s792
        %s794 = sand.u32 %s449, 1
        %s795 = smul.addr %s794, 8
        %s796 = scalar_lea.vmem [#allocation16], %s795
        %p797 = pneg %p488
        %p798 = pneg %p485
        %s799 = sand.u32 %s43, 1
        %s800 = scalar_lea.sflag [#allocation18], %s799
        %s801 = sand.u32 %s475, 1
        %s802 = smul.addr %s801, 32
        %s803 = scalar_lea.vmem [#allocation17], %s802
        %p804 = pneg %p514
        %p805 = pneg %p511
        %s806 = sand.u32 %s43, 1
        %s807 = scalar_lea.sflag [#allocation18], %s806
        %s808 = sand.u32 %s501, 1
        %s809 = smul.addr %s808, 32
        %s810 = scalar_lea.vmem [#allocation19], %s809
        %p811 = scmp.lt.s32.totalorder %s43, 1
        %s812 = scalar_select %p811, %s43, 1
        %s813 = smul.addr %s812, 8
        %s814 = scalar_lea.vmem %s0, %s813
        %p815 = scmp.lt.s32.totalorder %s43, 1
        %s816 = scalar_select %p815, %s43, 1
        %s817 = smul.addr %s816, 2
        %s818 = smul.addr %s817, 8
        %s819 = scalar_lea.vmem %s1, %s818
        %p820 = scmp.lt.s32.totalorder %s43, 1
        %s821 = scalar_select %p820, %s43, 1
        %s822 = smul.addr %s821, 8
        %s823 = scalar_lea.vmem %s2, %s822
        %p824 = scmp.lt.s32.totalorder %s43, 1
        %s825 = scalar_select %p824, %s43, 1
        %s826 = smul.addr %s825, 8
        %s827 = scalar_lea.vmem %s3, %s826
        %v829 = vld [vmem:[%s814] sm:$0xff]
        %v830 = vld [vmem:[%s819] sm:$0xff]
        %v831 = vld [vmem:[%s819 + $0x8] sm:$0xff]
        %v832 = vld [vmem:[%s823] sm:$0xff]
        %v833 = vld [vmem:[%s827] sm:$0xff]
        %v834 = vpack.c.bf16 %v829, %v829
        %v835 = vld [vmem:[#allocation2] sm:$0xf]
        %v836 = vld [vmem:[#allocation2 + $0x4] sm:$0xf]
        %v837 = vld [vmem:[#allocation2 + $0x8] sm:$0xf]
        %v838 = vld [vmem:[#allocation2 + $0xc] sm:$0xf]
        %v839 = vld [vmem:[#allocation5] sm:$0x1]
        %v841 = vperm.slane %v839, 0
        %v847 = vunpack.c.l.b16 %v835
        %v848 = vunpack.c.l.b16 %v836
        %v849 = vunpack.c.l.b16 %v837
        %v850 = vunpack.c.l.b16 %v838
        %v851 = vpack.c.b16 %v848, %v847
        %v852 = vpack.c.b16 %v850, %v849
        %vm855 = vcmask 261120
        %v857 = vsel %vm855, %v834, 0
        %859 = vmatpush.bf16.msra.mxu0 0
        %860 = vmatpush.bf16.msra.mxu0 0
        %861 = vmatpush.bf16.msra.mxu0 0
        %862 = vmatpush.bf16.msra.mxu0 0
        %863 = vmatpush.bf16.msra.mxu0 0
        %864 = vmatpush.bf16.msra.mxu0 0
        %865 = vmatpush.bf16.msra.mxu0 %v852
        %866 = vmatpush.bf16.msra.mxu0 %v851
        %867 = vmatmul.bf16.gmra.mxu0 %v857
        %v868 = vpop.f32.mrf.mxu0
        %v869 = vadd.f32 %v841, %v868
        %v870 = vpop.f32.mrf.mxu0
        %871 = vdwg.mxu0
        %v872 = vpack.c.bf16 %v869, %v869
        %874 = vrot.lane.b32.xlu0 %v872, 120
        %v875 = vpop.permute.xlu0 %874
        %876 = vrot.lane.b32.xlu0 %v872, 112
        %v877 = vpop.permute.xlu0 %876
        %878 = vrot.lane.b32.xlu0 %v872, 104
        %v879 = vpop.permute.xlu0 %878
        %v882 = vpack.i.b16 %v875, %v872
        %v883 = vshrl.u32 %v872, 16
        %v884 = vshrl.u32 %v875, 16
        %v885 = vpack.i.b16 %v884, %v883
        %v888 = vpack.i.b16 %v879, %v877
        %v889 = vshrl.u32 %v877, 16
        %v890 = vshrl.u32 %v879, 16
        %v891 = vpack.i.b16 %v890, %v889
        %v894 = vunpack.c.l.s4 1983009808
        %v895 = vunpack.c.0.s8 %v894
        %v896 = vperm.slane %v882, %v895
        %v899 = vunpack.c.l.s4 1983009808
        %v900 = vunpack.c.0.s8 %v899
        %v901 = vperm.slane %v888, %v900
        %v902 = vrot.slane %v901, 4
        %vm903 = vcmask 1047556
        %v904 = vsel %vm903, %v902, %v896
        %v905 = vrot.slane %v896, 4
        %v906 = vsel %vm903, %v901, %v905
        %v908 = vunpack.c.l.s4 1934713408
        %v909 = vunpack.c.0.s8 %v908
        %v910 = vperm.slane %v904, %v909
        %v912 = vunpack.c.l.s4 1934713408
        %v913 = vunpack.c.0.s8 %v912
        %v914 = vperm.slane %v906, %v913
        %v915 = vrot.slane %v910, 4
        %v916 = vsel %vm903, 0, %v915
        %v917 = vrot.slane %v914, 4
        %v918 = vsel %vm903, 0, %v917
        %v921 = vunpack.c.l.s4 1983009808
        %v922 = vunpack.c.0.s8 %v921
        %v923 = vperm.slane %v885, %v922
        %v926 = vunpack.c.l.s4 1983009808
        %v927 = vunpack.c.0.s8 %v926
        %v928 = vperm.slane %v891, %v927
        %v929 = vrot.slane %v928, 4
        %v930 = vsel %vm903, %v929, %v923
        %v931 = vrot.slane %v923, 4
        %v932 = vsel %vm903, %v928, %v931
        %v934 = vunpack.c.l.s4 1934713408
        %v935 = vunpack.c.0.s8 %v934
        %v936 = vperm.slane %v930, %v935
        %v938 = vunpack.c.l.s4 1934713408
        %v939 = vunpack.c.0.s8 %v938
        %v940 = vperm.slane %v932, %v939
        %v941 = vrot.slane %v936, 4
        %v942 = vsel %vm903, 0, %v941
        %v943 = vrot.slane %v940, 4
        %v944 = vsel %vm903, 0, %v943
        %v945 = vsel %vm903, %v917, %v910
        %v947 = vunpack.c.l.s4 1983009808
        %v948 = vunpack.c.0.s8 %v947
        %v949 = vperm.slane %v945, %v948
        %v950 = vrot.slane %v918, 4
        %v951 = vsel %vm903, %v950, %v916
        %v953 = vunpack.c.l.s4 1983009808
        %v954 = vunpack.c.0.s8 %v953
        %v955 = vperm.slane %v951, %v954
        %v956 = vrot.slane %v955, 4
        %v957 = vsel %vm903, %v956, %v949
        %v959 = vunpack.c.l.s4 1934713408
        %v960 = vunpack.c.0.s8 %v959
        %v961 = vperm.slane %v957, %v960
        %v962 = vrot.slane %v961, 4
        %v963 = vsel %vm903, 0, %v962
        %v964 = vsel %vm903, %v943, %v936
        %v966 = vunpack.c.l.s4 1983009808
        %v967 = vunpack.c.0.s8 %v966
        %v968 = vperm.slane %v964, %v967
        %v969 = vrot.slane %v944, 4
        %v970 = vsel %vm903, %v969, %v942
        %v972 = vunpack.c.l.s4 1983009808
        %v973 = vunpack.c.0.s8 %v972
        %v974 = vperm.slane %v970, %v973
        %v975 = vrot.slane %v974, 4
        %v976 = vsel %vm903, %v975, %v968
        %v978 = vunpack.c.l.s4 1934713408
        %v979 = vunpack.c.0.s8 %v978
        %v980 = vperm.slane %v976, %v979
        %v981 = vrot.slane %v980, 4
        %v982 = vsel %vm903, 0, %v981
        %v985 = vpack.i.b16 %v980, %v961
        %v986 = vshrl.u32 %v961, 16
        %v987 = vshrl.u32 %v980, 16
        %v988 = vpack.i.b16 %v987, %v986
        %v991 = vpack.i.b16 %v982, %v963
        %v992 = vshrl.u32 %v963, 16
        %v993 = vshrl.u32 %v982, 16
        %v994 = vpack.i.b16 %v993, %v992
        %995 = vrot.lane.b32.xlu0 %v872, 96
        %v996 = vpop.permute.xlu0 %995
        %997 = vrot.lane.b32.xlu0 %v875, 96
        %v998 = vpop.permute.xlu0 %997
        %999 = vrot.lane.b32.xlu0 %v877, 96
        %v1000 = vpop.permute.xlu0 %999
        %1001 = vrot.lane.b32.xlu0 %v879, 96
        %v1002 = vpop.permute.xlu0 %1001
        %v1005 = vpack.i.b16 %v998, %v996
        %v1006 = vshrl.u32 %v996, 16
        %v1007 = vshrl.u32 %v998, 16
        %v1008 = vpack.i.b16 %v1007, %v1006
        %v1011 = vpack.i.b16 %v1002, %v1000
        %v1012 = vshrl.u32 %v1000, 16
        %v1013 = vshrl.u32 %v1002, 16
        %v1014 = vpack.i.b16 %v1013, %v1012
        %v1017 = vunpack.c.l.s4 1983009808
        %v1018 = vunpack.c.0.s8 %v1017
        %v1019 = vperm.slane %v1005, %v1018
        %v1022 = vunpack.c.l.s4 1983009808
        %v1023 = vunpack.c.0.s8 %v1022
        %v1024 = vperm.slane %v1011, %v1023
        %v1025 = vrot.slane %v1024, 4
        %v1026 = vsel %vm903, %v1025, %v1019
        %v1027 = vrot.slane %v1019, 4
        %v1028 = vsel %vm903, %v1024, %v1027
        %v1030 = vunpack.c.l.s4 1934713408
        %v1031 = vunpack.c.0.s8 %v1030
        %v1032 = vperm.slane %v1026, %v1031
        %v1034 = vunpack.c.l.s4 1934713408
        %v1035 = vunpack.c.0.s8 %v1034
        %v1036 = vperm.slane %v1028, %v1035
        %v1037 = vrot.slane %v1032, 4
        %v1038 = vsel %vm903, 0, %v1037
        %v1039 = vrot.slane %v1036, 4
        %v1040 = vsel %vm903, 0, %v1039
        %v1043 = vunpack.c.l.s4 1983009808
        %v1044 = vunpack.c.0.s8 %v1043
        %v1045 = vperm.slane %v1008, %v1044
        %v1048 = vunpack.c.l.s4 1983009808
        %v1049 = vunpack.c.0.s8 %v1048
        %v1050 = vperm.slane %v1014, %v1049
        %v1051 = vrot.slane %v1050, 4
        %v1052 = vsel %vm903, %v1051, %v1045
        %v1053 = vrot.slane %v1045, 4
        %v1054 = vsel %vm903, %v1050, %v1053
        %v1056 = vunpack.c.l.s4 1934713408
        %v1057 = vunpack.c.0.s8 %v1056
        %v1058 = vperm.slane %v1052, %v1057
        %v1060 = vunpack.c.l.s4 1934713408
        %v1061 = vunpack.c.0.s8 %v1060
        %v1062 = vperm.slane %v1054, %v1061
        %v1063 = vrot.slane %v1058, 4
        %v1064 = vsel %vm903, 0, %v1063
        %v1065 = vrot.slane %v1062, 4
        %v1066 = vsel %vm903, 0, %v1065
        %v1067 = vsel %vm903, %v1039, %v1032
        %v1069 = vunpack.c.l.s4 1983009808
        %v1070 = vunpack.c.0.s8 %v1069
        %v1071 = vperm.slane %v1067, %v1070
        %v1072 = vrot.slane %v1040, 4
        %v1073 = vsel %vm903, %v1072, %v1038
        %v1075 = vunpack.c.l.s4 1983009808
        %v1076 = vunpack.c.0.s8 %v1075
        %v1077 = vperm.slane %v1073, %v1076
        %v1078 = vrot.slane %v1077, 4
        %v1079 = vsel %vm903, %v1078, %v1071
        %v1081 = vunpack.c.l.s4 1934713408
        %v1082 = vunpack.c.0.s8 %v1081
        %v1083 = vperm.slane %v1079, %v1082
        %v1084 = vrot.slane %v1083, 4
        %v1085 = vsel %vm903, 0, %v1084
        %v1086 = vsel %vm903, %v1065, %v1058
        %v1088 = vunpack.c.l.s4 1983009808
        %v1089 = vunpack.c.0.s8 %v1088
        %v1090 = vperm.slane %v1086, %v1089
        %v1091 = vrot.slane %v1066, 4
        %v1092 = vsel %vm903, %v1091, %v1064
        %v1094 = vunpack.c.l.s4 1983009808
        %v1095 = vunpack.c.0.s8 %v1094
        %v1096 = vperm.slane %v1092, %v1095
        %v1097 = vrot.slane %v1096, 4
        %v1098 = vsel %vm903, %v1097, %v1090
        %v1100 = vunpack.c.l.s4 1934713408
        %v1101 = vunpack.c.0.s8 %v1100
        %v1102 = vperm.slane %v1098, %v1101
        %v1103 = vrot.slane %v1102, 4
        %v1104 = vsel %vm903, 0, %v1103
        %v1107 = vpack.i.b16 %v1102, %v1083
        %v1108 = vshrl.u32 %v1083, 16
        %v1109 = vshrl.u32 %v1102, 16
        %v1110 = vpack.i.b16 %v1109, %v1108
        %v1113 = vpack.i.b16 %v1104, %v1085
        %v1114 = vshrl.u32 %v1085, 16
        %v1115 = vshrl.u32 %v1104, 16
        %v1116 = vpack.i.b16 %v1115, %v1114
        %1117 = vrot.lane.b32.xlu0 %v872, 64
        %v1118 = vpop.permute.xlu0 %1117
        %1119 = vrot.lane.b32.xlu0 %v875, 64
        %v1120 = vpop.permute.xlu0 %1119
        %1121 = vrot.lane.b32.xlu0 %v877, 64
        %v1122 = vpop.permute.xlu0 %1121
        %1123 = vrot.lane.b32.xlu0 %v879, 64
        %v1124 = vpop.permute.xlu0 %1123
        %v1127 = vpack.i.b16 %v1120, %v1118
        %v1128 = vshrl.u32 %v1118, 16
        %v1129 = vshrl.u32 %v1120, 16
        %v1130 = vpack.i.b16 %v1129, %v1128
        %v1133 = vpack.i.b16 %v1124, %v1122
        %v1134 = vshrl.u32 %v1122, 16
        %v1135 = vshrl.u32 %v1124, 16
        %v1136 = vpack.i.b16 %v1135, %v1134
        %v1139 = vunpack.c.l.s4 1983009808
        %v1140 = vunpack.c.0.s8 %v1139
        %v1141 = vperm.slane %v1127, %v1140
        %v1144 = vunpack.c.l.s4 1983009808
        %v1145 = vunpack.c.0.s8 %v1144
        %v1146 = vperm.slane %v1133, %v1145
        %v1147 = vrot.slane %v1146, 4
        %v1148 = vsel %vm903, %v1147, %v1141
        %v1149 = vrot.slane %v1141, 4
        %v1150 = vsel %vm903, %v1146, %v1149
        %v1152 = vunpack.c.l.s4 1934713408
        %v1153 = vunpack.c.0.s8 %v1152
        %v1154 = vperm.slane %v1148, %v1153
        %v1156 = vunpack.c.l.s4 1934713408
        %v1157 = vunpack.c.0.s8 %v1156
        %v1158 = vperm.slane %v1150, %v1157
        %v1159 = vrot.slane %v1154, 4
        %v1160 = vsel %vm903, 0, %v1159
        %v1161 = vrot.slane %v1158, 4
        %v1162 = vsel %vm903, 0, %v1161
        %v1165 = vunpack.c.l.s4 1983009808
        %v1166 = vunpack.c.0.s8 %v1165
        %v1167 = vperm.slane %v1130, %v1166
        %v1170 = vunpack.c.l.s4 1983009808
        %v1171 = vunpack.c.0.s8 %v1170
        %v1172 = vperm.slane %v1136, %v1171
        %v1173 = vrot.slane %v1172, 4
        %v1174 = vsel %vm903, %v1173, %v1167
        %v1175 = vrot.slane %v1167, 4
        %v1176 = vsel %vm903, %v1172, %v1175
        %v1178 = vunpack.c.l.s4 1934713408
        %v1179 = vunpack.c.0.s8 %v1178
        %v1180 = vperm.slane %v1174, %v1179
        %v1182 = vunpack.c.l.s4 1934713408
        %v1183 = vunpack.c.0.s8 %v1182
        %v1184 = vperm.slane %v1176, %v1183
        %v1185 = vrot.slane %v1180, 4
        %v1186 = vsel %vm903, 0, %v1185
        %v1187 = vrot.slane %v1184, 4
        %v1188 = vsel %vm903, 0, %v1187
        %v1189 = vsel %vm903, %v1161, %v1154
        %v1191 = vunpack.c.l.s4 1983009808
        %v1192 = vunpack.c.0.s8 %v1191
        %v1193 = vperm.slane %v1189, %v1192
        %v1194 = vrot.slane %v1162, 4
        %v1195 = vsel %vm903, %v1194, %v1160
        %v1197 = vunpack.c.l.s4 1983009808
        %v1198 = vunpack.c.0.s8 %v1197
        %v1199 = vperm.slane %v1195, %v1198
        %v1200 = vrot.slane %v1199, 4
        %v1201 = vsel %vm903, %v1200, %v1193
        %v1203 = vunpack.c.l.s4 1934713408
        %v1204 = vunpack.c.0.s8 %v1203
        %v1205 = vperm.slane %v1201, %v1204
        %v1206 = vrot.slane %v1205, 4
        %v1207 = vsel %vm903, 0, %v1206
        %v1208 = vsel %vm903, %v1187, %v1180
        %v1210 = vunpack.c.l.s4 1983009808
        %v1211 = vunpack.c.0.s8 %v1210
        %v1212 = vperm.slane %v1208, %v1211
        %v1213 = vrot.slane %v1188, 4
        %v1214 = vsel %vm903, %v1213, %v1186
        %v1216 = vunpack.c.l.s4 1983009808
        %v1217 = vunpack.c.0.s8 %v1216
        %v1218 = vperm.slane %v1214, %v1217
        %v1219 = vrot.slane %v1218, 4
        %v1220 = vsel %vm903, %v1219, %v1212
        %v1222 = vunpack.c.l.s4 1934713408
        %v1223 = vunpack.c.0.s8 %v1222
        %v1224 = vperm.slane %v1220, %v1223
        %v1225 = vrot.slane %v1224, 4
        %v1226 = vsel %vm903, 0, %v1225
        %v1229 = vpack.i.b16 %v1224, %v1205
        %v1230 = vshrl.u32 %v1205, 16
        %v1231 = vshrl.u32 %v1224, 16
        %v1232 = vpack.i.b16 %v1231, %v1230
        %v1235 = vpack.i.b16 %v1226, %v1207
        %v1236 = vshrl.u32 %v1207, 16
        %v1237 = vshrl.u32 %v1226, 16
        %v1238 = vpack.i.b16 %v1237, %v1236
        %vm1239 = vcmask 64512
        %v1241 = vsel %vm1239, %v985, 0
        %v1244 = vsel %vm1239, %v1107, 0
        %1246 = vmatpush.bf16.xpose.msra.mxu0 0
        %1247 = vmatpush.bf16.xpose.msra.mxu0 0
        %1248 = vmatpush.bf16.xpose.msra.mxu0 0
        %1249 = vmatpush.bf16.xpose.msra.mxu0 0
        %1250 = vmatpush.bf16.xpose.msra.mxu0 0
        %1251 = vmatpush.bf16.xpose.msra.mxu0 0
        %1252 = vmatpush.bf16.xpose.msra.mxu0 0
        %1253 = vmatpush.bf16.xpose.msra.mxu0 %v1244
        %1254 = vmatmul.bf16.gmra.mxu0 %v1241
        %v1255 = vpop.f32.mrf.mxu0
        %v1256 = vadd.f32 %v832, %v1255
        %v1257 = vpop.f32.mrf.mxu0
        %1258 = vdwg.mxu0
        %v1260 = vsel %vm1239, %v988, 0
        %v1263 = vsel %vm1239, %v1110, 0
        %1265 = vmatpush.bf16.xpose.msra.mxu0 0
        %1266 = vmatpush.bf16.xpose.msra.mxu0 0
        %1267 = vmatpush.bf16.xpose.msra.mxu0 0
        %1268 = vmatpush.bf16.xpose.msra.mxu0 0
        %1269 = vmatpush.bf16.xpose.msra.mxu0 0
        %1270 = vmatpush.bf16.xpose.msra.mxu0 0
        %1271 = vmatpush.bf16.xpose.msra.mxu0 0
        %1272 = vmatpush.bf16.xpose.msra.mxu0 %v1263
        %1273 = vmatmul.bf16.gmra.mxu0 %v1260
        %v1274 = vpop.f32.mrf.mxu0
        %v1275 = vadd.f32 %v832, %v1274
        %v1276 = vpop.f32.mrf.mxu0
        %1277 = vdwg.mxu0
        %v1279 = vsel %vm1239, %v991, 0
        %v1282 = vsel %vm1239, %v1113, 0
        %1284 = vmatpush.bf16.xpose.msra.mxu0 0
        %1285 = vmatpush.bf16.xpose.msra.mxu0 0
        %1286 = vmatpush.bf16.xpose.msra.mxu0 0
        %1287 = vmatpush.bf16.xpose.msra.mxu0 0
        %1288 = vmatpush.bf16.xpose.msra.mxu0 0
        %1289 = vmatpush.bf16.xpose.msra.mxu0 0
        %1290 = vmatpush.bf16.xpose.msra.mxu0 0
        %1291 = vmatpush.bf16.xpose.msra.mxu0 %v1282
        %1292 = vmatmul.bf16.gmra.mxu0 %v1279
        %v1293 = vpop.f32.mrf.mxu0
        %v1294 = vadd.f32 %v832, %v1293
        %v1295 = vpop.f32.mrf.mxu0
        %1296 = vdwg.mxu0
        %v1298 = vsel %vm1239, %v994, 0
        %v1301 = vsel %vm1239, %v1116, 0
        %1303 = vmatpush.bf16.xpose.msra.mxu0 0
        %1304 = vmatpush.bf16.xpose.msra.mxu0 0
        %1305 = vmatpush.bf16.xpose.msra.mxu0 0
        %1306 = vmatpush.bf16.xpose.msra.mxu0 0
        %1307 = vmatpush.bf16.xpose.msra.mxu0 0
        %1308 = vmatpush.bf16.xpose.msra.mxu0 0
        %1309 = vmatpush.bf16.xpose.msra.mxu0 0
        %1310 = vmatpush.bf16.xpose.msra.mxu0 %v1301
        %1311 = vmatmul.bf16.gmra.mxu0 %v1298
        %v1312 = vpop.f32.mrf.mxu0
        %v1313 = vadd.f32 %v832, %v1312
        %v1314 = vpop.f32.mrf.mxu0
        %1315 = vdwg.mxu0
        %v1316 = vsel %vm1239, %v1256, -inf
        %1317 = vmax.xlane.f32.xlu0 %v1316
        %v1318 = vpop.xlane.xlu0 %1317
        %v1319 = vsel %vm1239, %v1275, -inf
        %1320 = vmax.xlane.f32.xlu0 %v1319
        %v1321 = vpop.xlane.xlu0 %1320
        %v1322 = vsel %vm1239, %v1294, -inf
        %1323 = vmax.xlane.f32.xlu0 %v1322
        %v1324 = vpop.xlane.xlu0 %1323
        %v1325 = vsel %vm1239, %v1313, -inf
        %1326 = vmax.xlane.f32.xlu0 %v1325
        %v1327 = vpop.xlane.xlu0 %1326
        %v1328 = vsub.f32 %v1256, %v1318
        %v1329 = vsub.f32 %v1275, %v1321
        %v1330 = vsub.f32 %v1294, %v1324
        %v1331 = vsub.f32 %v1313, %v1327
        %v1332 = vmul.f32 %v1328, 1.442695
        %v1333 = vpow.pop %v1332
        %v1334 = vmul.f32 %v1329, 1.442695
        %v1335 = vpow.pop %v1334
        %v1336 = vmul.f32 %v1330, 1.442695
        %v1337 = vpow.pop %v1336
        %v1338 = vmul.f32 %v1331, 1.442695
        %v1339 = vpow.pop %v1338
        %v1340 = vsel %vm1239, %v1333, 0.0
        %1341 = vadd.xlane.f32.xlu0 %v1340
        %v1342 = vpop.xlane.xlu0 %1341
        %v1343 = vsel %vm1239, %v1335, 0.0
        %1344 = vadd.xlane.f32.xlu0 %v1343
        %v1345 = vpop.xlane.xlu0 %1344
        %v1346 = vsel %vm1239, %v1337, 0.0
        %1347 = vadd.xlane.f32.xlu0 %v1346
        %v1348 = vpop.xlane.xlu0 %1347
        %v1349 = vsel %vm1239, %v1339, 0.0
        %1350 = vadd.xlane.f32.xlu0 %v1349
        %v1351 = vpop.xlane.xlu0 %1350
        %v1352 = vrcp.pop %v1342
        %v1353 = vmul.f32 %v1342, %v1352
        %v1354 = vsub.f32 1.0, %v1353
        %v1355 = vmul.f32 %v1352, %v1354
        %v1356 = vadd.f32 %v1352, %v1355
        %vm1357 = vweird.f32 %v1342
        %vm1358 = vweird.f32 %v1352
        %vm1359 = vmor %vm1357, %vm1358
        %v1360 = vsel %vm1359, %v1352, %v1356
        %v1361 = vand.u32 2147483647, %v1342
        %vm1362 = vcmp.eq.f32.partialorder %v1361, 8.507059e+37
        %v1363 = vand.u32 %v1342, 2147483648
        %v1364 = vor.u32 1.1754944e-38, %v1363
        %v1365 = vsel %vm1362, %v1364, %v1360
        %v1366 = vrcp.pop %v1345
        %v1367 = vmul.f32 %v1345, %v1366
        %v1368 = vsub.f32 1.0, %v1367
        %v1369 = vmul.f32 %v1366, %v1368
        %v1370 = vadd.f32 %v1366, %v1369
        %vm1371 = vweird.f32 %v1345
        %vm1372 = vweird.f32 %v1366
        %vm1373 = vmor %vm1371, %vm1372
        %v1374 = vsel %vm1373, %v1366, %v1370
        %v1375 = vand.u32 2147483647, %v1345
        %vm1376 = vcmp.eq.f32.partialorder %v1375, 8.507059e+37
        %v1377 = vand.u32 %v1345, 2147483648
        %v1378 = vor.u32 1.1754944e-38, %v1377
        %v1379 = vsel %vm1376, %v1378, %v1374
        %v1380 = vrcp.pop %v1348
        %v1381 = vmul.f32 %v1348, %v1380
        %v1382 = vsub.f32 1.0, %v1381
        %v1383 = vmul.f32 %v1380, %v1382
        %v1384 = vadd.f32 %v1380, %v1383
        %vm1385 = vweird.f32 %v1348
        %vm1386 = vweird.f32 %v1380
        %vm1387 = vmor %vm1385, %vm1386
        %v1388 = vsel %vm1387, %v1380, %v1384
        %v1389 = vand.u32 2147483647, %v1348
        %vm1390 = vcmp.eq.f32.partialorder %v1389, 8.507059e+37
        %v1391 = vand.u32 %v1348, 2147483648
        %v1392 = vor.u32 1.1754944e-38, %v1391
        %v1393 = vsel %vm1390, %v1392, %v1388
        %v1394 = vrcp.pop %v1351
        %v1395 = vmul.f32 %v1351, %v1394
        %v1396 = vsub.f32 1.0, %v1395
        %v1397 = vmul.f32 %v1394, %v1396
        %v1398 = vadd.f32 %v1394, %v1397
        %vm1399 = vweird.f32 %v1351
        %vm1400 = vweird.f32 %v1394
        %vm1401 = vmor %vm1399, %vm1400
        %v1402 = vsel %vm1401, %v1394, %v1398
        %v1403 = vand.u32 2147483647, %v1351
        %vm1404 = vcmp.eq.f32.partialorder %v1403, 8.507059e+37
        %v1405 = vand.u32 %v1351, 2147483648
        %v1406 = vor.u32 1.1754944e-38, %v1405
        %v1407 = vsel %vm1404, %v1406, %v1402
        %v1408 = vmul.f32 %v1333, %v1365
        %v1409 = vmul.f32 %v1335, %v1379
        %v1410 = vmul.f32 %v1337, %v1393
        %v1411 = vmul.f32 %v1339, %v1407
        %v1412 = vpack.c.bf16 %v1408, %v1408
        %v1413 = vpack.c.bf16 %v1409, %v1409
        %v1414 = vpack.c.bf16 %v1410, %v1410
        %v1415 = vpack.c.bf16 %v1411, %v1411
        %v1417 = vsel %vm1239, %v1412, 0
        %vm1419 = vcmask 1043456
        %v1421 = vsel %vm1419, %v1229, 0
        %1423 = vmatpush.bf16.msra.mxu0 0
        %1424 = vmatpush.bf16.msra.mxu0 0
        %1425 = vmatpush.bf16.msra.mxu0 0
        %1426 = vmatpush.bf16.msra.mxu0 0
        %1427 = vmatpush.bf16.msra.mxu0 0
        %1428 = vmatpush.bf16.msra.mxu0 0
        %1429 = vmatpush.bf16.msra.mxu0 0
        %1430 = vmatpush.bf16.msra.mxu0 %v1421
        %1431 = vmatmul.bf16.gmra.mxu0 %v1417
        %v1432 = vpop.f32.mrf.mxu0
        %v1433 = vadd.f32 0.0, %v1432
        %v1434 = vpop.f32.mrf.mxu0
        %1435 = vdwg.mxu0
        %v1437 = vsel %vm1239, %v1413, 0
        %v1440 = vsel %vm1419, %v1232, 0
        %1442 = vmatpush.bf16.msra.mxu0 0
        %1443 = vmatpush.bf16.msra.mxu0 0
        %1444 = vmatpush.bf16.msra.mxu0 0
        %1445 = vmatpush.bf16.msra.mxu0 0
        %1446 = vmatpush.bf16.msra.mxu0 0
        %1447 = vmatpush.bf16.msra.mxu0 0
        %1448 = vmatpush.bf16.msra.mxu0 0
        %1449 = vmatpush.bf16.msra.mxu0 %v1440
        %1450 = vmatmul.bf16.gmra.mxu0 %v1437
        %v1451 = vpop.f32.mrf.mxu0
        %v1452 = vadd.f32 0.0, %v1451
        %v1453 = vpop.f32.mrf.mxu0
        %1454 = vdwg.mxu0
        %v1456 = vsel %vm1239, %v1414, 0
        %v1459 = vsel %vm1419, %v1235, 0
        %1461 = vmatpush.bf16.msra.mxu0 0
        %1462 = vmatpush.bf16.msra.mxu0 0
        %1463 = vmatpush.bf16.msra.mxu0 0
        %1464 = vmatpush.bf16.msra.mxu0 0
        %1465 = vmatpush.bf16.msra.mxu0 0
        %1466 = vmatpush.bf16.msra.mxu0 0
        %1467 = vmatpush.bf16.msra.mxu0 0
        %1468 = vmatpush.bf16.msra.mxu0 %v1459
        %1469 = vmatmul.bf16.gmra.mxu0 %v1456
        %v1470 = vpop.f32.mrf.mxu0
        %v1471 = vadd.f32 0.0, %v1470
        %v1472 = vpop.f32.mrf.mxu0
        %1473 = vdwg.mxu0
        %v1475 = vsel %vm1239, %v1415, 0
        %v1478 = vsel %vm1419, %v1238, 0
        %1480 = vmatpush.bf16.msra.mxu0 0
        %1481 = vmatpush.bf16.msra.mxu0 0
        %1482 = vmatpush.bf16.msra.mxu0 0
        %1483 = vmatpush.bf16.msra.mxu0 0
        %1484 = vmatpush.bf16.msra.mxu0 0
        %1485 = vmatpush.bf16.msra.mxu0 0
        %1486 = vmatpush.bf16.msra.mxu0 0
        %1487 = vmatpush.bf16.msra.mxu0 %v1478
        %1488 = vmatmul.bf16.gmra.mxu0 %v1475
        %v1489 = vpop.f32.mrf.mxu0
        %v1490 = vadd.f32 0.0, %v1489
        %v1491 = vpop.f32.mrf.mxu0
        %1492 = vdwg.mxu0
        %v1493 = vrot.slane %v1471, 4
        %vm1494 = vcmask 1047556
        %v1495 = vsel %vm1494, %v1493, %v1433
        %v1496 = vrot.slane %v1433, 4
        %v1497 = vsel %vm1494, %v1471, %v1496
        %v1499 = vunpack.c.l.s4 1983009808
        %v1500 = vunpack.c.0.s8 %v1499
        %v1501 = vperm.slane %v1495, %v1500
        %v1503 = vunpack.c.l.s4 1983009808
        %v1504 = vunpack.c.0.s8 %v1503
        %v1505 = vperm.slane %v1497, %v1504
        %v1506 = vrot.slane %v1490, 4
        %v1507 = vsel %vm1494, %v1506, %v1452
        %v1508 = vrot.slane %v1452, 4
        %v1509 = vsel %vm1494, %v1490, %v1508
        %v1511 = vunpack.c.l.s4 1983009808
        %v1512 = vunpack.c.0.s8 %v1511
        %v1513 = vperm.slane %v1507, %v1512
        %v1515 = vunpack.c.l.s4 1983009808
        %v1516 = vunpack.c.0.s8 %v1515
        %v1517 = vperm.slane %v1509, %v1516
        %v1518 = vrot.slane %v1513, 4
        %v1519 = vsel %vm1494, %v1518, %v1501
        %v1520 = vrot.slane %v1501, 4
        %v1521 = vsel %vm1494, %v1513, %v1520
        %v1523 = vunpack.c.l.s4 1934713408
        %v1524 = vunpack.c.0.s8 %v1523
        %v1525 = vperm.slane %v1519, %v1524
        %v1527 = vunpack.c.l.s4 1934713408
        %v1528 = vunpack.c.0.s8 %v1527
        %v1529 = vperm.slane %v1521, %v1528
        %v1530 = vrot.slane %v1517, 4
        %v1531 = vsel %vm1494, %v1530, %v1505
        %v1532 = vrot.slane %v1505, 4
        %v1533 = vsel %vm1494, %v1517, %v1532
        %v1535 = vunpack.c.l.s4 1934713408
        %v1536 = vunpack.c.0.s8 %v1535
        %v1537 = vperm.slane %v1531, %v1536
        %v1539 = vunpack.c.l.s4 1934713408
        %v1540 = vunpack.c.0.s8 %v1539
        %v1541 = vperm.slane %v1533, %v1540
        %v1542 = vrot.slane %v1525, 4
        %v1543 = vsel %vm1494, 0.0, %v1542
        %v1544 = vrot.slane %v1529, 4
        %v1545 = vsel %vm1494, 0.0, %v1544
        %v1546 = vrot.slane %v1537, 4
        %v1547 = vsel %vm1494, 0.0, %v1546
        %v1548 = vrot.slane %v1541, 4
        %v1549 = vsel %vm1494, 0.0, %v1548
        %v1550 = vsel %vm1494, %v1544, %v1525
        %v1552 = vunpack.c.l.s4 1983009808
        %v1553 = vunpack.c.0.s8 %v1552
        %v1554 = vperm.slane %v1550, %v1553
        %v1555 = vrot.slane %v1545, 4
        %v1556 = vsel %vm1494, %v1555, %v1543
        %v1558 = vunpack.c.l.s4 1983009808
        %v1559 = vunpack.c.0.s8 %v1558
        %v1560 = vperm.slane %v1556, %v1559
        %v1561 = vsel %vm1494, %v1548, %v1537
        %v1563 = vunpack.c.l.s4 1983009808
        %v1564 = vunpack.c.0.s8 %v1563
        %v1565 = vperm.slane %v1561, %v1564
        %v1566 = vrot.slane %v1549, 4
        %v1567 = vsel %vm1494, %v1566, %v1547
        %v1569 = vunpack.c.l.s4 1983009808
        %v1570 = vunpack.c.0.s8 %v1569
        %v1571 = vperm.slane %v1567, %v1570
        %v1572 = vrot.slane %v1560, 4
        %v1573 = vsel %vm1494, %v1572, %v1554
        %v1574 = vrot.slane %v1554, 4
        %v1575 = vsel %vm1494, %v1560, %v1574
        %v1577 = vunpack.c.l.s4 1934713408
        %v1578 = vunpack.c.0.s8 %v1577
        %v1579 = vperm.slane %v1573, %v1578
        %v1581 = vunpack.c.l.s4 1934713408
        %v1582 = vunpack.c.0.s8 %v1581
        %v1583 = vperm.slane %v1575, %v1582
        %v1584 = vrot.slane %v1571, 4
        %v1585 = vsel %vm1494, %v1584, %v1565
        %v1586 = vrot.slane %v1565, 4
        %v1587 = vsel %vm1494, %v1571, %v1586
        %v1589 = vunpack.c.l.s4 1934713408
        %v1590 = vunpack.c.0.s8 %v1589
        %v1591 = vperm.slane %v1585, %v1590
        %v1593 = vunpack.c.l.s4 1934713408
        %v1594 = vunpack.c.0.s8 %v1593
        %v1595 = vperm.slane %v1587, %v1594
        %v1596 = vrot.slane %v1591, 4
        %v1597 = vsel %vm1494, %v1596, %v1579
        %v1598 = vrot.slane %v1579, 4
        %v1599 = vsel %vm1494, %v1591, %v1598
        %v1600 = vrot.slane %v1595, 4
        %v1601 = vsel %vm1494, %v1600, %v1583
        %v1602 = vrot.slane %v1583, 4
        %v1603 = vsel %vm1494, %v1595, %v1602
        %1605 = vrot.lane.b32.xlu0 %v1599, 8
        %v1606 = vpop.permute.xlu0 %1605
        %1609 = vrot.lane.b32.xlu0 %v1601, 16
        %v1610 = vpop.permute.xlu0 %1609
        %1613 = vrot.lane.b32.xlu0 %v1603, 24
        %v1614 = vpop.permute.xlu0 %1613
        %v1616 = vsel %vm1239, %v1597, %v1606
        %vm1617 = vcmask 130048
        %v1618 = vsel %vm1617, %v1616, %v1610
        %vm1619 = vcmask 195584
        %v1620 = vsel %vm1619, %v1618, %v1614
        %v1621 = vpack.c.bf16 %v1620, %v1620
        %1622 = vst.msk [vmem:[%s803] sm:$0xff] %vm1239, %v1408
        %1623 = vst.msk [vmem:[%s803 + $0x8] sm:$0xff] %vm1239, %v1409
        %1624 = vst.msk [vmem:[%s803 + $0x10] sm:$0xff] %vm1239, %v1410
        %1625 = vst.msk [vmem:[%s803 + $0x18] sm:$0xff] %vm1239, %v1411
        %v1626 = vld [vmem:[#allocation7] sm:$0xf]
        %v1627 = vld [vmem:[#allocation7 + $0x4] sm:$0xf]
        %v1628 = vld [vmem:[#allocation7 + $0x8] sm:$0xf]
        %v1629 = vld [vmem:[#allocation7 + $0xc] sm:$0xf]
        %v1630 = vld [vmem:[%s7] sm:$0x1]
        %v1632 = vperm.slane %v1630, 0
        %v1638 = vunpack.c.l.b16 %v1626
        %v1639 = vunpack.c.l.b16 %v1627
        %v1640 = vunpack.c.l.b16 %v1628
        %v1641 = vunpack.c.l.b16 %v1629
        %v1642 = vpack.c.b16 %v1639, %v1638
        %v1643 = vpack.c.b16 %v1641, %v1640
        %v1647 = vsel %vm855, %v1621, 0
        %1649 = vmatpush.bf16.msra.mxu0 0
        %1650 = vmatpush.bf16.msra.mxu0 0
        %1651 = vmatpush.bf16.msra.mxu0 0
        %1652 = vmatpush.bf16.msra.mxu0 0
        %1653 = vmatpush.bf16.msra.mxu0 0
        %1654 = vmatpush.bf16.msra.mxu0 0
        %1655 = vmatpush.bf16.msra.mxu0 %v1643
        %1656 = vmatpush.bf16.msra.mxu0 %v1642
        %1657 = vmatmul.bf16.gmra.mxu0 %v1647
        %v1658 = vpop.f32.mrf.mxu0
        %v1659 = vadd.f32 %v1632, %v1658
        %v1660 = vpop.f32.mrf.mxu0
        %1661 = vdwg.mxu0
        %v1662 = vadd.f32 %v1659, %v829
        %v1663 = vsel %vm855, %v1662, 0.0
        %1664 = vadd.xlane.f32.xlu0 %v1663
        %v1665 = vpop.xlane.xlu0 %1664
        %v1666 = vrcp.pop 32.0
        %v1667 = vmul.f32 32.0, %v1666
        %v1668 = vsub.f32 1.0, %v1667
        %v1669 = vmul.f32 %v1666, %v1668
        %v1670 = vadd.f32 %v1666, %v1669
        %vm1671 = vweird.f32 %v1666
        %v1672 = vsel %vm1671, %v1666, %v1670
        %v1673 = vmul.f32 %v1665, %v1672
        %v1674 = vsub.f32 %v1662, %v1673
        %v1675 = vmul.f32 %v1674, %v1674
        %v1676 = vsel %vm855, %v1675, 0.0
        %1677 = vadd.xlane.f32.xlu0 %v1676
        %v1678 = vpop.xlane.xlu0 %1677
        %v1679 = vmul.f32 %v1678, %v1672
        %v1680 = vadd.f32 %v1679, 1e-05
        %v1681 = vrsqrt.pop %v1680
        %v1682 = vmul.f32 %v1681, %v1680
        %v1683 = vmul.f32 %v1682, %v1681
        %v1684 = vmul.f32 0.5, %v1683
        %v1685 = vsub.f32 1.5, %v1684
        %v1686 = vmul.f32 %v1681, %v1685
        %vm1687 = vweird.f32 %v1680
        %vm1688 = vweird.f32 %v1681
        %vm1689 = vmor %vm1687, %vm1688
        %v1690 = vsel %vm1689, %v1681, %v1686
        %v1691 = vmul.f32 %v1674, %v1690
        %v1692 = vpack.c.bf16 %v1691, %v1691
        %v1693 = vpack.c.bf16 %v831, %v830
        %v1694 = vld [vmem:[#allocation8] sm:$0xf]
        %v1695 = vld [vmem:[#allocation8 + $0x4] sm:$0xf]
        %v1696 = vld [vmem:[#allocation8 + $0x8] sm:$0xf]
        %v1697 = vld [vmem:[#allocation8 + $0xc] sm:$0xf]
        %v1698 = vld [vmem:[%s9] sm:$0x1]
        %v1700 = vperm.slane %v1698, 0
        %v1706 = vunpack.c.l.b16 %v1694
        %v1707 = vunpack.c.l.b16 %v1695
        %v1708 = vunpack.c.l.b16 %v1696
        %v1709 = vunpack.c.l.b16 %v1697
        %v1710 = vpack.c.b16 %v1707, %v1706
        %v1711 = vpack.c.b16 %v1709, %v1708
        %v1715 = vsel %vm855, %v1692, 0
        %1717 = vmatpush.bf16.msra.mxu0 0
        %1718 = vmatpush.bf16.msra.mxu0 0
        %1719 = vmatpush.bf16.msra.mxu0 0
        %1720 = vmatpush.bf16.msra.mxu0 0
        %1721 = vmatpush.bf16.msra.mxu0 0
        %1722 = vmatpush.bf16.msra.mxu0 0
        %1723 = vmatpush.bf16.msra.mxu0 %v1711
        %1724 = vmatpush.bf16.msra.mxu0 %v1710
        %1725 = vmatmul.bf16.gmra.mxu0 %v1715
        %v1726 = vpop.f32.mrf.mxu0
        %v1727 = vadd.f32 %v1700, %v1726
        %v1728 = vpop.f32.mrf.mxu0
        %1729 = vdwg.mxu0
        %v1730 = vpack.c.bf16 %v1727, %v1727
        %v1731 = vld [vmem:[#allocation10] sm:$0xf]
        %v1732 = vld [vmem:[#allocation10 + $0x4] sm:$0xf]
        %v1733 = vld [vmem:[#allocation10 + $0x8] sm:$0xf]
        %v1734 = vld [vmem:[#allocation10 + $0xc] sm:$0xf]
        %v1735 = vld [vmem:[#allocation10 + $0x10] sm:$0xf]
        %v1736 = vld [vmem:[#allocation10 + $0x14] sm:$0xf]
        %v1737 = vld [vmem:[#allocation10 + $0x18] sm:$0xf]
        %v1738 = vld [vmem:[#allocation10 + $0x1c] sm:$0xf]
        %v1739 = vld [vmem:[%s11] sm:$0x1]
        %v1741 = vperm.slane %v1739, 0
        %v1751 = vunpack.c.l.b16 %v1731
        %v1752 = vunpack.c.l.b16 %v1732
        %v1753 = vunpack.c.l.b16 %v1733
        %v1754 = vunpack.c.l.b16 %v1734
        %v1755 = vunpack.c.l.b16 %v1735
        %v1756 = vunpack.c.l.b16 %v1736
        %v1757 = vunpack.c.l.b16 %v1737
        %v1758 = vunpack.c.l.b16 %v1738
        %v1759 = vpack.c.b16 %v1752, %v1751
        %v1760 = vpack.c.b16 %v1754, %v1753
        %v1761 = vpack.c.b16 %v1756, %v1755
        %v1762 = vpack.c.b16 %v1758, %v1757
        %vm1767 = vcmask 523264
        %v1769 = vsel %vm1767, %v1693, 0
        %1771 = vmatpush.bf16.msra.mxu0 0
        %1772 = vmatpush.bf16.msra.mxu0 0
        %1773 = vmatpush.bf16.msra.mxu0 0
        %1774 = vmatpush.bf16.msra.mxu0 0
        %1775 = vmatpush.bf16.msra.mxu0 %v1762
        %1776 = vmatpush.bf16.msra.mxu0 %v1761
        %1777 = vmatpush.bf16.msra.mxu0 %v1760
        %1778 = vmatpush.bf16.msra.mxu0 %v1759
        %1779 = vmatmul.bf16.gmra.mxu0 %v1769
        %v1780 = vpop.f32.mrf.mxu0
        %v1781 = vadd.f32 %v1741, %v1780
        %v1782 = vpop.f32.mrf.mxu0
        %v1783 = vadd.f32 %v1741, %v1782
        %1784 = vdwg.mxu0
        %v1785 = vpack.c.bf16 %v1781, %v1781
        %v1786 = vpack.c.bf16 %v1783, %v1783
        %1788 = vrot.lane.b32.xlu0 %v1730, 120
        %v1789 = vpop.permute.xlu0 %1788
        %1790 = vrot.lane.b32.xlu0 %v1730, 112
        %v1791 = vpop.permute.xlu0 %1790
        %1792 = vrot.lane.b32.xlu0 %v1730, 104
        %v1793 = vpop.permute.xlu0 %1792
        %v1796 = vpack.i.b16 %v1789, %v1730
        %v1797 = vshrl.u32 %v1730, 16
        %v1798 = vshrl.u32 %v1789, 16
        %v1799 = vpack.i.b16 %v1798, %v1797
        %v1802 = vpack.i.b16 %v1793, %v1791
        %v1803 = vshrl.u32 %v1791, 16
        %v1804 = vshrl.u32 %v1793, 16
        %v1805 = vpack.i.b16 %v1804, %v1803
        %v1808 = vunpack.c.l.s4 1983009808
        %v1809 = vunpack.c.0.s8 %v1808
        %v1810 = vperm.slane %v1796, %v1809
        %v1813 = vunpack.c.l.s4 1983009808
        %v1814 = vunpack.c.0.s8 %v1813
        %v1815 = vperm.slane %v1802, %v1814
        %v1816 = vrot.slane %v1815, 4
        %v1817 = vsel %vm903, %v1816, %v1810
        %v1818 = vrot.slane %v1810, 4
        %v1819 = vsel %vm903, %v1815, %v1818
        %v1821 = vunpack.c.l.s4 1934713408
        %v1822 = vunpack.c.0.s8 %v1821
        %v1823 = vperm.slane %v1817, %v1822
        %v1825 = vunpack.c.l.s4 1934713408
        %v1826 = vunpack.c.0.s8 %v1825
        %v1827 = vperm.slane %v1819, %v1826
        %v1828 = vrot.slane %v1823, 4
        %v1829 = vsel %vm903, 0, %v1828
        %v1830 = vrot.slane %v1827, 4
        %v1831 = vsel %vm903, 0, %v1830
        %v1834 = vunpack.c.l.s4 1983009808
        %v1835 = vunpack.c.0.s8 %v1834
        %v1836 = vperm.slane %v1799, %v1835
        %v1839 = vunpack.c.l.s4 1983009808
        %v1840 = vunpack.c.0.s8 %v1839
        %v1841 = vperm.slane %v1805, %v1840
        %v1842 = vrot.slane %v1841, 4
        %v1843 = vsel %vm903, %v1842, %v1836
        %v1844 = vrot.slane %v1836, 4
        %v1845 = vsel %vm903, %v1841, %v1844
        %v1847 = vunpack.c.l.s4 1934713408
        %v1848 = vunpack.c.0.s8 %v1847
        %v1849 = vperm.slane %v1843, %v1848
        %v1851 = vunpack.c.l.s4 1934713408
        %v1852 = vunpack.c.0.s8 %v1851
        %v1853 = vperm.slane %v1845, %v1852
        %v1854 = vrot.slane %v1849, 4
        %v1855 = vsel %vm903, 0, %v1854
        %v1856 = vrot.slane %v1853, 4
        %v1857 = vsel %vm903, 0, %v1856
        %v1858 = vsel %vm903, %v1830, %v1823
        %v1860 = vunpack.c.l.s4 1983009808
        %v1861 = vunpack.c.0.s8 %v1860
        %v1862 = vperm.slane %v1858, %v1861
        %v1863 = vrot.slane %v1831, 4
        %v1864 = vsel %vm903, %v1863, %v1829
        %v1866 = vunpack.c.l.s4 1983009808
        %v1867 = vunpack.c.0.s8 %v1866
        %v1868 = vperm.slane %v1864, %v1867
        %v1869 = vrot.slane %v1868, 4
        %v1870 = vsel %vm903, %v1869, %v1862
        %v1872 = vunpack.c.l.s4 1934713408
        %v1873 = vunpack.c.0.s8 %v1872
        %v1874 = vperm.slane %v1870, %v1873
        %v1875 = vrot.slane %v1874, 4
        %v1876 = vsel %vm903, 0, %v1875
        %v1877 = vsel %vm903, %v1856, %v1849
        %v1879 = vunpack.c.l.s4 1983009808
        %v1880 = vunpack.c.0.s8 %v1879
        %v1881 = vperm.slane %v1877, %v1880
        %v1882 = vrot.slane %v1857, 4
        %v1883 = vsel %vm903, %v1882, %v1855
        %v1885 = vunpack.c.l.s4 1983009808
        %v1886 = vunpack.c.0.s8 %v1885
        %v1887 = vperm.slane %v1883, %v1886
        %v1888 = vrot.slane %v1887, 4
        %v1889 = vsel %vm903, %v1888, %v1881
        %v1891 = vunpack.c.l.s4 1934713408
        %v1892 = vunpack.c.0.s8 %v1891
        %v1893 = vperm.slane %v1889, %v1892
        %v1894 = vrot.slane %v1893, 4
        %v1895 = vsel %vm903, 0, %v1894
        %v1898 = vpack.i.b16 %v1893, %v1874
        %v1899 = vshrl.u32 %v1874, 16
        %v1900 = vshrl.u32 %v1893, 16
        %v1901 = vpack.i.b16 %v1900, %v1899
        %v1904 = vpack.i.b16 %v1895, %v1876
        %v1905 = vshrl.u32 %v1876, 16
        %v1906 = vshrl.u32 %v1895, 16
        %v1907 = vpack.i.b16 %v1906, %v1905
        %1910 = vrot.lane.b32.xlu0 %v1785, 120
        %v1911 = vpop.permute.xlu0 %1910
        %1912 = vrot.lane.b32.xlu0 %v1786, 120
        %v1913 = vpop.permute.xlu0 %1912
        %1914 = vrot.lane.b32.xlu0 %v1785, 112
        %v1915 = vpop.permute.xlu0 %1914
        %1916 = vrot.lane.b32.xlu0 %v1786, 112
        %v1917 = vpop.permute.xlu0 %1916
        %1918 = vrot.lane.b32.xlu0 %v1785, 104
        %v1919 = vpop.permute.xlu0 %1918
        %1920 = vrot.lane.b32.xlu0 %v1786, 104
        %v1921 = vpop.permute.xlu0 %1920
        %v1924 = vpack.i.b16 %v1911, %v1785
        %v1925 = vshrl.u32 %v1785, 16
        %v1926 = vshrl.u32 %v1911, 16
        %v1927 = vpack.i.b16 %v1926, %v1925
        %v1930 = vpack.i.b16 %v1919, %v1915
        %v1931 = vshrl.u32 %v1915, 16
        %v1932 = vshrl.u32 %v1919, 16
        %v1933 = vpack.i.b16 %v1932, %v1931
        %v1936 = vpack.i.b16 %v1913, %v1786
        %v1937 = vshrl.u32 %v1786, 16
        %v1938 = vshrl.u32 %v1913, 16
        %v1939 = vpack.i.b16 %v1938, %v1937
        %v1942 = vpack.i.b16 %v1921, %v1917
        %v1943 = vshrl.u32 %v1917, 16
        %v1944 = vshrl.u32 %v1921, 16
        %v1945 = vpack.i.b16 %v1944, %v1943
        %v1948 = vunpack.c.l.s4 1983009808
        %v1949 = vunpack.c.0.s8 %v1948
        %v1950 = vperm.slane %v1924, %v1949
        %v1953 = vunpack.c.l.s4 1983009808
        %v1954 = vunpack.c.0.s8 %v1953
        %v1955 = vperm.slane %v1930, %v1954
        %v1956 = vrot.slane %v1955, 4
        %v1957 = vsel %vm903, %v1956, %v1950
        %v1958 = vrot.slane %v1950, 4
        %v1959 = vsel %vm903, %v1955, %v1958
        %v1961 = vunpack.c.l.s4 1934713408
        %v1962 = vunpack.c.0.s8 %v1961
        %v1963 = vperm.slane %v1957, %v1962
        %v1965 = vunpack.c.l.s4 1934713408
        %v1966 = vunpack.c.0.s8 %v1965
        %v1967 = vperm.slane %v1959, %v1966
        %v1968 = vrot.slane %v1963, 4
        %v1969 = vsel %vm903, 0, %v1968
        %v1970 = vrot.slane %v1967, 4
        %v1971 = vsel %vm903, 0, %v1970
        %v1974 = vunpack.c.l.s4 1983009808
        %v1975 = vunpack.c.0.s8 %v1974
        %v1976 = vperm.slane %v1927, %v1975
        %v1979 = vunpack.c.l.s4 1983009808
        %v1980 = vunpack.c.0.s8 %v1979
        %v1981 = vperm.slane %v1933, %v1980
        %v1982 = vrot.slane %v1981, 4
        %v1983 = vsel %vm903, %v1982, %v1976
        %v1984 = vrot.slane %v1976, 4
        %v1985 = vsel %vm903, %v1981, %v1984
        %v1987 = vunpack.c.l.s4 1934713408
        %v1988 = vunpack.c.0.s8 %v1987
        %v1989 = vperm.slane %v1983, %v1988
        %v1991 = vunpack.c.l.s4 1934713408
        %v1992 = vunpack.c.0.s8 %v1991
        %v1993 = vperm.slane %v1985, %v1992
        %v1994 = vrot.slane %v1989, 4
        %v1995 = vsel %vm903, 0, %v1994
        %v1996 = vrot.slane %v1993, 4
        %v1997 = vsel %vm903, 0, %v1996
        %v2000 = vunpack.c.l.s4 1983009808
        %v2001 = vunpack.c.0.s8 %v2000
        %v2002 = vperm.slane %v1936, %v2001
        %v2005 = vunpack.c.l.s4 1983009808
        %v2006 = vunpack.c.0.s8 %v2005
        %v2007 = vperm.slane %v1942, %v2006
        %v2008 = vrot.slane %v2007, 4
        %v2009 = vsel %vm903, %v2008, %v2002
        %v2010 = vrot.slane %v2002, 4
        %v2011 = vsel %vm903, %v2007, %v2010
        %v2013 = vunpack.c.l.s4 1934713408
        %v2014 = vunpack.c.0.s8 %v2013
        %v2015 = vperm.slane %v2009, %v2014
        %v2017 = vunpack.c.l.s4 1934713408
        %v2018 = vunpack.c.0.s8 %v2017
        %v2019 = vperm.slane %v2011, %v2018
        %v2020 = vrot.slane %v2015, 4
        %v2021 = vsel %vm903, 0, %v2020
        %v2022 = vrot.slane %v2019, 4
        %v2023 = vsel %vm903, 0, %v2022
        %v2026 = vunpack.c.l.s4 1983009808
        %v2027 = vunpack.c.0.s8 %v2026
        %v2028 = vperm.slane %v1939, %v2027
        %v2031 = vunpack.c.l.s4 1983009808
        %v2032 = vunpack.c.0.s8 %v2031
        %v2033 = vperm.slane %v1945, %v2032
        %v2034 = vrot.slane %v2033, 4
        %v2035 = vsel %vm903, %v2034, %v2028
        %v2036 = vrot.slane %v2028, 4
        %v2037 = vsel %vm903, %v2033, %v2036
        %v2039 = vunpack.c.l.s4 1934713408
        %v2040 = vunpack.c.0.s8 %v2039
        %v2041 = vperm.slane %v2035, %v2040
        %v2043 = vunpack.c.l.s4 1934713408
        %v2044 = vunpack.c.0.s8 %v2043
        %v2045 = vperm.slane %v2037, %v2044
        %v2046 = vrot.slane %v2041, 4
        %v2047 = vsel %vm903, 0, %v2046
        %v2048 = vrot.slane %v2045, 4
        %v2049 = vsel %vm903, 0, %v2048
        %v2050 = vsel %vm903, %v1970, %v1963
        %v2052 = vunpack.c.l.s4 1983009808
        %v2053 = vunpack.c.0.s8 %v2052
        %v2054 = vperm.slane %v2050, %v2053
        %v2055 = vrot.slane %v1971, 4
        %v2056 = vsel %vm903, %v2055, %v1969
        %v2058 = vunpack.c.l.s4 1983009808
        %v2059 = vunpack.c.0.s8 %v2058
        %v2060 = vperm.slane %v2056, %v2059
        %v2061 = vrot.slane %v2060, 4
        %v2062 = vsel %vm903, %v2061, %v2054
        %v2064 = vunpack.c.l.s4 1934713408
        %v2065 = vunpack.c.0.s8 %v2064
        %v2066 = vperm.slane %v2062, %v2065
        %v2067 = vrot.slane %v2066, 4
        %v2068 = vsel %vm903, 0, %v2067
        %v2069 = vsel %vm903, %v1996, %v1989
        %v2071 = vunpack.c.l.s4 1983009808
        %v2072 = vunpack.c.0.s8 %v2071
        %v2073 = vperm.slane %v2069, %v2072
        %v2074 = vrot.slane %v1997, 4
        %v2075 = vsel %vm903, %v2074, %v1995
        %v2077 = vunpack.c.l.s4 1983009808
        %v2078 = vunpack.c.0.s8 %v2077
        %v2079 = vperm.slane %v2075, %v2078
        %v2080 = vrot.slane %v2079, 4
        %v2081 = vsel %vm903, %v2080, %v2073
        %v2083 = vunpack.c.l.s4 1934713408
        %v2084 = vunpack.c.0.s8 %v2083
        %v2085 = vperm.slane %v2081, %v2084
        %v2086 = vrot.slane %v2085, 4
        %v2087 = vsel %vm903, 0, %v2086
        %v2088 = vsel %vm903, %v2022, %v2015
        %v2090 = vunpack.c.l.s4 1983009808
        %v2091 = vunpack.c.0.s8 %v2090
        %v2092 = vperm.slane %v2088, %v2091
        %v2093 = vrot.slane %v2023, 4
        %v2094 = vsel %vm903, %v2093, %v2021
        %v2096 = vunpack.c.l.s4 1983009808
        %v2097 = vunpack.c.0.s8 %v2096
        %v2098 = vperm.slane %v2094, %v2097
        %v2099 = vrot.slane %v2098, 4
        %v2100 = vsel %vm903, %v2099, %v2092
        %v2102 = vunpack.c.l.s4 1934713408
        %v2103 = vunpack.c.0.s8 %v2102
        %v2104 = vperm.slane %v2100, %v2103
        %v2105 = vrot.slane %v2104, 4
        %v2106 = vsel %vm903, 0, %v2105
        %v2107 = vsel %vm903, %v2048, %v2041
        %v2109 = vunpack.c.l.s4 1983009808
        %v2110 = vunpack.c.0.s8 %v2109
        %v2111 = vperm.slane %v2107, %v2110
        %v2112 = vrot.slane %v2049, 4
        %v2113 = vsel %vm903, %v2112, %v2047
        %v2115 = vunpack.c.l.s4 1983009808
        %v2116 = vunpack.c.0.s8 %v2115
        %v2117 = vperm.slane %v2113, %v2116
        %v2118 = vrot.slane %v2117, 4
        %v2119 = vsel %vm903, %v2118, %v2111
        %v2121 = vunpack.c.l.s4 1934713408
        %v2122 = vunpack.c.0.s8 %v2121
        %v2123 = vperm.slane %v2119, %v2122
        %v2124 = vrot.slane %v2123, 4
        %v2125 = vsel %vm903, 0, %v2124
        %v2128 = vpack.i.b16 %v2085, %v2066
        %v2129 = vshrl.u32 %v2066, 16
        %v2130 = vshrl.u32 %v2085, 16
        %v2131 = vpack.i.b16 %v2130, %v2129
        %v2134 = vpack.i.b16 %v2087, %v2068
        %v2135 = vshrl.u32 %v2068, 16
        %v2136 = vshrl.u32 %v2087, 16
        %v2137 = vpack.i.b16 %v2136, %v2135
        %v2140 = vpack.i.b16 %v2123, %v2104
        %v2141 = vshrl.u32 %v2104, 16
        %v2142 = vshrl.u32 %v2123, 16
        %v2143 = vpack.i.b16 %v2142, %v2141
        %v2146 = vpack.i.b16 %v2125, %v2106
        %v2147 = vshrl.u32 %v2106, 16
        %v2148 = vshrl.u32 %v2125, 16
        %v2149 = vpack.i.b16 %v2148, %v2147
        %2150 = vrot.lane.b32.xlu0 %v1785, 96
        %v2151 = vpop.permute.xlu0 %2150
        %2152 = vrot.lane.b32.xlu0 %v1786, 96
        %v2153 = vpop.permute.xlu0 %2152
        %2154 = vrot.lane.b32.xlu0 %v1911, 96
        %v2155 = vpop.permute.xlu0 %2154
        %2156 = vrot.lane.b32.xlu0 %v1913, 96
        %v2157 = vpop.permute.xlu0 %2156
        %2158 = vrot.lane.b32.xlu0 %v1915, 96
        %v2159 = vpop.permute.xlu0 %2158
        %2160 = vrot.lane.b32.xlu0 %v1917, 96
        %v2161 = vpop.permute.xlu0 %2160
        %2162 = vrot.lane.b32.xlu0 %v1919, 96
        %v2163 = vpop.permute.xlu0 %2162
        %2164 = vrot.lane.b32.xlu0 %v1921, 96
        %v2165 = vpop.permute.xlu0 %2164
        %v2168 = vpack.i.b16 %v2155, %v2151
        %v2169 = vshrl.u32 %v2151, 16
        %v2170 = vshrl.u32 %v2155, 16
        %v2171 = vpack.i.b16 %v2170, %v2169
        %v2174 = vpack.i.b16 %v2163, %v2159
        %v2175 = vshrl.u32 %v2159, 16
        %v2176 = vshrl.u32 %v2163, 16
        %v2177 = vpack.i.b16 %v2176, %v2175
        %v2180 = vpack.i.b16 %v2157, %v2153
        %v2181 = vshrl.u32 %v2153, 16
        %v2182 = vshrl.u32 %v2157, 16
        %v2183 = vpack.i.b16 %v2182, %v2181
        %v2186 = vpack.i.b16 %v2165, %v2161
        %v2187 = vshrl.u32 %v2161, 16
        %v2188 = vshrl.u32 %v2165, 16
        %v2189 = vpack.i.b16 %v2188, %v2187
        %v2192 = vunpack.c.l.s4 1983009808
        %v2193 = vunpack.c.0.s8 %v2192
        %v2194 = vperm.slane %v2168, %v2193
        %v2197 = vunpack.c.l.s4 1983009808
        %v2198 = vunpack.c.0.s8 %v2197
        %v2199 = vperm.slane %v2174, %v2198
        %v2200 = vrot.slane %v2199, 4
        %v2201 = vsel %vm903, %v2200, %v2194
        %v2202 = vrot.slane %v2194, 4
        %v2203 = vsel %vm903, %v2199, %v2202
        %v2205 = vunpack.c.l.s4 1934713408
        %v2206 = vunpack.c.0.s8 %v2205
        %v2207 = vperm.slane %v2201, %v2206
        %v2209 = vunpack.c.l.s4 1934713408
        %v2210 = vunpack.c.0.s8 %v2209
        %v2211 = vperm.slane %v2203, %v2210
        %v2212 = vrot.slane %v2207, 4
        %v2213 = vsel %vm903, 0, %v2212
        %v2214 = vrot.slane %v2211, 4
        %v2215 = vsel %vm903, 0, %v2214
        %v2218 = vunpack.c.l.s4 1983009808
        %v2219 = vunpack.c.0.s8 %v2218
        %v2220 = vperm.slane %v2171, %v2219
        %v2223 = vunpack.c.l.s4 1983009808
        %v2224 = vunpack.c.0.s8 %v2223
        %v2225 = vperm.slane %v2177, %v2224
        %v2226 = vrot.slane %v2225, 4
        %v2227 = vsel %vm903, %v2226, %v2220
        %v2228 = vrot.slane %v2220, 4
        %v2229 = vsel %vm903, %v2225, %v2228
        %v2231 = vunpack.c.l.s4 1934713408
        %v2232 = vunpack.c.0.s8 %v2231
        %v2233 = vperm.slane %v2227, %v2232
        %v2235 = vunpack.c.l.s4 1934713408
        %v2236 = vunpack.c.0.s8 %v2235
        %v2237 = vperm.slane %v2229, %v2236
        %v2238 = vrot.slane %v2233, 4
        %v2239 = vsel %vm903, 0, %v2238
        %v2240 = vrot.slane %v2237, 4
        %v2241 = vsel %vm903, 0, %v2240
        %v2244 = vunpack.c.l.s4 1983009808
        %v2245 = vunpack.c.0.s8 %v2244
        %v2246 = vperm.slane %v2180, %v2245
        %v2249 = vunpack.c.l.s4 1983009808
        %v2250 = vunpack.c.0.s8 %v2249
        %v2251 = vperm.slane %v2186, %v2250
        %v2252 = vrot.slane %v2251, 4
        %v2253 = vsel %vm903, %v2252, %v2246
        %v2254 = vrot.slane %v2246, 4
        %v2255 = vsel %vm903, %v2251, %v2254
        %v2257 = vunpack.c.l.s4 1934713408
        %v2258 = vunpack.c.0.s8 %v2257
        %v2259 = vperm.slane %v2253, %v2258
        %v2261 = vunpack.c.l.s4 1934713408
        %v2262 = vunpack.c.0.s8 %v2261
        %v2263 = vperm.slane %v2255, %v2262
        %v2264 = vrot.slane %v2259, 4
        %v2265 = vsel %vm903, 0, %v2264
        %v2266 = vrot.slane %v2263, 4
        %v2267 = vsel %vm903, 0, %v2266
        %v2270 = vunpack.c.l.s4 1983009808
        %v2271 = vunpack.c.0.s8 %v2270
        %v2272 = vperm.slane %v2183, %v2271
        %v2275 = vunpack.c.l.s4 1983009808
        %v2276 = vunpack.c.0.s8 %v2275
        %v2277 = vperm.slane %v2189, %v2276
        %v2278 = vrot.slane %v2277, 4
        %v2279 = vsel %vm903, %v2278, %v2272
        %v2280 = vrot.slane %v2272, 4
        %v2281 = vsel %vm903, %v2277, %v2280
        %v2283 = vunpack.c.l.s4 1934713408
        %v2284 = vunpack.c.0.s8 %v2283
        %v2285 = vperm.slane %v2279, %v2284
        %v2287 = vunpack.c.l.s4 1934713408
        %v2288 = vunpack.c.0.s8 %v2287
        %v2289 = vperm.slane %v2281, %v2288
        %v2290 = vrot.slane %v2285, 4
        %v2291 = vsel %vm903, 0, %v2290
        %v2292 = vrot.slane %v2289, 4
        %v2293 = vsel %vm903, 0, %v2292
        %v2294 = vsel %vm903, %v2214, %v2207
        %v2296 = vunpack.c.l.s4 1983009808
        %v2297 = vunpack.c.0.s8 %v2296
        %v2298 = vperm.slane %v2294, %v2297
        %v2299 = vrot.slane %v2215, 4
        %v2300 = vsel %vm903, %v2299, %v2213
        %v2302 = vunpack.c.l.s4 1983009808
        %v2303 = vunpack.c.0.s8 %v2302
        %v2304 = vperm.slane %v2300, %v2303
        %v2305 = vrot.slane %v2304, 4
        %v2306 = vsel %vm903, %v2305, %v2298
        %v2308 = vunpack.c.l.s4 1934713408
        %v2309 = vunpack.c.0.s8 %v2308
        %v2310 = vperm.slane %v2306, %v2309
        %v2311 = vrot.slane %v2310, 4
        %v2312 = vsel %vm903, 0, %v2311
        %v2313 = vsel %vm903, %v2240, %v2233
        %v2315 = vunpack.c.l.s4 1983009808
        %v2316 = vunpack.c.0.s8 %v2315
        %v2317 = vperm.slane %v2313, %v2316
        %v2318 = vrot.slane %v2241, 4
        %v2319 = vsel %vm903, %v2318, %v2239
        %v2321 = vunpack.c.l.s4 1983009808
        %v2322 = vunpack.c.0.s8 %v2321
        %v2323 = vperm.slane %v2319, %v2322
        %v2324 = vrot.slane %v2323, 4
        %v2325 = vsel %vm903, %v2324, %v2317
        %v2327 = vunpack.c.l.s4 1934713408
        %v2328 = vunpack.c.0.s8 %v2327
        %v2329 = vperm.slane %v2325, %v2328
        %v2330 = vrot.slane %v2329, 4
        %v2331 = vsel %vm903, 0, %v2330
        %v2332 = vsel %vm903, %v2266, %v2259
        %v2334 = vunpack.c.l.s4 1983009808
        %v2335 = vunpack.c.0.s8 %v2334
        %v2336 = vperm.slane %v2332, %v2335
        %v2337 = vrot.slane %v2267, 4
        %v2338 = vsel %vm903, %v2337, %v2265
        %v2340 = vunpack.c.l.s4 1983009808
        %v2341 = vunpack.c.0.s8 %v2340
        %v2342 = vperm.slane %v2338, %v2341
        %v2343 = vrot.slane %v2342, 4
        %v2344 = vsel %vm903, %v2343, %v2336
        %v2346 = vunpack.c.l.s4 1934713408
        %v2347 = vunpack.c.0.s8 %v2346
        %v2348 = vperm.slane %v2344, %v2347
        %v2349 = vrot.slane %v2348, 4
        %v2350 = vsel %vm903, 0, %v2349
        %v2351 = vsel %vm903, %v2292, %v2285
        %v2353 = vunpack.c.l.s4 1983009808
        %v2354 = vunpack.c.0.s8 %v2353
        %v2355 = vperm.slane %v2351, %v2354
        %v2356 = vrot.slane %v2293, 4
        %v2357 = vsel %vm903, %v2356, %v2291
        %v2359 = vunpack.c.l.s4 1983009808
        %v2360 = vunpack.c.0.s8 %v2359
        %v2361 = vperm.slane %v2357, %v2360
        %v2362 = vrot.slane %v2361, 4
        %v2363 = vsel %vm903, %v2362, %v2355
        %v2365 = vunpack.c.l.s4 1934713408
        %v2366 = vunpack.c.0.s8 %v2365
        %v2367 = vperm.slane %v2363, %v2366
        %v2368 = vrot.slane %v2367, 4
        %v2369 = vsel %vm903, 0, %v2368
        %v2372 = vpack.i.b16 %v2329, %v2310
        %v2373 = vshrl.u32 %v2310, 16
        %v2374 = vshrl.u32 %v2329, 16
        %v2375 = vpack.i.b16 %v2374, %v2373
        %v2378 = vpack.i.b16 %v2331, %v2312
        %v2379 = vshrl.u32 %v2312, 16
        %v2380 = vshrl.u32 %v2331, 16
        %v2381 = vpack.i.b16 %v2380, %v2379
        %v2384 = vpack.i.b16 %v2367, %v2348
        %v2385 = vshrl.u32 %v2348, 16
        %v2386 = vshrl.u32 %v2367, 16
        %v2387 = vpack.i.b16 %v2386, %v2385
        %v2390 = vpack.i.b16 %v2369, %v2350
        %v2391 = vshrl.u32 %v2350, 16
        %v2392 = vshrl.u32 %v2369, 16
        %v2393 = vpack.i.b16 %v2392, %v2391
        %v2394 = vunpack.c.l.b16 %v2128
        %v2395 = vunpack.c.l.b16 %v2140
        %v2396 = vpack.c.b16 %v2395, %v2394
        %v2398 = vsel %vm1239, %v1898, 0
        %v2401 = vsel %vm1239, %v2396, 0
        %2403 = vmatpush.bf16.xpose.msra.mxu0 0
        %2404 = vmatpush.bf16.xpose.msra.mxu0 0
        %2405 = vmatpush.bf16.xpose.msra.mxu0 0
        %2406 = vmatpush.bf16.xpose.msra.mxu0 0
        %2407 = vmatpush.bf16.xpose.msra.mxu0 0
        %2408 = vmatpush.bf16.xpose.msra.mxu0 0
        %2409 = vmatpush.bf16.xpose.msra.mxu0 0
        %2410 = vmatpush.bf16.xpose.msra.mxu0 %v2401
        %2411 = vmatmul.bf16.gmra.mxu0 %v2398
        %v2412 = vpop.f32.mrf.mxu0
        %v2413 = vadd.f32 %v833, %v2412
        %v2414 = vpop.f32.mrf.mxu0
        %2415 = vdwg.mxu0
        %v2416 = vunpack.c.l.b16 %v2131
        %v2417 = vunpack.c.l.b16 %v2143
        %v2418 = vpack.c.b16 %v2417, %v2416
        %v2420 = vsel %vm1239, %v1901, 0
        %v2423 = vsel %vm1239, %v2418, 0
        %2425 = vmatpush.bf16.xpose.msra.mxu0 0
        %2426 = vmatpush.bf16.xpose.msra.mxu0 0
        %2427 = vmatpush.bf16.xpose.msra.mxu0 0
        %2428 = vmatpush.bf16.xpose.msra.mxu0 0
        %2429 = vmatpush.bf16.xpose.msra.mxu0 0
        %2430 = vmatpush.bf16.xpose.msra.mxu0 0
        %2431 = vmatpush.bf16.xpose.msra.mxu0 0
        %2432 = vmatpush.bf16.xpose.msra.mxu0 %v2423
        %2433 = vmatmul.bf16.gmra.mxu0 %v2420
        %v2434 = vpop.f32.mrf.mxu0
        %v2435 = vadd.f32 %v833, %v2434
        %v2436 = vpop.f32.mrf.mxu0
        %2437 = vdwg.mxu0
        %v2438 = vunpack.c.l.b16 %v2134
        %v2439 = vunpack.c.l.b16 %v2146
        %v2440 = vpack.c.b16 %v2439, %v2438
        %v2442 = vsel %vm1239, %v1904, 0
        %v2445 = vsel %vm1239, %v2440, 0
        %2447 = vmatpush.bf16.xpose.msra.mxu0 0
        %2448 = vmatpush.bf16.xpose.msra.mxu0 0
        %2449 = vmatpush.bf16.xpose.msra.mxu0 0
        %2450 = vmatpush.bf16.xpose.msra.mxu0 0
        %2451 = vmatpush.bf16.xpose.msra.mxu0 0
        %2452 = vmatpush.bf16.xpose.msra.mxu0 0
        %2453 = vmatpush.bf16.xpose.msra.mxu0 0
        %2454 = vmatpush.bf16.xpose.msra.mxu0 %v2445
        %2455 = vmatmul.bf16.gmra.mxu0 %v2442
        %v2456 = vpop.f32.mrf.mxu0
        %v2457 = vadd.f32 %v833, %v2456
        %v2458 = vpop.f32.mrf.mxu0
        %2459 = vdwg.mxu0
        %v2460 = vunpack.c.l.b16 %v2137
        %v2461 = vunpack.c.l.b16 %v2149
        %v2462 = vpack.c.b16 %v2461, %v2460
        %v2464 = vsel %vm1239, %v1907, 0
        %v2467 = vsel %vm1239, %v2462, 0
        %2469 = vmatpush.bf16.xpose.msra.mxu0 0
        %2470 = vmatpush.bf16.xpose.msra.mxu0 0
        %2471 = vmatpush.bf16.xpose.msra.mxu0 0
        %2472 = vmatpush.bf16.xpose.msra.mxu0 0
        %2473 = vmatpush.bf16.xpose.msra.mxu0 0
        %2474 = vmatpush.bf16.xpose.msra.mxu0 0
        %2475 = vmatpush.bf16.xpose.msra.mxu0 0
        %2476 = vmatpush.bf16.xpose.msra.mxu0 %v2467
        %2477 = vmatmul.bf16.gmra.mxu0 %v2464
        %v2478 = vpop.f32.mrf.mxu0
        %v2479 = vadd.f32 %v833, %v2478
        %v2480 = vpop.f32.mrf.mxu0
        %2481 = vdwg.mxu0
        %v2482 = vsel %vm1617, %v2413, -inf
        %2483 = vmax.xlane.f32.xlu0 %v2482
        %v2484 = vpop.xlane.xlu0 %2483
        %v2485 = vsel %vm1617, %v2435, -inf
        %2486 = vmax.xlane.f32.xlu0 %v2485
        %v2487 = vpop.xlane.xlu0 %2486
        %v2488 = vsel %vm1617, %v2457, -inf
        %2489 = vmax.xlane.f32.xlu0 %v2488
        %v2490 = vpop.xlane.xlu0 %2489
        %v2491 = vsel %vm1617, %v2479, -inf
        %2492 = vmax.xlane.f32.xlu0 %v2491
        %v2493 = vpop.xlane.xlu0 %2492
        %v2494 = vsub.f32 %v2413, %v2484
        %v2495 = vsub.f32 %v2435, %v2487
        %v2496 = vsub.f32 %v2457, %v2490
        %v2497 = vsub.f32 %v2479, %v2493
        %v2498 = vmul.f32 %v2494, 1.442695
        %v2499 = vpow.pop %v2498
        %v2500 = vmul.f32 %v2495, 1.442695
        %v2501 = vpow.pop %v2500
        %v2502 = vmul.f32 %v2496, 1.442695
        %v2503 = vpow.pop %v2502
        %v2504 = vmul.f32 %v2497, 1.442695
        %v2505 = vpow.pop %v2504
        %v2506 = vsel %vm1617, %v2499, 0.0
        %2507 = vadd.xlane.f32.xlu0 %v2506
        %v2508 = vpop.xlane.xlu0 %2507
        %v2509 = vsel %vm1617, %v2501, 0.0
        %2510 = vadd.xlane.f32.xlu0 %v2509
        %v2511 = vpop.xlane.xlu0 %2510
        %v2512 = vsel %vm1617, %v2503, 0.0
        %2513 = vadd.xlane.f32.xlu0 %v2512
        %v2514 = vpop.xlane.xlu0 %2513
        %v2515 = vsel %vm1617, %v2505, 0.0
        %2516 = vadd.xlane.f32.xlu0 %v2515
        %v2517 = vpop.xlane.xlu0 %2516
        %v2518 = vrcp.pop %v2508
        %v2519 = vmul.f32 %v2508, %v2518
        %v2520 = vsub.f32 1.0, %v2519
        %v2521 = vmul.f32 %v2518, %v2520
        %v2522 = vadd.f32 %v2518, %v2521
        %vm2523 = vweird.f32 %v2508
        %vm2524 = vweird.f32 %v2518
        %vm2525 = vmor %vm2523, %vm2524
        %v2526 = vsel %vm2525, %v2518, %v2522
        %v2527 = vand.u32 2147483647, %v2508
        %vm2528 = vcmp.eq.f32.partialorder %v2527, 8.507059e+37
        %v2529 = vand.u32 %v2508, 2147483648
        %v2530 = vor.u32 1.1754944e-38, %v2529
        %v2531 = vsel %vm2528, %v2530, %v2526
        %v2532 = vrcp.pop %v2511
        %v2533 = vmul.f32 %v2511, %v2532
        %v2534 = vsub.f32 1.0, %v2533
        %v2535 = vmul.f32 %v2532, %v2534
        %v2536 = vadd.f32 %v2532, %v2535
        %vm2537 = vweird.f32 %v2511
        %vm2538 = vweird.f32 %v2532
        %vm2539 = vmor %vm2537, %vm2538
        %v2540 = vsel %vm2539, %v2532, %v2536
        %v2541 = vand.u32 2147483647, %v2511
        %vm2542 = vcmp.eq.f32.partialorder %v2541, 8.507059e+37
        %v2543 = vand.u32 %v2511, 2147483648
        %v2544 = vor.u32 1.1754944e-38, %v2543
        %v2545 = vsel %vm2542, %v2544, %v2540
        %v2546 = vrcp.pop %v2514
        %v2547 = vmul.f32 %v2514, %v2546
        %v2548 = vsub.f32 1.0, %v2547
        %v2549 = vmul.f32 %v2546, %v2548
        %v2550 = vadd.f32 %v2546, %v2549
        %vm2551 = vweird.f32 %v2514
        %vm2552 = vweird.f32 %v2546
        %vm2553 = vmor %vm2551, %vm2552
        %v2554 = vsel %vm2553, %v2546, %v2550
        %v2555 = vand.u32 2147483647, %v2514
        %vm2556 = vcmp.eq.f32.partialorder %v2555, 8.507059e+37
        %v2557 = vand.u32 %v2514, 2147483648
        %v2558 = vor.u32 1.1754944e-38, %v2557
        %v2559 = vsel %vm2556, %v2558, %v2554
        %v2560 = vrcp.pop %v2517
        %v2561 = vmul.f32 %v2517, %v2560
        %v2562 = vsub.f32 1.0, %v2561
        %v2563 = vmul.f32 %v2560, %v2562
        %v2564 = vadd.f32 %v2560, %v2563
        %vm2565 = vweird.f32 %v2517
        %vm2566 = vweird.f32 %v2560
        %vm2567 = vmor %vm2565, %vm2566
        %v2568 = vsel %vm2567, %v2560, %v2564
        %v2569 = vand.u32 2147483647, %v2517
        %vm2570 = vcmp.eq.f32.partialorder %v2569, 8.507059e+37
        %v2571 = vand.u32 %v2517, 2147483648
        %v2572 = vor.u32 1.1754944e-38, %v2571
        %v2573 = vsel %vm2570, %v2572, %v2568
        %v2574 = vmul.f32 %v2499, %v2531
        %v2575 = vmul.f32 %v2501, %v2545
        %v2576 = vmul.f32 %v2503, %v2559
        %v2577 = vmul.f32 %v2505, %v2573
        %v2578 = vpack.c.bf16 %v2574, %v2574
        %v2579 = vpack.c.bf16 %v2575, %v2575
        %v2580 = vpack.c.bf16 %v2576, %v2576
        %v2581 = vpack.c.bf16 %v2577, %v2577
        %v2582 = vunpack.c.l.b16 %v2372
        %v2583 = vunpack.c.l.b16 %v2384
        %v2584 = vpack.c.b16 %v2583, %v2582
        %v2587 = vsel %vm1617, %v2578, 0
        %2589 = vmatpush.bf16.msra.mxu0 0
        %2590 = vmatpush.bf16.msra.mxu0 0
        %2591 = vmatpush.bf16.msra.mxu0 0
        %2592 = vmatpush.bf16.msra.mxu0 0
        %2593 = vmatpush.bf16.msra.mxu0 0
        %2594 = vmatpush.bf16.msra.mxu0 0
        %2595 = vmatpush.bf16.msra.mxu0 0
        %2596 = vmatpush.bf16.msra.mxu0 %v2584
        %2597 = vmatmul.bf16.gmra.mxu0 %v2587
        %v2598 = vpop.f32.mrf.mxu0
        %v2599 = vadd.f32 0.0, %v2598
        %v2600 = vpop.f32.mrf.mxu0
        %2601 = vdwg.mxu0
        %v2602 = vunpack.c.l.b16 %v2375
        %v2603 = vunpack.c.l.b16 %v2387
        %v2604 = vpack.c.b16 %v2603, %v2602
        %v2607 = vsel %vm1617, %v2579, 0
        %2609 = vmatpush.bf16.msra.mxu0 0
        %2610 = vmatpush.bf16.msra.mxu0 0
        %2611 = vmatpush.bf16.msra.mxu0 0
        %2612 = vmatpush.bf16.msra.mxu0 0
        %2613 = vmatpush.bf16.msra.mxu0 0
        %2614 = vmatpush.bf16.msra.mxu0 0
        %2615 = vmatpush.bf16.msra.mxu0 0
        %2616 = vmatpush.bf16.msra.mxu0 %v2604
        %2617 = vmatmul.bf16.gmra.mxu0 %v2607
        %v2618 = vpop.f32.mrf.mxu0
        %v2619 = vadd.f32 0.0, %v2618
        %v2620 = vpop.f32.mrf.mxu0
        %2621 = vdwg.mxu0
        %v2622 = vunpack.c.l.b16 %v2378
        %v2623 = vunpack.c.l.b16 %v2390
        %v2624 = vpack.c.b16 %v2623, %v2622
        %v2627 = vsel %vm1617, %v2580, 0
        %2629 = vmatpush.bf16.msra.mxu0 0
        %2630 = vmatpush.bf16.msra.mxu0 0
        %2631 = vmatpush.bf16.msra.mxu0 0
        %2632 = vmatpush.bf16.msra.mxu0 0
        %2633 = vmatpush.bf16.msra.mxu0 0
        %2634 = vmatpush.bf16.msra.mxu0 0
        %2635 = vmatpush.bf16.msra.mxu0 0
        %2636 = vmatpush.bf16.msra.mxu0 %v2624
        %2637 = vmatmul.bf16.gmra.mxu0 %v2627
        %v2638 = vpop.f32.mrf.mxu0
        %v2639 = vadd.f32 0.0, %v2638
        %v2640 = vpop.f32.mrf.mxu0
        %2641 = vdwg.mxu0
        %v2642 = vunpack.c.l.b16 %v2381
        %v2643 = vunpack.c.l.b16 %v2393
        %v2644 = vpack.c.b16 %v2643, %v2642
        %v2647 = vsel %vm1617, %v2581, 0
        %2649 = vmatpush.bf16.msra.mxu0 0
        %2650 = vmatpush.bf16.msra.mxu0 0
        %2651 = vmatpush.bf16.msra.mxu0 0
        %2652 = vmatpush.bf16.msra.mxu0 0
        %2653 = vmatpush.bf16.msra.mxu0 0
        %2654 = vmatpush.bf16.msra.mxu0 0
        %2655 = vmatpush.bf16.msra.mxu0 0
        %2656 = vmatpush.bf16.msra.mxu0 %v2644
        %2657 = vmatmul.bf16.gmra.mxu0 %v2647
        %v2658 = vpop.f32.mrf.mxu0
        %v2659 = vadd.f32 0.0, %v2658
        %v2660 = vpop.f32.mrf.mxu0
        %2661 = vdwg.mxu0
        %v2662 = vrot.slane %v2639, 4
        %v2663 = vsel %vm1494, %v2662, %v2599
        %v2664 = vrot.slane %v2599, 4
        %v2665 = vsel %vm1494, %v2639, %v2664
        %v2667 = vunpack.c.l.s4 1983009808
        %v2668 = vunpack.c.0.s8 %v2667
        %v2669 = vperm.slane %v2663, %v2668
        %v2671 = vunpack.c.l.s4 1983009808
        %v2672 = vunpack.c.0.s8 %v2671
        %v2673 = vperm.slane %v2665, %v2672
        %v2674 = vrot.slane %v2659, 4
        %v2675 = vsel %vm1494, %v2674, %v2619
        %v2676 = vrot.slane %v2619, 4
        %v2677 = vsel %vm1494, %v2659, %v2676
        %v2679 = vunpack.c.l.s4 1983009808
        %v2680 = vunpack.c.0.s8 %v2679
        %v2681 = vperm.slane %v2675, %v2680
        %v2683 = vunpack.c.l.s4 1983009808
        %v2684 = vunpack.c.0.s8 %v2683
        %v2685 = vperm.slane %v2677, %v2684
        %v2686 = vrot.slane %v2681, 4
        %v2687 = vsel %vm1494, %v2686, %v2669
        %v2688 = vrot.slane %v2669, 4
        %v2689 = vsel %vm1494, %v2681, %v2688
        %v2691 = vunpack.c.l.s4 1934713408
        %v2692 = vunpack.c.0.s8 %v2691
        %v2693 = vperm.slane %v2687, %v2692
        %v2695 = vunpack.c.l.s4 1934713408
        %v2696 = vunpack.c.0.s8 %v2695
        %v2697 = vperm.slane %v2689, %v2696
        %v2698 = vrot.slane %v2685, 4
        %v2699 = vsel %vm1494, %v2698, %v2673
        %v2700 = vrot.slane %v2673, 4
        %v2701 = vsel %vm1494, %v2685, %v2700
        %v2703 = vunpack.c.l.s4 1934713408
        %v2704 = vunpack.c.0.s8 %v2703
        %v2705 = vperm.slane %v2699, %v2704
        %v2707 = vunpack.c.l.s4 1934713408
        %v2708 = vunpack.c.0.s8 %v2707
        %v2709 = vperm.slane %v2701, %v2708
        %v2710 = vrot.slane %v2693, 4
        %v2711 = vsel %vm1494, 0.0, %v2710
        %v2712 = vrot.slane %v2697, 4
        %v2713 = vsel %vm1494, 0.0, %v2712
        %v2714 = vrot.slane %v2705, 4
        %v2715 = vsel %vm1494, 0.0, %v2714
        %v2716 = vrot.slane %v2709, 4
        %v2717 = vsel %vm1494, 0.0, %v2716
        %v2718 = vsel %vm1494, %v2712, %v2693
        %v2720 = vunpack.c.l.s4 1983009808
        %v2721 = vunpack.c.0.s8 %v2720
        %v2722 = vperm.slane %v2718, %v2721
        %v2723 = vrot.slane %v2713, 4
        %v2724 = vsel %vm1494, %v2723, %v2711
        %v2726 = vunpack.c.l.s4 1983009808
        %v2727 = vunpack.c.0.s8 %v2726
        %v2728 = vperm.slane %v2724, %v2727
        %v2729 = vsel %vm1494, %v2716, %v2705
        %v2731 = vunpack.c.l.s4 1983009808
        %v2732 = vunpack.c.0.s8 %v2731
        %v2733 = vperm.slane %v2729, %v2732
        %v2734 = vrot.slane %v2717, 4
        %v2735 = vsel %vm1494, %v2734, %v2715
        %v2737 = vunpack.c.l.s4 1983009808
        %v2738 = vunpack.c.0.s8 %v2737
        %v2739 = vperm.slane %v2735, %v2738
        %v2740 = vrot.slane %v2728, 4
        %v2741 = vsel %vm1494, %v2740, %v2722
        %v2742 = vrot.slane %v2722, 4
        %v2743 = vsel %vm1494, %v2728, %v2742
        %v2745 = vunpack.c.l.s4 1934713408
        %v2746 = vunpack.c.0.s8 %v2745
        %v2747 = vperm.slane %v2741, %v2746
        %v2749 = vunpack.c.l.s4 1934713408
        %v2750 = vunpack.c.0.s8 %v2749
        %v2751 = vperm.slane %v2743, %v2750
        %v2752 = vrot.slane %v2739, 4
        %v2753 = vsel %vm1494, %v2752, %v2733
        %v2754 = vrot.slane %v2733, 4
        %v2755 = vsel %vm1494, %v2739, %v2754
        %v2757 = vunpack.c.l.s4 1934713408
        %v2758 = vunpack.c.0.s8 %v2757
        %v2759 = vperm.slane %v2753, %v2758
        %v2761 = vunpack.c.l.s4 1934713408
        %v2762 = vunpack.c.0.s8 %v2761
        %v2763 = vperm.slane %v2755, %v2762
        %v2764 = vrot.slane %v2759, 4
        %v2765 = vsel %vm1494, %v2764, %v2747
        %v2766 = vrot.slane %v2747, 4
        %v2767 = vsel %vm1494, %v2759, %v2766
        %v2768 = vrot.slane %v2763, 4
        %v2769 = vsel %vm1494, %v2768, %v2751
        %v2770 = vrot.slane %v2751, 4
        %v2771 = vsel %vm1494, %v2763, %v2770
        %2773 = vrot.lane.b32.xlu0 %v2767, 8
        %v2774 = vpop.permute.xlu0 %2773
        %2777 = vrot.lane.b32.xlu0 %v2769, 16
        %v2778 = vpop.permute.xlu0 %2777
        %2781 = vrot.lane.b32.xlu0 %v2771, 24
        %v2782 = vpop.permute.xlu0 %2781
        %v2784 = vsel %vm1239, %v2765, %v2774
        %v2785 = vsel %vm1617, %v2784, %v2778
        %v2786 = vsel %vm1619, %v2785, %v2782
        %v2787 = vpack.c.bf16 %v2786, %v2786
        %2788 = vst.msk [vmem:[%s810] sm:$0xff] %vm1617, %v2574
        %2789 = vst.msk [vmem:[%s810 + $0x8] sm:$0xff] %vm1617, %v2575
        %2790 = vst.msk [vmem:[%s810 + $0x10] sm:$0xff] %vm1617, %v2576
        %2791 = vst.msk [vmem:[%s810 + $0x18] sm:$0xff] %vm1617, %v2577
        %v2792 = vld [vmem:[#allocation11] sm:$0xf]
        %v2793 = vld [vmem:[#allocation11 + $0x4] sm:$0xf]
        %v2794 = vld [vmem:[#allocation11 + $0x8] sm:$0xf]
        %v2795 = vld [vmem:[#allocation11 + $0xc] sm:$0xf]
        %v2796 = vld [vmem:[%s13] sm:$0x1]
        %v2798 = vperm.slane %v2796, 0
        %v2804 = vunpack.c.l.b16 %v2792
        %v2805 = vunpack.c.l.b16 %v2793
        %v2806 = vunpack.c.l.b16 %v2794
        %v2807 = vunpack.c.l.b16 %v2795
        %v2808 = vpack.c.b16 %v2805, %v2804
        %v2809 = vpack.c.b16 %v2807, %v2806
        %v2813 = vsel %vm855, %v2787, 0
        %2815 = vmatpush.bf16.msra.mxu0 0
        %2816 = vmatpush.bf16.msra.mxu0 0
        %2817 = vmatpush.bf16.msra.mxu0 0
        %2818 = vmatpush.bf16.msra.mxu0 0
        %2819 = vmatpush.bf16.msra.mxu0 0
        %2820 = vmatpush.bf16.msra.mxu0 0
        %2821 = vmatpush.bf16.msra.mxu0 %v2809
        %2822 = vmatpush.bf16.msra.mxu0 %v2808
        %2823 = vmatmul.bf16.gmra.mxu0 %v2813
        %v2824 = vpop.f32.mrf.mxu0
        %v2825 = vadd.f32 %v2798, %v2824
        %v2826 = vpop.f32.mrf.mxu0
        %2827 = vdwg.mxu0
        %v2828 = vadd.f32 %v2825, %v1691
        %v2829 = vsel %vm855, %v2828, 0.0
        %2830 = vadd.xlane.f32.xlu0 %v2829
        %v2831 = vpop.xlane.xlu0 %2830
        %v2832 = vmul.f32 %v2831, %v1672
        %v2833 = vsub.f32 %v2828, %v2832
        %v2834 = vmul.f32 %v2833, %v2833
        %v2835 = vsel %vm855, %v2834, 0.0
        %2836 = vadd.xlane.f32.xlu0 %v2835
        %v2837 = vpop.xlane.xlu0 %2836
        %v2838 = vmul.f32 %v2837, %v1672
        %v2839 = vadd.f32 %v2838, 1e-05
        %v2840 = vrsqrt.pop %v2839
        %v2841 = vmul.f32 %v2840, %v2839
        %v2842 = vmul.f32 %v2841, %v2840
        %v2843 = vmul.f32 0.5, %v2842
        %v2844 = vsub.f32 1.5, %v2843
        %v2845 = vmul.f32 %v2840, %v2844
        %vm2846 = vweird.f32 %v2839
        %vm2847 = vweird.f32 %v2840
        %vm2848 = vmor %vm2846, %vm2847
        %v2849 = vsel %vm2848, %v2840, %v2845
        %v2850 = vmul.f32 %v2833, %v2849
        %v2851 = vpack.c.bf16 %v2850, %v2850
        %v2852 = vld [vmem:[#allocation13] sm:$0xf]
        %v2853 = vld [vmem:[#allocation13 + $0x4] sm:$0xf]
        %v2854 = vld [vmem:[#allocation13 + $0x8] sm:$0xf]
        %v2855 = vld [vmem:[#allocation13 + $0xc] sm:$0xf]
        %v2856 = vld [vmem:[%s15] sm:$0x1]
        %v2858 = vperm.slane %v2856, 0
        %v2864 = vunpack.c.l.b16 %v2852
        %v2865 = vunpack.c.l.b16 %v2853
        %v2866 = vunpack.c.l.b16 %v2854
        %v2867 = vunpack.c.l.b16 %v2855
        %v2868 = vpack.c.b16 %v2865, %v2864
        %v2869 = vpack.c.b16 %v2867, %v2866
        %v2873 = vsel %vm855, %v2851, 0
        %2875 = vmatpush.bf16.msra.mxu0 0
        %2876 = vmatpush.bf16.msra.mxu0 0
        %2877 = vmatpush.bf16.msra.mxu0 0
        %2878 = vmatpush.bf16.msra.mxu0 0
        %2879 = vmatpush.bf16.msra.mxu0 0
        %2880 = vmatpush.bf16.msra.mxu0 0
        %2881 = vmatpush.bf16.msra.mxu0 %v2869
        %2882 = vmatpush.bf16.msra.mxu0 %v2868
        %2883 = vmatmul.bf16.gmra.mxu0 %v2873
        %v2884 = vpop.f32.mrf.mxu0
        %v2885 = vadd.f32 %v2858, %v2884
        %v2886 = vpop.f32.mrf.mxu0
        %2887 = vdwg.mxu0
        %v2888 = vmax.f32 %v2885, 0.0
        %v2889 = vpack.c.bf16 %v2888, %v2888
        %v2890 = vld [vmem:[#allocation14] sm:$0xf]
        %v2891 = vld [vmem:[#allocation14 + $0x4] sm:$0xf]
        %v2892 = vld [vmem:[#allocation14 + $0x8] sm:$0xf]
        %v2893 = vld [vmem:[#allocation14 + $0xc] sm:$0xf]
        %v2894 = vld [vmem:[#allocation14 + $0x10] sm:$0xf]
        %v2895 = vld [vmem:[#allocation14 + $0x14] sm:$0xf]
        %v2896 = vld [vmem:[#allocation14 + $0x18] sm:$0xf]
        %v2897 = vld [vmem:[#allocation14 + $0x1c] sm:$0xf]
        %v2898 = vld [vmem:[%s17] sm:$0x1]
        %v2900 = vperm.slane %v2898, 0
        %v2910 = vunpack.c.l.b16 %v2890
        %v2911 = vunpack.c.l.b16 %v2891
        %v2912 = vunpack.c.l.b16 %v2892
        %v2913 = vunpack.c.l.b16 %v2893
        %v2914 = vunpack.c.l.b16 %v2894
        %v2915 = vunpack.c.l.b16 %v2895
        %v2916 = vunpack.c.l.b16 %v2896
        %v2917 = vunpack.c.l.b16 %v2897
        %v2918 = vpack.c.b16 %v2911, %v2910
        %v2919 = vpack.c.b16 %v2913, %v2912
        %v2920 = vpack.c.b16 %v2915, %v2914
        %v2921 = vpack.c.b16 %v2917, %v2916
        %v2927 = vsel %vm1767, %v2889, 0
        %2929 = vmatpush.bf16.msra.mxu0 0
        %2930 = vmatpush.bf16.msra.mxu0 0
        %2931 = vmatpush.bf16.msra.mxu0 0
        %2932 = vmatpush.bf16.msra.mxu0 0
        %2933 = vmatpush.bf16.msra.mxu0 %v2921
        %2934 = vmatpush.bf16.msra.mxu0 %v2920
        %2935 = vmatpush.bf16.msra.mxu0 %v2919
        %2936 = vmatpush.bf16.msra.mxu0 %v2918
        %2937 = vmatmul.bf16.gmra.mxu0 %v2927
        %v2938 = vpop.f32.mrf.mxu0
        %v2939 = vadd.f32 %v2900, %v2938
        %v2940 = vpop.f32.mrf.mxu0
        %2941 = vdwg.mxu0
        %v2942 = vadd.f32 %v2939, %v2850
        %v2943 = vsel %vm855, %v2942, 0.0
        %2944 = vadd.xlane.f32.xlu0 %v2943
        %v2945 = vpop.xlane.xlu0 %2944
        %v2946 = vmul.f32 %v2945, %v1672
        %v2947 = vsub.f32 %v2942, %v2946
        %v2948 = vmul.f32 %v2947, %v2947
        %v2949 = vsel %vm855, %v2948, 0.0
        %2950 = vadd.xlane.f32.xlu0 %v2949
        %v2951 = vpop.xlane.xlu0 %2950
        %v2952 = vmul.f32 %v2951, %v1672
        %v2953 = vadd.f32 %v2952, 1e-05
        %v2954 = vrsqrt.pop %v2953
        %v2955 = vmul.f32 %v2954, %v2953
        %v2956 = vmul.f32 %v2955, %v2954
        %v2957 = vmul.f32 0.5, %v2956
        %v2958 = vsub.f32 1.5, %v2957
        %v2959 = vmul.f32 %v2954, %v2958
        %vm2960 = vweird.f32 %v2953
        %vm2961 = vweird.f32 %v2954
        %vm2962 = vmor %vm2960, %vm2961
        %v2963 = vsel %vm2962, %v2954, %v2959
        %v2964 = vmul.f32 %v2947, %v2963
        %2965 = vst.msk [vmem:[%s796] sm:$0xff] %vm855, %v2964
        %s2966 = sand.u32 %s449, 1
        %s2967 = scalar_lea.sflag [#allocation4], %s2966
        %s2968 = sand.u32 %s449, 1
        %s2969 = smul.addr %s2968, 8
        %s2970 = scalar_lea.vmem [#allocation16], %s2969
        %s2971 = sand.u32 %s43, 1
        %s2972 = scalar_lea.sflag [#allocation18], %s2971
        %s2973 = sand.u32 %s475, 1
        %s2974 = smul.addr %s2973, 32
        %s2975 = scalar_lea.vmem [#allocation17], %s2974
        %s2976 = sand.u32 %s43, 1
        %s2977 = scalar_lea.sflag [#allocation18], %s2976
        %s2978 = sand.u32 %s501, 1
        %s2979 = smul.addr %s2978, 32
        %s2980 = scalar_lea.vmem [#allocation19], %s2979
        // Predicated region
        $region125: #{_lambda_.1} parent=91 // pred_check
          %p2981 = pneg %p459
        $region126: #{_lambda_.1} parent=91 // pred_check_branch
          %2983 = sbr.rel (%p2981) target = $region128
        $region127: #{_lambda_.1} parent=91 // pred_region
          %2985 = vsyncadd %s2967, 0
          %s2986 = smul.addr %s43, 8
          %s2987 = scalar_lea.hbm %s18, %s2986
          %s2989 = sshll.u32 %s2970, 4
          %s2990 = int_to_ptr.vmem [resolvable:$true] %s2989
          %s2991 = sshll.u32 %s2987, 4
          %s2992 = int_to_ptr.hbm [resolvable:$true] %s2991
          %2994 = dma.vmem_to_hbm [thread:$0]  %s2990, 128, %s2992, %s2967
        $region128: #{_lambda_.1} parent=91 // pred_fallthru
          _
        // Predicated region
        $region129: #{_lambda_.1} parent=91 // pred_check
          %p2995 = pneg %p485
        $region130: #{_lambda_.1} parent=91 // pred_check_branch
          %2997 = sbr.rel (%p2995) target = $region132
        $region131: #{_lambda_.1} parent=91 // pred_region
          %2999 = vsyncadd %s2972, 0
          %s3000 = smul.addr %s43, 4
          %s3001 = smul.addr %s3000, 8
          %s3002 = scalar_lea.hbm %s19, %s3001
          %s3003 = sshll.u32 %s2975, 4
          %s3004 = int_to_ptr.vmem [resolvable:$true] %s3003
          %s3005 = sshll.u32 %s3002, 4
          %s3006 = int_to_ptr.hbm [resolvable:$true] %s3005
          %3011 = dma.vmem_to_hbm [thread:$0]  %s3004, 512, %s3006, %s2972, 128, 128, 8
        $region132: #{_lambda_.1} parent=91 // pred_fallthru
          _
        // Predicated region
        $region133: #{_lambda_.1} parent=91 // pred_check
          %p3012 = pneg %p511
        $region134: #{_lambda_.1} parent=91 // pred_check_branch
          %3014 = sbr.rel (%p3012) target = $region136
        $region135: #{_lambda_.1} parent=91 // pred_region
          %3016 = vsyncadd %s2977, 0
          %s3017 = smul.addr %s43, 4
          %s3018 = smul.addr %s3017, 8
          %s3019 = scalar_lea.hbm %s20, %s3018
          %s3020 = sshll.u32 %s2980, 4
          %s3021 = int_to_ptr.vmem [resolvable:$true] %s3020
          %s3022 = sshll.u32 %s3019, 4
          %s3023 = int_to_ptr.hbm [resolvable:$true] %s3022
          %3028 = dma.vmem_to_hbm [thread:$0]  %s3021, 512, %s3023, %s2977, 128, 128, 8
        $region136: #{_lambda_.1} parent=91 // pred_fallthru
          _
      $region92: #{_lambda_.1} parent=5 // pred_fallthru
        _
      %p3029 = scmp.le.s32.totalorder 2, %s38
      // Predicated region
      $region137: #{_lambda_.1} parent=5 // pred_check
        %p3030 = pneg %p3029
      $region138: #{_lambda_.1} parent=5 // pred_check_branch
        %3032 = sbr.rel (%p3030) target = $region140
      $region139: #{_lambda_.1} parent=5 // pred_region
        %s3033 = ssub.s32 %s38, 2
        // Predicated region
        $region141: #{_lambda_.1} parent=139 // pred_check
          %p3034 = pneg %p465
        $region142: #{_lambda_.1} parent=139 // pred_check_branch
          %3036 = sbr.rel (%p3034) target = $region144
        $region143: #{_lambda_.1} parent=139 // pred_region
          %s3037 = sand.u32 %s450, 1
          %s3038 = scalar_lea.sflag [#allocation4], %s3037
          %s3039 = sand.u32 %s450, 1
          %s3040 = smul.addr %s3039, 8
          %s3041 = scalar_lea.vmem [#allocation16], %s3040
          %3043 = dma.done %s3038, 128
        $region144: #{_lambda_.1} parent=139 // pred_fallthru
          _
        // Predicated region
        $region145: #{_lambda_.1} parent=139 // pred_check
          %p3044 = pneg %p491
        $region146: #{_lambda_.1} parent=139 // pred_check_branch
          %3046 = sbr.rel (%p3044) target = $region148
        $region147: #{_lambda_.1} parent=139 // pred_region
          %s3047 = sand.u32 %s44, 1
          %s3048 = scalar_lea.sflag [#allocation18], %s3047
          %s3049 = sand.u32 %s476, 1
          %s3050 = smul.addr %s3049, 32
          %s3051 = scalar_lea.vmem [#allocation17], %s3050
          %3053 = dma.done %s3048, 512
        $region148: #{_lambda_.1} parent=139 // pred_fallthru
          _
        // Predicated region
        $region149: #{_lambda_.1} parent=139 // pred_check
          %p3054 = pneg %p517
        $region150: #{_lambda_.1} parent=139 // pred_check_branch
          %3056 = sbr.rel (%p3054) target = $region152
        $region151: #{_lambda_.1} parent=139 // pred_region
          %s3057 = sand.u32 %s44, 1
          %s3058 = scalar_lea.sflag [#allocation18], %s3057
          %s3059 = sand.u32 %s502, 1
          %s3060 = smul.addr %s3059, 32
          %s3061 = scalar_lea.vmem [#allocation19], %s3060
          %3063 = dma.done %s3058, 512
        $region152: #{_lambda_.1} parent=139 // pred_fallthru
          _
      $region140: #{_lambda_.1} parent=5 // pred_fallthru
        _
    $region6: #{_lambda_.1} parent=1 // loop_footer
      %s42 = sadd.s32 1, %s38
    $region7: #{_lambda_.1} parent=1 // loop_footer_branch
      %37 = sbr.rel target = $region3
    $region8: #{_lambda_.1} parent=1 // loop_exit
      _
    %3064 = vsyncpa [#allocation3], 1
    %s3065 = scalar_lea.sflag [#allocation3], 1
    %3066 = vsyncpa %s3065, 1
    %3067 = vsyncpa [#allocation6], 1
    %3068 = vsyncpa [#allocation9], 1
    %3069 = vsyncpa [#allocation12], 1
    %3070 = vsyncpa [#allocation15], 1
    %3071 = vsyncpa [#allocation4], 1
    %s3072 = scalar_lea.sflag [#allocation4], 1
    %3073 = vsyncpa %s3072, 1
    %3074 = vsyncpa [#allocation18], 1
    %s3075 = scalar_lea.sflag [#allocation18], 1
    %3076 = vsyncpa %s3075, 1

</llo_original>
